<compile_context>
chip_gen: v7x
topology: tpu7x:2x2x1
jax: 0.10.0
libtpu: 0.0.40
codegen_flags: <defaults>
</compile_context>

<pallas_src>
import functools

import jax
import jax.numpy as jnp
from jax.experimental import pallas as pl
from jax.experimental.pallas import tpu as pltpu  # noqa: F401  (TPU backend)

# ---- module hyper-parameters (mirroring the PyTorch spec) ----
LANES = 128                    # TPU lane width; all matmul N dims padded to this
CONV1_OUT, CONV1_K, CONV1_DIL = 16, 7, 2
CONV2_OUT, CONV2_K = 32, 5
FC1_OUT, FC2_OUT, NUM_CLASSES = 128, 50, 26


def _round_up(v, m):
    return (v + m - 1) // m * m


# ============================= Pallas kernels ================================


def _conv_pool_kernel(p00_ref, p01_ref, p10_ref, p11_ref, w_ref, o_ref):
    """Fused conv-as-matmul (bias folded into w) + 2x2 maxpool + ReLU.

    The four patch matrices hold the im2col rows of the four pooling parities
    (conv-output pixels (2i+a, 2j+b)); the pool is the elementwise max of the
    four matmul results, so conv + pool + relu is one MXU pass + VPU epilogue.
    """
    w = w_ref[...]

    def mm(p_ref):
        return jnp.dot(p_ref[...], w, preferred_element_type=jnp.float32)

    z = jnp.maximum(jnp.maximum(mm(p00_ref), mm(p01_ref)),
                    jnp.maximum(mm(p10_ref), mm(p11_ref)))
    o_ref[...] = jnp.maximum(z, 0.0)


def _tail_kernel(p00_ref, p01_ref, p10_ref, p11_ref,
                 w2_ref, wfc1_ref, wfc2_ref, wfc3_ref,
                 b1_ref, b2_ref, b3_ref, o_ref,
                 *, n_spatial, batch_pad, c_pad, num_classes):
    """conv2(+pool+relu) + flatten + fc1 + relu + fc2 + relu + fc3 + log_softmax,
    all intermediate activations kept in VMEM (single fused kernel)."""
    w2 = w2_ref[...]

    def mm(p_ref):
        return jnp.dot(p_ref[...], w2, preferred_element_type=jnp.float32)

    z = jnp.maximum(jnp.maximum(mm(p00_ref), mm(p01_ref)),
                    jnp.maximum(mm(p10_ref), mm(p11_ref)))
    a2 = jnp.maximum(z, 0.0)          # relu(maxpool(conv2)), (n_spatial*BP, 128)
    # TODO(synk): nn.Dropout2d after conv2 is stochastic; identity (eval mode).

    # fc1: the NHWC flatten is (spatial, channel); implemented as a sum of
    # per-spatial-position (BP,128)x(128,128) matmuls -> no in-kernel reshapes,
    # only 8-aligned static slices.
    acc = jnp.zeros((batch_pad, wfc1_ref.shape[1]), jnp.float32)
    for s in range(n_spatial):
        blk = a2[batch_pad * s:batch_pad * (s + 1), :].astype(jnp.bfloat16)
        acc = acc + jnp.dot(blk, wfc1_ref[c_pad * s:c_pad * (s + 1), :],
                            preferred_element_type=jnp.float32)
    h1 = jnp.maximum(acc + b1_ref[...], 0.0)
    # TODO(synk): F.dropout after fc1 is stochastic; identity (eval mode).

    h2 = jnp.dot(h1.astype(jnp.bfloat16), wfc2_ref[...],
                 preferred_element_type=jnp.float32) + b2_ref[...]
    h2 = jnp.maximum(h2, 0.0)
    # TODO(synk): F.dropout after fc2 is stochastic; identity (eval mode).

    logits = jnp.dot(h2.astype(jnp.bfloat16), wfc3_ref[...],
                     preferred_element_type=jnp.float32) + b3_ref[...]

    # log_softmax over the first `num_classes` lanes (the rest are padding).
    lane = jax.lax.broadcasted_iota(jnp.int32, logits.shape, 1)
    zm = jnp.where(lane < num_classes, logits, jnp.float32(-1e30))
    m = jnp.max(zm, axis=-1, keepdims=True)
    lse = m + jnp.log(jnp.sum(jnp.exp(zm - m), axis=-1, keepdims=True))
    o_ref[...] = zm - lse


# ============================ pallas_call wrappers ===========================
# Grid-less single VMEM blocks: every operand is at most a few hundred KB at
# this shape.  (At the full 3x256x256 input these would become M-tiled grids.)


def conv_pool_stage(patches, w_mat):
    m, k = patches[0].shape
    n = w_mat.shape[1]
    blk = lambda s: pl.BlockSpec(s, lambda: (0, 0))
    return pl.pallas_call(
        _conv_pool_kernel,
        out_shape=jax.ShapeDtypeStruct((m, n), jnp.float32),
        in_specs=[blk((m, k))] * 4 + [blk((k, n))],
        out_specs=blk((m, n)),
    )(*patches, w_mat)


def tail_stage(patches, pk, *, n_spatial, batch_pad, num_classes):
    kern = functools.partial(_tail_kernel, n_spatial=n_spatial,
                             batch_pad=batch_pad, c_pad=LANES,
                             num_classes=num_classes)
    args = (*patches, pk["w2"], pk["wfc1"], pk["wfc2"], pk["wfc3"],
            pk["fc1_b"], pk["fc2_b"], pk["fc3_b"])
    blk = lambda a: pl.BlockSpec(a.shape, lambda: (0, 0))
    return pl.pallas_call(
        kern,
        out_shape=jax.ShapeDtypeStruct((batch_pad, LANES), jnp.float32),
        in_specs=[blk(a) for a in args],
        out_specs=pl.BlockSpec((batch_pad, LANES), lambda: (0, 0)),
    )(*args)


# ======================= patch glue (cheap, channels stay minor) =============


def _parity_pool_patches(x_nhwc, kh, kw, dil, hp, wp, k_pad, *,
                         spatial_major=False, batch_pad=None):
    """Build the 4 pooling-parity im2col matrices (tap-major, channel-minor
    columns), append a ones-column (conv bias folding) and zero-pad K to k_pad.
    Channels stay on the minor (lane) axis -> no lane-dim shuffles in XLA."""
    n, _, _, c = x_nhwc.shape
    k_real = kh * kw * c
    mats = []
    for a in range(2):
        for b in range(2):
            taps = []
            for i in range(kh):
                for j in range(kw):
                    h0, w0 = a + i * dil, b + j * dil
                    taps.append(x_nhwc[:, h0:h0 + 2 * hp:2, w0:w0 + 2 * wp:2, :])
            p = jnp.stack(taps, axis=3).reshape(n, hp, wp, k_real)
            if spatial_major:
                # rows ordered (spatial, batch); batch padded to `batch_pad`
                # so the fused fc stage can use 8-aligned slices.
                p = jnp.transpose(p, (1, 2, 0, 3)).reshape(hp * wp, n, k_real)
                p = jnp.pad(p, ((0, 0), (0, batch_pad - n), (0, 0)))
                p = p.reshape(hp * wp * batch_pad, k_real)
            else:
                p = p.reshape(n * hp * wp, k_real)
            ones = jnp.ones((p.shape[0], 1), p.dtype)
            p = jnp.concatenate([p, ones], axis=1)
            p = jnp.pad(p, ((0, 0), (0, k_pad - p.shape[1])))
            mats.append(p.astype(jnp.bfloat16))
    return mats


# ============================ params & packing ===============================


def init_params(key, fc1_in, fc1_out=FC1_OUT, fc2_out=FC2_OUT,
                num_classes=NUM_CLASSES):
    ks = jax.random.split(key, 10)
    s = 0.05
    return {
        "conv1_w": s * jax.random.normal(ks[0], (CONV1_OUT, 3, CONV1_K, CONV1_K), jnp.float32),
        "conv1_b": s * jax.random.normal(ks[1], (CONV1_OUT,), jnp.float32),
        "conv2_w": s * jax.random.normal(ks[2], (CONV2_OUT, CONV1_OUT, CONV2_K, CONV2_K), jnp.float32),
        "conv2_b": s * jax.random.normal(ks[3], (CONV2_OUT,), jnp.float32),
        # fc1 input features are ordered (spatial position, channel) = NHWC flatten
        "fc1_w": s * jax.random.normal(ks[4], (fc1_in, fc1_out), jnp.float32),
        "fc1_b": s * jax.random.normal(ks[5], (fc1_out,), jnp.float32),
        "fc2_w": s * jax.random.normal(ks[6], (fc1_out, fc2_out), jnp.float32),
        "fc2_b": s * jax.random.normal(ks[7], (fc2_out,), jnp.float32),
        "fc3_w": s * jax.random.normal(ks[8], (fc2_out, num_classes), jnp.float32),
        "fc3_b": s * jax.random.normal(ks[9], (num_classes,), jnp.float32),
    }


def pack_params(p):
    """One-time host-side repack into MXU/lane-friendly layouts: bf16 weights,
    lane dims padded to 128, conv bias folded in as an extra weight row
    (matching the ones-column appended to the patch matrices)."""
    def conv_mat(w, b):
        cout, cin, kh, kw = w.shape
        m = jnp.transpose(w, (2, 3, 1, 0)).reshape(kh * kw * cin, cout)  # rows: (i,j,ci)
        m = jnp.concatenate([m, b[None, :]], axis=0)                     # bias row
        k_pad = _round_up(m.shape[0], LANES)
        m = jnp.pad(m, ((0, k_pad - m.shape[0]), (0, LANES - cout)))
        return m.astype(jnp.bfloat16)

    assert p["fc1_w"].shape[1] == LANES   # fc1 output is exactly lane-dense
    n_spatial = p["fc1_w"].shape[0] // CONV2_OUT
    wfc1 = p["fc1_w"].reshape(n_spatial, CONV2_OUT, LANES)
    wfc1 = jnp.pad(wfc1, ((0, 0), (0, LANES - CONV2_OUT), (0, 0)))
    wfc1 = wfc1.reshape(n_spatial * LANES, LANES).astype(jnp.bfloat16)

    wfc2 = jnp.pad(p["fc2_w"], ((0, 0), (0, LANES - FC2_OUT))).astype(jnp.bfloat16)
    wfc3 = jnp.pad(p["fc3_w"], ((0, LANES - FC2_OUT),
                                (0, LANES - NUM_CLASSES))).astype(jnp.bfloat16)

    def pad_bias(b):
        return jnp.pad(b, (0, LANES - b.shape[0])).reshape(1, LANES).astype(jnp.float32)

    return {
        "w1": conv_mat(p["conv1_w"], p["conv1_b"]),        # (256, 128) bf16
        "w2": conv_mat(p["conv2_w"], p["conv2_b"]),        # (512, 128) bf16
        "wfc1": wfc1,                                      # (9*128, 128) bf16
        "wfc2": wfc2, "wfc3": wfc3,                        # (128, 128) bf16
        "fc1_b": pad_bias(p["fc1_b"]),
        "fc2_b": pad_bias(p["fc2_b"]),
        "fc3_b": pad_bias(p["fc3_b"]),
    }


# ================================ forward ====================================


def reid_net_forward(x, pk):
    """x: (N, 3, H, W) float32 (PyTorch NCHW).  Returns (N, NUM_CLASSES) log-probs."""
    n, _, h, w = x.shape
    ho1, wo1 = h - CONV1_DIL * (CONV1_K - 1), w - CONV1_DIL * (CONV1_K - 1)
    hp1, wp1 = ho1 // 2, wo1 // 2
    ho2, wo2 = hp1 - (CONV2_K - 1), wp1 - (CONV2_K - 1)
    hp2, wp2 = ho2 // 2, wo2 // 2
    bp = _round_up(n, 8)                       # batch rows padded for the fc stage

    x = jnp.transpose(x, (0, 2, 3, 1))         # NCHW -> NHWC once (channels -> lanes)

    # ---- stage 1 (kernel A): conv1(k7,dil2) + 2x2 maxpool + relu, fused ------
    p1 = _parity_pool_patches(x, CONV1_K, CONV1_K, CONV1_DIL, hp1, wp1,
                              pk["w1"].shape[0])
    a1 = conv_pool_stage(p1, pk["w1"])                        # (N*hp1*wp1, 128)
    a1 = a1[:, :CONV1_OUT].reshape(n, hp1, wp1, CONV1_OUT)    # pooled act, NHWC

    # ---- stage 2 (kernel B): conv2+pool+relu + fc1/fc2/fc3 + log_softmax -----
    p2 = _parity_pool_patches(a1, CONV2_K, CONV2_K, 1, hp2, wp2,
                              pk["w2"].shape[0],
                              spatial_major=True, batch_pad=bp)
    out = tail_stage(p2, pk, n_spatial=hp2 * wp2, batch_pad=bp,
                     num_classes=NUM_CLASSES)                 # (bp, 128)
    return out[:n, :NUM_CLASSES]


if __name__ == "__main__":
    key = jax.random.PRNGKey(0)
    kx, kp = jax.random.split(key)

    # small stand-in for the module's implied 3x256x256 input
    x = jax.random.normal(kx, (2, 3, 32, 32), jnp.float32)

    # flatten at 32x32: conv1(d2,k7)->20, pool->10, conv2(k5)->6, pool->3  => 32*3*3
    fc1_in = CONV2_OUT * 3 * 3
    params = init_params(kp, fc1_in)
    packed = pack_params(params)      # one-time repack (bf16 / padded / folded bias)

    fwd = jax.jit(reid_net_forward)
    out = jax.block_until_ready(fwd(x, packed))

    assert out.shape == (2, NUM_CLASSES), out.shape
    assert bool(jnp.all(jnp.isfinite(out)))
    # rows of log_softmax must exp-sum to 1
    assert bool(jnp.allclose(jnp.sum(jnp.exp(out), axis=1), 1.0, atol=1e-4))
    print("KERNEL_OK")
</pallas_src>

<mosaic_0001>
module attributes {stable_mosaic.version = 11 : i64} {
  func.func @_conv_pool_kernel(%arg0: memref<200x256xbf16, #tpu.memory_space<vmem>>, %arg1: memref<200x256xbf16, #tpu.memory_space<vmem>>, %arg2: memref<200x256xbf16, #tpu.memory_space<vmem>>, %arg3: memref<200x256xbf16, #tpu.memory_space<vmem>>, %arg4: memref<256x128xbf16, #tpu.memory_space<vmem>>, %arg5: memref<200x128xf32, #tpu.memory_space<vmem>>) attributes {dimension_semantics = [], scalar_prefetch = 0 : i64, scratch_operands = 0 : i64, tpu.core_type = #tpu.core_type<tc>} {
    %c0 = arith.constant 0 : index
    %c0_0 = arith.constant 0 : index
    %0 = vector.load %arg4[%c0, %c0_0] : memref<256x128xbf16, #tpu.memory_space<vmem>>, vector<256x128xbf16>
    %c0_1 = arith.constant 0 : index
    %c0_2 = arith.constant 0 : index
    %1 = vector.load %arg0[%c0_1, %c0_2] : memref<200x256xbf16, #tpu.memory_space<vmem>>, vector<200x256xbf16>
    %cst = arith.constant dense<0.000000e+00> : vector<200x128xf32>
    %2 = tpu.matmul %1, %0, %cst {dimension_numbers = #tpu.dot_dimension_numbers<[1], [0], [0], [1], [0, 0, 1, 1], [], []>} : vector<200x256xbf16>, vector<256x128xbf16>, vector<200x128xf32> -> vector<200x128xf32>
    %c0_3 = arith.constant 0 : index
    %c0_4 = arith.constant 0 : index
    %3 = vector.load %arg1[%c0_3, %c0_4] : memref<200x256xbf16, #tpu.memory_space<vmem>>, vector<200x256xbf16>
    %cst_5 = arith.constant dense<0.000000e+00> : vector<200x128xf32>
    %4 = tpu.matmul %3, %0, %cst_5 {dimension_numbers = #tpu.dot_dimension_numbers<[1], [0], [0], [1], [0, 0, 1, 1], [], []>} : vector<200x256xbf16>, vector<256x128xbf16>, vector<200x128xf32> -> vector<200x128xf32>
    %5 = arith.maximumf %2, %4 : vector<200x128xf32>
    %c0_6 = arith.constant 0 : index
    %c0_7 = arith.constant 0 : index
    %6 = vector.load %arg2[%c0_6, %c0_7] : memref<200x256xbf16, #tpu.memory_space<vmem>>, vector<200x256xbf16>
    %cst_8 = arith.constant dense<0.000000e+00> : vector<200x128xf32>
    %7 = tpu.matmul %6, %0, %cst_8 {dimension_numbers = #tpu.dot_dimension_numbers<[1], [0], [0], [1], [0, 0, 1, 1], [], []>} : vector<200x256xbf16>, vector<256x128xbf16>, vector<200x128xf32> -> vector<200x128xf32>
    %c0_9 = arith.constant 0 : index
    %c0_10 = arith.constant 0 : index
    %8 = vector.load %arg3[%c0_9, %c0_10] : memref<200x256xbf16, #tpu.memory_space<vmem>>, vector<200x256xbf16>
    %cst_11 = arith.constant dense<0.000000e+00> : vector<200x128xf32>
    %9 = tpu.matmul %8, %0, %cst_11 {dimension_numbers = #tpu.dot_dimension_numbers<[1], [0], [0], [1], [0, 0, 1, 1], [], []>} : vector<200x256xbf16>, vector<256x128xbf16>, vector<200x128xf32> -> vector<200x128xf32>
    %10 = arith.maximumf %7, %9 : vector<200x128xf32>
    %11 = arith.maximumf %5, %10 : vector<200x128xf32>
    %cst_12 = arith.constant 0.000000e+00 : f32
    %12 = vector.broadcast %cst_12 : f32 to vector<200x128xf32>
    %13 = arith.maximumf %11, %12 : vector<200x128xf32>
    %c0_13 = arith.constant 0 : index
    %c0_14 = arith.constant 0 : index
    %14 = vector.load %arg5[%c0_13, %c0_14] : memref<200x128xf32, #tpu.memory_space<vmem>>, vector<200x128xf32>
    tpu.vector_store %arg5[%c0_13, %c0_14], %13 {strides = array<i32>} : memref<200x128xf32, #tpu.memory_space<vmem>>, vector<200x128xf32>,
    return
  }
}

module attributes {stable_mosaic.version = 11 : i64} {
  func.func @_tail_kernel(%arg0: memref<72x512xbf16, #tpu.memory_space<vmem>>, %arg1: memref<72x512xbf16, #tpu.memory_space<vmem>>, %arg2: memref<72x512xbf16, #tpu.memory_space<vmem>>, %arg3: memref<72x512xbf16, #tpu.memory_space<vmem>>, %arg4: memref<512x128xbf16, #tpu.memory_space<vmem>>, %arg5: memref<1152x128xbf16, #tpu.memory_space<vmem>>, %arg6: memref<128x128xbf16, #tpu.memory_space<vmem>>, %arg7: memref<128x128xbf16, #tpu.memory_space<vmem>>, %arg8: memref<1x128xf32, #tpu.memory_space<vmem>>, %arg9: memref<1x128xf32, #tpu.memory_space<vmem>>, %arg10: memref<1x128xf32, #tpu.memory_space<vmem>>, %arg11: memref<8x128xf32, #tpu.memory_space<vmem>>) attributes {dimension_semantics = [], scalar_prefetch = 0 : i64, scratch_operands = 0 : i64, tpu.core_type = #tpu.core_type<tc>} {
    %c0 = arith.constant 0 : index
    %c0_0 = arith.constant 0 : index
    %0 = vector.load %arg4[%c0, %c0_0] : memref<512x128xbf16, #tpu.memory_space<vmem>>, vector<512x128xbf16>
    %c0_1 = arith.constant 0 : index
    %c0_2 = arith.constant 0 : index
    %1 = vector.load %arg0[%c0_1, %c0_2] : memref<72x512xbf16, #tpu.memory_space<vmem>>, vector<72x512xbf16>
    %cst = arith.constant dense<0.000000e+00> : vector<72x128xf32>
    %2 = tpu.matmul %1, %0, %cst {dimension_numbers = #tpu.dot_dimension_numbers<[1], [0], [0], [1], [0, 0, 1, 1], [], []>} : vector<72x512xbf16>, vector<512x128xbf16>, vector<72x128xf32> -> vector<72x128xf32>
    %c0_3 = arith.constant 0 : index
    %c0_4 = arith.constant 0 : index
    %3 = vector.load %arg1[%c0_3, %c0_4] : memref<72x512xbf16, #tpu.memory_space<vmem>>, vector<72x512xbf16>
    %cst_5 = arith.constant dense<0.000000e+00> : vector<72x128xf32>
    %4 = tpu.matmul %3, %0, %cst_5 {dimension_numbers = #tpu.dot_dimension_numbers<[1], [0], [0], [1], [0, 0, 1, 1], [], []>} : vector<72x512xbf16>, vector<512x128xbf16>, vector<72x128xf32> -> vector<72x128xf32>
    %5 = arith.maximumf %2, %4 : vector<72x128xf32>
    %c0_6 = arith.constant 0 : index
    %c0_7 = arith.constant 0 : index
    %6 = vector.load %arg2[%c0_6, %c0_7] : memref<72x512xbf16, #tpu.memory_space<vmem>>, vector<72x512xbf16>
    %cst_8 = arith.constant dense<0.000000e+00> : vector<72x128xf32>
    %7 = tpu.matmul %6, %0, %cst_8 {dimension_numbers = #tpu.dot_dimension_numbers<[1], [0], [0], [1], [0, 0, 1, 1], [], []>} : vector<72x512xbf16>, vector<512x128xbf16>, vector<72x128xf32> -> vector<72x128xf32>
    %c0_9 = arith.constant 0 : index
    %c0_10 = arith.constant 0 : index
    %8 = vector.load %arg3[%c0_9, %c0_10] : memref<72x512xbf16, #tpu.memory_space<vmem>>, vector<72x512xbf16>
    %cst_11 = arith.constant dense<0.000000e+00> : vector<72x128xf32>
    %9 = tpu.matmul %8, %0, %cst_11 {dimension_numbers = #tpu.dot_dimension_numbers<[1], [0], [0], [1], [0, 0, 1, 1], [], []>} : vector<72x512xbf16>, vector<512x128xbf16>, vector<72x128xf32> -> vector<72x128xf32>
    %10 = arith.maximumf %7, %9 : vector<72x128xf32>
    %11 = arith.maximumf %5, %10 : vector<72x128xf32>
    %cst_12 = arith.constant 0.000000e+00 : f32
    %12 = vector.broadcast %cst_12 : f32 to vector<72x128xf32>
    %13 = arith.maximumf %11, %12 : vector<72x128xf32>
    %cst_13 = arith.constant 0.000000e+00 : f32
    %14 = vector.broadcast %cst_13 : f32 to vector<8x128xf32>
    %15 = vector.extract_strided_slice %13 {offsets = [0, 0], sizes = [8, 128], strides = [1, 1]} : vector<72x128xf32> to vector<8x128xf32>
    %16 = arith.truncf %15 : vector<8x128xf32> to vector<8x128xbf16>
    %c0_14 = arith.constant 0 : index
    %c0_15 = arith.constant 0 : index
    %17 = vector.load %arg5[%c0_14, %c0_15] : memref<1152x128xbf16, #tpu.memory_space<vmem>>, vector<128x128xbf16>
    %cst_16 = arith.constant dense<0.000000e+00> : vector<8x128xf32>
    %18 = tpu.matmul %16, %17, %cst_16 {dimension_numbers = #tpu.dot_dimension_numbers<[1], [0], [0], [1], [0, 0, 1, 1], [], []>} : vector<8x128xbf16>, vector<128x128xbf16>, vector<8x128xf32> -> vector<8x128xf32>
    %19 = arith.addf %14, %18 : vector<8x128xf32>
    %20 = vector.extract_strided_slice %13 {offsets = [8, 0], sizes = [8, 128], strides = [1, 1]} : vector<72x128xf32> to vector<8x128xf32>
    %21 = arith.truncf %20 : vector<8x128xf32> to vector<8x128xbf16>
    %c128 = arith.constant 128 : index
    %c0_17 = arith.constant 0 : index
    %22 = vector.load %arg5[%c128, %c0_17] : memref<1152x128xbf16, #tpu.memory_space<vmem>>, vector<128x128xbf16>
    %cst_18 = arith.constant dense<0.000000e+00> : vector<8x128xf32>
    %23 = tpu.matmul %21, %22, %cst_18 {dimension_numbers = #tpu.dot_dimension_numbers<[1], [0], [0], [1], [0, 0, 1, 1], [], []>} : vector<8x128xbf16>, vector<128x128xbf16>, vector<8x128xf32> -> vector<8x128xf32>
    %24 = arith.addf %19, %23 : vector<8x128xf32>
    %25 = vector.extract_strided_slice %13 {offsets = [16, 0], sizes = [8, 128], strides = [1, 1]} : vector<72x128xf32> to vector<8x128xf32>
    %26 = arith.truncf %25 : vector<8x128xf32> to vector<8x128xbf16>
    %c256 = arith.constant 256 : index
    %c0_19 = arith.constant 0 : index
    %27 = vector.load %arg5[%c256, %c0_19] : memref<1152x128xbf16, #tpu.memory_space<vmem>>, vector<128x128xbf16>
    %cst_20 = arith.constant dense<0.000000e+00> : vector<8x128xf32>
    %28 = tpu.matmul %26, %27, %cst_20 {dimension_numbers = #tpu.dot_dimension_numbers<[1], [0], [0], [1], [0, 0, 1, 1], [], []>} : vector<8x128xbf16>, vector<128x128xbf16>, vector<8x128xf32> -> vector<8x128xf32>
    %29 = arith.addf %24, %28 : vector<8x128xf32>
    %30 = vector.extract_strided_slice %13 {offsets = [24, 0], sizes = [8, 128], strides = [1, 1]} : vector<72x128xf32> to vector<8x128xf32>
    %31 = arith.truncf %30 : vector<8x128xf32> to vector<8x128xbf16>
    %c384 = arith.constant 384 : index
    %c0_21 = arith.constant 0 : index
    %32 = vector.load %arg5[%c384, %c0_21] : memref<1152x128xbf16, #tpu.memory_space<vmem>>, vector<128x128xbf16>
    %cst_22 = arith.constant dense<0.000000e+00> : vector<8x128xf32>
    %33 = tpu.matmul %31, %32, %cst_22 {dimension_numbers = #tpu.dot_dimension_numbers<[1], [0], [0], [1], [0, 0, 1, 1], [], []>} : vector<8x128xbf16>, vector<128x128xbf16>, vector<8x128xf32> -> vector<8x128xf32>
    %34 = arith.addf %29, %33 : vector<8x128xf32>
    %35 = vector.extract_strided_slice %13 {offsets = [32, 0], sizes = [8, 128], strides = [1, 1]} : vector<72x128xf32> to vector<8x128xf32>
    %36 = arith.truncf %35 : vector<8x128xf32> to vector<8x128xbf16>
    %c512 = arith.constant 512 : index
    %c0_23 = arith.constant 0 : index
    %37 = vector.load %arg5[%c512, %c0_23] : memref<1152x128xbf16, #tpu.memory_space<vmem>>, vector<128x128xbf16>
    %cst_24 = arith.constant dense<0.000000e+00> : vector<8x128xf32>
    %38 = tpu.matmul %36, %37, %cst_24 {dimension_numbers = #tpu.dot_dimension_numbers<[1], [0], [0], [1], [0, 0, 1, 1], [], []>} : vector<8x128xbf16>, vector<128x128xbf16>, vector<8x128xf32> -> vector<8x128xf32>
    %39 = arith.addf %34, %38 : vector<8x128xf32>
    %40 = vector.extract_strided_slice %13 {offsets = [40, 0], sizes = [8, 128], strides = [1, 1]} : vector<72x128xf32> to vector<8x128xf32>
    %41 = arith.truncf %40 : vector<8x128xf32> to vector<8x128xbf16>
    %c640 = arith.constant 640 : index
    %c0_25 = arith.constant 0 : index
    %42 = vector.load %arg5[%c640, %c0_25] : memref<1152x128xbf16, #tpu.memory_space<vmem>>, vector<128x128xbf16>
    %cst_26 = arith.constant dense<0.000000e+00> : vector<8x128xf32>
    %43 = tpu.matmul %41, %42, %cst_26 {dimension_numbers = #tpu.dot_dimension_numbers<[1], [0], [0], [1], [0, 0, 1, 1], [], []>} : vector<8x128xbf16>, vector<128x128xbf16>, vector<8x128xf32> -> vector<8x128xf32>
    %44 = arith.addf %39, %43 : vector<8x128xf32>
    %45 = vector.extract_strided_slice %13 {offsets = [48, 0], sizes = [8, 128], strides = [1, 1]} : vector<72x128xf32> to vector<8x128xf32>
    %46 = arith.truncf %45 : vector<8x128xf32> to vector<8x128xbf16>
    %c768 = arith.constant 768 : index
    %c0_27 = arith.constant 0 : index
    %47 = vector.load %arg5[%c768, %c0_27] : memref<1152x128xbf16, #tpu.memory_space<vmem>>, vector<128x128xbf16>
    %cst_28 = arith.constant dense<0.000000e+00> : vector<8x128xf32>
    %48 = tpu.matmul %46, %47, %cst_28 {dimension_numbers = #tpu.dot_dimension_numbers<[1], [0], [0], [1], [0, 0, 1, 1], [], []>} : vector<8x128xbf16>, vector<128x128xbf16>, vector<8x128xf32> -> vector<8x128xf32>
    %49 = arith.addf %44, %48 : vector<8x128xf32>
    %50 = vector.extract_strided_slice %13 {offsets = [56, 0], sizes = [8, 128], strides = [1, 1]} : vector<72x128xf32> to vector<8x128xf32>
    %51 = arith.truncf %50 : vector<8x128xf32> to vector<8x128xbf16>
    %c896 = arith.constant 896 : index
    %c0_29 = arith.constant 0 : index
    %52 = vector.load %arg5[%c896, %c0_29] : memref<1152x128xbf16, #tpu.memory_space<vmem>>, vector<128x128xbf16>
    %cst_30 = arith.constant dense<0.000000e+00> : vector<8x128xf32>
    %53 = tpu.matmul %51, %52, %cst_30 {dimension_numbers = #tpu.dot_dimension_numbers<[1], [0], [0], [1], [0, 0, 1, 1], [], []>} : vector<8x128xbf16>, vector<128x128xbf16>, vector<8x128xf32> -> vector<8x128xf32>
    %54 = arith.addf %49, %53 : vector<8x128xf32>
    %55 = vector.extract_strided_slice %13 {offsets = [64, 0], sizes = [8, 128], strides = [1, 1]} : vector<72x128xf32> to vector<8x128xf32>
    %56 = arith.truncf %55 : vector<8x128xf32> to vector<8x128xbf16>
    %c1024 = arith.constant 1024 : index
    %c0_31 = arith.constant 0 : index
    %57 = vector.load %arg5[%c1024, %c0_31] : memref<1152x128xbf16, #tpu.memory_space<vmem>>, vector<128x128xbf16>
    %cst_32 = arith.constant dense<0.000000e+00> : vector<8x128xf32>
    %58 = tpu.matmul %56, %57, %cst_32 {dimension_numbers = #tpu.dot_dimension_numbers<[1], [0], [0], [1], [0, 0, 1, 1], [], []>} : vector<8x128xbf16>, vector<128x128xbf16>, vector<8x128xf32> -> vector<8x128xf32>
    %59 = arith.addf %54, %58 : vector<8x128xf32>
    %c0_33 = arith.constant 0 : index
    %c0_34 = arith.constant 0 : index
    %60 = vector.load %arg8[%c0_33, %c0_34] : memref<1x128xf32, #tpu.memory_space<vmem>>, vector<1x128xf32>
    %61 = vector.broadcast %60 : vector<1x128xf32> to vector<8x128xf32>
    %62 = arith.addf %59, %61 : vector<8x128xf32>
    %cst_35 = arith.constant 0.000000e+00 : f32
    %63 = vector.broadcast %cst_35 : f32 to vector<8x128xf32>
    %64 = arith.maximumf %62, %63 : vector<8x128xf32>
    %65 = arith.truncf %64 : vector<8x128xf32> to vector<8x128xbf16>
    %c0_36 = arith.constant 0 : index
    %c0_37 = arith.constant 0 : index
    %66 = vector.load %arg6[%c0_36, %c0_37] : memref<128x128xbf16, #tpu.memory_space<vmem>>, vector<128x128xbf16>
    %cst_38 = arith.constant dense<0.000000e+00> : vector<8x128xf32>
    %67 = tpu.matmul %65, %66, %cst_38 {dimension_numbers = #tpu.dot_dimension_numbers<[1], [0], [0], [1], [0, 0, 1, 1], [], []>} : vector<8x128xbf16>, vector<128x128xbf16>, vector<8x128xf32> -> vector<8x128xf32>
    %c0_39 = arith.constant 0 : index
    %c0_40 = arith.constant 0 : index
    %68 = vector.load %arg9[%c0_39, %c0_40] : memref<1x128xf32, #tpu.memory_space<vmem>>, vector<1x128xf32>
    %69 = vector.broadcast %68 : vector<1x128xf32> to vector<8x128xf32>
    %70 = arith.addf %67, %69 : vector<8x128xf32>
    %cst_41 = arith.constant 0.000000e+00 : f32
    %71 = vector.broadcast %cst_41 : f32 to vector<8x128xf32>
    %72 = arith.maximumf %70, %71 : vector<8x128xf32>
    %73 = arith.truncf %72 : vector<8x128xf32> to vector<8x128xbf16>
    %c0_42 = arith.constant 0 : index
    %c0_43 = arith.constant 0 : index
    %74 = vector.load %arg7[%c0_42, %c0_43] : memref<128x128xbf16, #tpu.memory_space<vmem>>, vector<128x128xbf16>
    %cst_44 = arith.constant dense<0.000000e+00> : vector<8x128xf32>
    %75 = tpu.matmul %73, %74, %cst_44 {dimension_numbers = #tpu.dot_dimension_numbers<[1], [0], [0], [1], [0, 0, 1, 1], [], []>} : vector<8x128xbf16>, vector<128x128xbf16>, vector<8x128xf32> -> vector<8x128xf32>
    %c0_45 = arith.constant 0 : index
    %c0_46 = arith.constant 0 : index
    %76 = vector.load %arg10[%c0_45, %c0_46] : memref<1x128xf32, #tpu.memory_space<vmem>>, vector<1x128xf32>
    %77 = vector.broadcast %76 : vector<1x128xf32> to vector<8x128xf32>
    %78 = arith.addf %75, %77 : vector<8x128xf32>
    %79 = tpu.iota {dimensions = array<i32: 1>} : vector<8x128xi32>
    %c26_i32 = arith.constant 26 : i32
    %80 = vector.broadcast %c26_i32 : i32 to vector<8x128xi32>
    %81 = arith.cmpi slt, %79, %80 : vector<8x128xi32>
    %cst_47 = arith.constant -1.000000e+30 : f32
    %82 = vector.broadcast %cst_47 : f32 to vector<8x128xf32>
    %83 = arith.select %81, %78, %82 : vector<8x128xi1>, vector<8x128xf32>
    %cst_48 = arith.constant dense<0xFF800000> : vector<8xf32>
    %84 = vector.multi_reduction <maximumf>, %83, %cst_48 [1] : vector<8x128xf32> to vector<8xf32>
    %85 = vector.shape_cast %84 : vector<8xf32> to vector<8x1xf32>
    %86 = vector.broadcast %85 : vector<8x1xf32> to vector<8x128xf32>
    %87 = arith.subf %83, %86 : vector<8x128xf32>
    %88 = math.exp %87 : vector<8x128xf32>
    %cst_49 = arith.constant dense<0.000000e+00> : vector<8xf32>
    %89 = vector.multi_reduction <add>, %88, %cst_49 [1] : vector<8x128xf32> to vector<8xf32>
    %90 = vector.shape_cast %89 : vector<8xf32> to vector<8x1xf32>
    %91 = math.log %90 : vector<8x1xf32>
    %92 = arith.addf %85, %91 : vector<8x1xf32>
    %93 = vector.broadcast %92 : vector<8x1xf32> to vector<8x128xf32>
    %94 = arith.subf %83, %93 : vector<8x128xf32>
    %c0_50 = arith.constant 0 : index
    %c0_51 = arith.constant 0 : index
    %95 = vector.load %arg11[%c0_50, %c0_51] : memref<8x128xf32, #tpu.memory_space<vmem>>, vector<8x128xf32>
    tpu.vector_store %arg11[%c0_50, %c0_51], %94 {strides = array<i32>} : memref<8x128xf32, #tpu.memory_space<vmem>>, vector<8x128xf32>,
    return
  }
}

</mosaic_0001>

<llo_original>
// kernel: reid_net_forward.2
$region0: #{reid_net_forward.2}
  #allocation0 [shape = 'u32[]', space=smem, size = 0x4, offset = 0x4, fixed_abs, tag = 'smem constant byte address 0x4 - core index']
  #allocation1 [shape = 'u32[144,128]{1,0:T(1,128)}', space=vmem, size = 0x12000, scoped, tag = 'internal scratch']
  %s0 = inlined_call_operand.vmem [shape: bf16[200,256], index: 0, kind: input, shape index: {}]
  %s1 = inlined_call_operand.vmem [shape: bf16[200,256], index: 1, kind: input, shape index: {}]
  %s2 = inlined_call_operand.vmem [shape: bf16[200,256], index: 2, kind: input, shape index: {}]
  %s3 = inlined_call_operand.vmem [shape: bf16[200,256], index: 3, kind: input, shape index: {}]
  %s4 = inlined_call_operand.vmem [shape: bf16[256,128], index: 4, kind: input, shape index: {}]
  %s5 = inlined_call_operand.vmem [shape: f32[200,128], index: 5, kind: output, shape index: {}]
  %s6 = sld [smem:[#allocation0]]
  $region30: #{reid_net_forward.2} parent=0
    _
  %s8 = ssub.s32 1, %s6
  %s9 = scalar_select 0, %s8, %s6
  // Predicated region
  $region2: #{reid_net_forward.2} parent=0 // pred_check
    _
  $region3: #{reid_net_forward.2} parent=0 // pred_check_branch
    %11 = sbr.rel (0) target = $region5
  $region4: #{reid_net_forward.2} parent=0 // pred_region
    _
  $region5: #{reid_net_forward.2} parent=0 // pred_fallthru
    _
  // Predicated region
  $region6: #{reid_net_forward.2} parent=0 // pred_check
    _
  $region7: #{reid_net_forward.2} parent=0 // pred_check_branch
    %13 = sbr.rel (0) target = $region9
  $region8: #{reid_net_forward.2} parent=0 // pred_region
    _
  $region9: #{reid_net_forward.2} parent=0 // pred_fallthru
    _
  // Predicated region
  $region10: #{reid_net_forward.2} parent=0 // pred_check
    _
  $region11: #{reid_net_forward.2} parent=0 // pred_check_branch
    %15 = sbr.rel (0) target = $region13
  $region12: #{reid_net_forward.2} parent=0 // pred_region
    _
  $region13: #{reid_net_forward.2} parent=0 // pred_fallthru
    _
  // Predicated region
  $region14: #{reid_net_forward.2} parent=0 // pred_check
    _
  $region15: #{reid_net_forward.2} parent=0 // pred_check_branch
    %17 = sbr.rel (0) target = $region17
  $region16: #{reid_net_forward.2} parent=0 // pred_region
    _
  $region17: #{reid_net_forward.2} parent=0 // pred_fallthru
    _
  // Predicated region
  $region18: #{reid_net_forward.2} parent=0 // pred_check
    _
  $region19: #{reid_net_forward.2} parent=0 // pred_check_branch
    %19 = sbr.rel (0) target = $region21
  $region20: #{reid_net_forward.2} parent=0 // pred_region
    _
  $region21: #{reid_net_forward.2} parent=0 // pred_fallthru
    _
  %v21 = vld [vmem:[%s4] sm:$0xf]
  %v22 = vld [vmem:[%s4 + $0x4] sm:$0xf]
  %v23 = vld [vmem:[%s4 + $0x8] sm:$0xf]
  %v24 = vld [vmem:[%s4 + $0xc] sm:$0xf]
  %v25 = vld [vmem:[%s4 + $0x10] sm:$0xf]
  %v26 = vld [vmem:[%s4 + $0x14] sm:$0xf]
  %v27 = vld [vmem:[%s4 + $0x18] sm:$0xf]
  %v28 = vld [vmem:[%s4 + $0x1c] sm:$0xf]
  %v29 = vld [vmem:[%s4 + $0x20] sm:$0xf]
  %v30 = vld [vmem:[%s4 + $0x24] sm:$0xf]
  %v31 = vld [vmem:[%s4 + $0x28] sm:$0xf]
  %v32 = vld [vmem:[%s4 + $0x2c] sm:$0xf]
  %v33 = vld [vmem:[%s4 + $0x30] sm:$0xf]
  %v34 = vld [vmem:[%s4 + $0x34] sm:$0xf]
  %v35 = vld [vmem:[%s4 + $0x38] sm:$0xf]
  %v36 = vld [vmem:[%s4 + $0x3c] sm:$0xf]
  %v37 = vld [vmem:[%s4 + $0x40] sm:$0xf]
  %v38 = vld [vmem:[%s4 + $0x44] sm:$0xf]
  %v39 = vld [vmem:[%s4 + $0x48] sm:$0xf]
  %v40 = vld [vmem:[%s4 + $0x4c] sm:$0xf]
  %v41 = vld [vmem:[%s4 + $0x50] sm:$0xf]
  %v42 = vld [vmem:[%s4 + $0x54] sm:$0xf]
  %v43 = vld [vmem:[%s4 + $0x58] sm:$0xf]
  %v44 = vld [vmem:[%s4 + $0x5c] sm:$0xf]
  %v45 = vld [vmem:[%s4 + $0x60] sm:$0xf]
  %v46 = vld [vmem:[%s4 + $0x64] sm:$0xf]
  %v47 = vld [vmem:[%s4 + $0x68] sm:$0xf]
  %v48 = vld [vmem:[%s4 + $0x6c] sm:$0xf]
  %v49 = vld [vmem:[%s4 + $0x70] sm:$0xf]
  %v50 = vld [vmem:[%s4 + $0x74] sm:$0xf]
  %v51 = vld [vmem:[%s4 + $0x78] sm:$0xf]
  %v52 = vld [vmem:[%s4 + $0x7c] sm:$0xf]
  %v53 = vld [vmem:[%s0] sm:$0xff]
  %v54 = vld [vmem:[%s0 + $0x8] sm:$0xff]
  %v55 = vld [vmem:[%s0 + $0x10] sm:$0xff]
  %v56 = vld [vmem:[%s0 + $0x18] sm:$0xff]
  %v57 = vld [vmem:[%s0 + $0x20] sm:$0xff]
  %v58 = vld [vmem:[%s0 + $0x28] sm:$0xff]
  %v59 = vld [vmem:[%s0 + $0x30] sm:$0xff]
  %v60 = vld [vmem:[%s0 + $0x38] sm:$0xff]
  %v61 = vld [vmem:[%s0 + $0x40] sm:$0xff]
  %v62 = vld [vmem:[%s0 + $0x48] sm:$0xff]
  %v63 = vld [vmem:[%s0 + $0x50] sm:$0xff]
  %v64 = vld [vmem:[%s0 + $0x58] sm:$0xff]
  %v65 = vld [vmem:[%s0 + $0x60] sm:$0xff]
  %v66 = vld [vmem:[%s0 + $0x68] sm:$0xff]
  %v67 = vld [vmem:[%s0 + $0x70] sm:$0xff]
  %v68 = vld [vmem:[%s0 + $0x78] sm:$0xff]
  %v69 = vld [vmem:[%s0 + $0x80] sm:$0xff]
  %v70 = vld [vmem:[%s0 + $0x88] sm:$0xff]
  %v71 = vld [vmem:[%s0 + $0x90] sm:$0xff]
  %v72 = vld [vmem:[%s0 + $0x98] sm:$0xff]
  %v73 = vld [vmem:[%s0 + $0xa0] sm:$0xff]
  %v74 = vld [vmem:[%s0 + $0xa8] sm:$0xff]
  %v75 = vld [vmem:[%s0 + $0xb0] sm:$0xff]
  %v76 = vld [vmem:[%s0 + $0xb8] sm:$0xff]
  %v77 = vld [vmem:[%s0 + $0xc0] sm:$0xff]
  %v103 = vunpack.c.l.b16 %v53
  %v104 = vunpack.c.h.b16 %v53
  %v105 = vunpack.c.l.b16 %v54
  %v106 = vunpack.c.h.b16 %v54
  %v107 = vunpack.c.l.b16 %v55
  %v108 = vunpack.c.h.b16 %v55
  %v109 = vunpack.c.l.b16 %v56
  %v110 = vunpack.c.h.b16 %v56
  %v111 = vunpack.c.l.b16 %v57
  %v112 = vunpack.c.h.b16 %v57
  %v113 = vunpack.c.l.b16 %v58
  %v114 = vunpack.c.h.b16 %v58
  %v115 = vunpack.c.l.b16 %v59
  %v116 = vunpack.c.h.b16 %v59
  %v117 = vunpack.c.l.b16 %v60
  %v118 = vunpack.c.h.b16 %v60
  %v119 = vunpack.c.l.b16 %v61
  %v120 = vunpack.c.h.b16 %v61
  %v121 = vunpack.c.l.b16 %v62
  %v122 = vunpack.c.h.b16 %v62
  %v123 = vunpack.c.l.b16 %v63
  %v124 = vunpack.c.h.b16 %v63
  %v125 = vunpack.c.l.b16 %v64
  %v126 = vunpack.c.h.b16 %v64
  %v127 = vunpack.c.l.b16 %v65
  %v128 = vunpack.c.h.b16 %v65
  %v129 = vunpack.c.l.b16 %v66
  %v130 = vunpack.c.h.b16 %v66
  %v131 = vunpack.c.l.b16 %v67
  %v132 = vunpack.c.h.b16 %v67
  %v133 = vunpack.c.l.b16 %v68
  %v134 = vunpack.c.h.b16 %v68
  %v135 = vunpack.c.l.b16 %v69
  %v136 = vunpack.c.h.b16 %v69
  %v137 = vunpack.c.l.b16 %v70
  %v138 = vunpack.c.h.b16 %v70
  %v139 = vunpack.c.l.b16 %v71
  %v140 = vunpack.c.h.b16 %v71
  %v141 = vunpack.c.l.b16 %v72
  %v142 = vunpack.c.h.b16 %v72
  %v143 = vunpack.c.l.b16 %v73
  %v144 = vunpack.c.h.b16 %v73
  %v145 = vunpack.c.l.b16 %v74
  %v146 = vunpack.c.h.b16 %v74
  %v147 = vunpack.c.l.b16 %v75
  %v148 = vunpack.c.h.b16 %v75
  %v149 = vunpack.c.l.b16 %v76
  %v150 = vunpack.c.h.b16 %v76
  %v151 = vunpack.c.l.b16 %v77
  %v152 = vunpack.c.h.b16 %v77
  %v153 = vpack.c.b16 %v105, %v103
  %v154 = vpack.c.b16 %v106, %v104
  %v155 = vpack.c.b16 %v109, %v107
  %v156 = vpack.c.b16 %v110, %v108
  %v157 = vpack.c.b16 %v113, %v111
  %v158 = vpack.c.b16 %v114, %v112
  %v159 = vpack.c.b16 %v117, %v115
  %v160 = vpack.c.b16 %v118, %v116
  %v161 = vpack.c.b16 %v121, %v119
  %v162 = vpack.c.b16 %v122, %v120
  %v163 = vpack.c.b16 %v125, %v123
  %v164 = vpack.c.b16 %v126, %v124
  %v165 = vpack.c.b16 %v129, %v127
  %v166 = vpack.c.b16 %v130, %v128
  %v167 = vpack.c.b16 %v133, %v131
  %v168 = vpack.c.b16 %v134, %v132
  %v169 = vpack.c.b16 %v137, %v135
  %v170 = vpack.c.b16 %v138, %v136
  %v171 = vpack.c.b16 %v141, %v139
  %v172 = vpack.c.b16 %v142, %v140
  %v173 = vpack.c.b16 %v145, %v143
  %v174 = vpack.c.b16 %v146, %v144
  %v175 = vpack.c.b16 %v149, %v147
  %v176 = vpack.c.b16 %v150, %v148
  %v177 = vpack.c.b16 %v151, %v151
  %v178 = vpack.c.b16 %v152, %v152
  %v237 = vunpack.c.l.b16 %v21
  %v238 = vunpack.c.l.b16 %v22
  %v239 = vunpack.c.l.b16 %v23
  %v240 = vunpack.c.l.b16 %v24
  %v241 = vunpack.c.l.b16 %v25
  %v242 = vunpack.c.l.b16 %v26
  %v243 = vunpack.c.l.b16 %v27
  %v244 = vunpack.c.l.b16 %v28
  %v245 = vunpack.c.l.b16 %v29
  %v246 = vunpack.c.l.b16 %v30
  %v247 = vunpack.c.l.b16 %v31
  %v248 = vunpack.c.l.b16 %v32
  %v249 = vunpack.c.l.b16 %v33
  %v250 = vunpack.c.l.b16 %v34
  %v251 = vunpack.c.l.b16 %v35
  %v252 = vunpack.c.l.b16 %v36
  %v253 = vunpack.c.l.b16 %v37
  %v254 = vunpack.c.l.b16 %v38
  %v255 = vunpack.c.l.b16 %v39
  %v256 = vunpack.c.l.b16 %v40
  %v257 = vunpack.c.l.b16 %v41
  %v258 = vunpack.c.l.b16 %v42
  %v259 = vunpack.c.l.b16 %v43
  %v260 = vunpack.c.l.b16 %v44
  %v261 = vunpack.c.l.b16 %v45
  %v262 = vunpack.c.l.b16 %v46
  %v263 = vunpack.c.l.b16 %v47
  %v264 = vunpack.c.l.b16 %v48
  %v265 = vunpack.c.l.b16 %v49
  %v266 = vunpack.c.l.b16 %v50
  %v267 = vunpack.c.l.b16 %v51
  %v268 = vunpack.c.l.b16 %v52
  %v269 = vpack.c.b16 %v238, %v237
  %v270 = vpack.c.b16 %v240, %v239
  %v271 = vpack.c.b16 %v242, %v241
  %v272 = vpack.c.b16 %v244, %v243
  %v273 = vpack.c.b16 %v246, %v245
  %v274 = vpack.c.b16 %v248, %v247
  %v275 = vpack.c.b16 %v250, %v249
  %v276 = vpack.c.b16 %v252, %v251
  %v277 = vpack.c.b16 %v254, %v253
  %v278 = vpack.c.b16 %v256, %v255
  %v279 = vpack.c.b16 %v258, %v257
  %v280 = vpack.c.b16 %v260, %v259
  %v281 = vpack.c.b16 %v262, %v261
  %v282 = vpack.c.b16 %v264, %v263
  %v283 = vpack.c.b16 %v266, %v265
  %v284 = vpack.c.b16 %v268, %v267
  %301 = vmatprep.subr.bf16.mxu0 0
  %302 = vmatpush1.bf16.msra.mxu0 %v269
  %303 = vmatprep.subr.bf16.mxu0 0
  %304 = vmatpush1.bf16.msra.mxu0 %v270
  %305 = vmatprep.subr.bf16.mxu0 0
  %306 = vmatpush1.bf16.msra.mxu0 %v271
  %307 = vmatprep.subr.bf16.mxu0 0
  %308 = vmatpush1.bf16.msra.mxu0 %v272
  %309 = vmatprep.subr.bf16.mxu0 0
  %310 = vmatpush1.bf16.msra.mxu0 %v273
  %311 = vmatprep.subr.bf16.mxu0 0
  %312 = vmatpush1.bf16.msra.mxu0 %v274
  %313 = vmatprep.subr.bf16.mxu0 0
  %314 = vmatpush1.bf16.msra.mxu0 %v275
  %315 = vmatprep.subr.bf16.mxu0 0
  %316 = vmatpush1.bf16.msra.mxu0 %v276
  %317 = vmatprep.subr.bf16.mxu0 0
  %318 = vmatpush1.bf16.msra.mxu0 %v277
  %319 = vmatprep.subr.bf16.mxu0 0
  %320 = vmatpush1.bf16.msra.mxu0 %v278
  %321 = vmatprep.subr.bf16.mxu0 0
  %322 = vmatpush1.bf16.msra.mxu0 %v279
  %323 = vmatprep.subr.bf16.mxu0 0
  %324 = vmatpush1.bf16.msra.mxu0 %v280
  %325 = vmatprep.subr.bf16.mxu0 0
  %326 = vmatpush1.bf16.msra.mxu0 %v281
  %327 = vmatprep.subr.bf16.mxu0 0
  %328 = vmatpush1.bf16.msra.mxu0 %v282
  %329 = vmatprep.subr.bf16.mxu0 0
  %330 = vmatpush1.bf16.msra.mxu0 %v283
  %331 = vmatprep.subr.bf16.mxu0 0
  %332 = vmatpush1.bf16.msra.mxu0 %v284
  %333 = vmatprep.mubr.bf16.mxu0 %v154
  %334 = vmatmul.mubr.bf16.gmra.mrb[0].mxu0 %v153
  %v335 = vpop.f32.mrb[0].mxu0
  %v336 = vadd.f32 0.0, %v335
  %v337 = vpop.f32.mrb[0].mxu0
  %v338 = vpop.f32.mrb[0].mxu0
  %v339 = vadd.f32 0.0, %v338
  %v340 = vpop.f32.mrb[0].mxu0
  %341 = vmatprep.mubr.bf16.mxu0 %v156
  %342 = vmatmul.mubr.bf16.gmra.mrb[0].mxu0 %v155
  %v343 = vpop.f32.mrb[0].mxu0
  %v344 = vadd.f32 0.0, %v343
  %v345 = vpop.f32.mrb[0].mxu0
  %v346 = vpop.f32.mrb[0].mxu0
  %v347 = vadd.f32 0.0, %v346
  %v348 = vpop.f32.mrb[0].mxu0
  %349 = vmatprep.mubr.bf16.mxu0 %v158
  %350 = vmatmul.mubr.bf16.gmra.mrb[0].mxu0 %v157
  %v351 = vpop.f32.mrb[0].mxu0
  %v352 = vadd.f32 0.0, %v351
  %v353 = vpop.f32.mrb[0].mxu0
  %v354 = vpop.f32.mrb[0].mxu0
  %v355 = vadd.f32 0.0, %v354
  %v356 = vpop.f32.mrb[0].mxu0
  %357 = vmatprep.mubr.bf16.mxu0 %v160
  %358 = vmatmul.mubr.bf16.gmra.mrb[0].mxu0 %v159
  %v359 = vpop.f32.mrb[0].mxu0
  %v360 = vadd.f32 0.0, %v359
  %v361 = vpop.f32.mrb[0].mxu0
  %v362 = vpop.f32.mrb[0].mxu0
  %v363 = vadd.f32 0.0, %v362
  %v364 = vpop.f32.mrb[0].mxu0
  %365 = vmatprep.mubr.bf16.mxu0 %v162
  %366 = vmatmul.mubr.bf16.gmra.mrb[0].mxu0 %v161
  %v367 = vpop.f32.mrb[0].mxu0
  %v368 = vadd.f32 0.0, %v367
  %v369 = vpop.f32.mrb[0].mxu0
  %v370 = vpop.f32.mrb[0].mxu0
  %v371 = vadd.f32 0.0, %v370
  %v372 = vpop.f32.mrb[0].mxu0
  %373 = vmatprep.mubr.bf16.mxu0 %v164
  %374 = vmatmul.mubr.bf16.gmra.mrb[0].mxu0 %v163
  %v375 = vpop.f32.mrb[0].mxu0
  %v376 = vadd.f32 0.0, %v375
  %v377 = vpop.f32.mrb[0].mxu0
  %v378 = vpop.f32.mrb[0].mxu0
  %v379 = vadd.f32 0.0, %v378
  %v380 = vpop.f32.mrb[0].mxu0
  %381 = vmatprep.mubr.bf16.mxu0 %v166
  %382 = vmatmul.mubr.bf16.gmra.mrb[0].mxu0 %v165
  %v383 = vpop.f32.mrb[0].mxu0
  %v384 = vadd.f32 0.0, %v383
  %v385 = vpop.f32.mrb[0].mxu0
  %v386 = vpop.f32.mrb[0].mxu0
  %v387 = vadd.f32 0.0, %v386
  %v388 = vpop.f32.mrb[0].mxu0
  %389 = vmatprep.mubr.bf16.mxu0 %v168
  %390 = vmatmul.mubr.bf16.gmra.mrb[0].mxu0 %v167
  %v391 = vpop.f32.mrb[0].mxu0
  %v392 = vadd.f32 0.0, %v391
  %v393 = vpop.f32.mrb[0].mxu0
  %v394 = vpop.f32.mrb[0].mxu0
  %v395 = vadd.f32 0.0, %v394
  %v396 = vpop.f32.mrb[0].mxu0
  %397 = vmatprep.mubr.bf16.mxu0 %v170
  %398 = vmatmul.mubr.bf16.gmra.mrb[0].mxu0 %v169
  %v399 = vpop.f32.mrb[0].mxu0
  %v400 = vadd.f32 0.0, %v399
  %v401 = vpop.f32.mrb[0].mxu0
  %v402 = vpop.f32.mrb[0].mxu0
  %v403 = vadd.f32 0.0, %v402
  %v404 = vpop.f32.mrb[0].mxu0
  %405 = vmatprep.mubr.bf16.mxu0 %v172
  %406 = vmatmul.mubr.bf16.gmra.mrb[0].mxu0 %v171
  %v407 = vpop.f32.mrb[0].mxu0
  %v408 = vadd.f32 0.0, %v407
  %v409 = vpop.f32.mrb[0].mxu0
  %v410 = vpop.f32.mrb[0].mxu0
  %v411 = vadd.f32 0.0, %v410
  %v412 = vpop.f32.mrb[0].mxu0
  %413 = vmatprep.mubr.bf16.mxu0 %v174
  %414 = vmatmul.mubr.bf16.gmra.mrb[0].mxu0 %v173
  %v415 = vpop.f32.mrb[0].mxu0
  %v416 = vadd.f32 0.0, %v415
  %v417 = vpop.f32.mrb[0].mxu0
  %v418 = vpop.f32.mrb[0].mxu0
  %v419 = vadd.f32 0.0, %v418
  %v420 = vpop.f32.mrb[0].mxu0
  %421 = vmatprep.mubr.bf16.mxu0 %v176
  %422 = vmatmul.mubr.bf16.gmra.mrb[0].mxu0 %v175
  %v423 = vpop.f32.mrb[0].mxu0
  %v424 = vadd.f32 0.0, %v423
  %v425 = vpop.f32.mrb[0].mxu0
  %v426 = vpop.f32.mrb[0].mxu0
  %v427 = vadd.f32 0.0, %v426
  %v428 = vpop.f32.mrb[0].mxu0
  %429 = vmatprep.mubr.bf16.mxu0 %v178
  %430 = vmatmul.mubr.bf16.gmra.mrb[0].mxu0 %v177
  %v431 = vpop.f32.mrb[0].mxu0
  %v432 = vadd.f32 0.0, %v431
  %v433 = vpop.f32.mrb[0].mxu0
  %v434 = vpop.f32.mrb[0].mxu0
  %v435 = vpop.f32.mrb[0].mxu0
  %436 = vdwg.mxu0
  %v437 = vld [vmem:[%s1] sm:$0xff]
  %v438 = vld [vmem:[%s1 + $0x8] sm:$0xff]
  %v439 = vld [vmem:[%s1 + $0x10] sm:$0xff]
  %v440 = vld [vmem:[%s1 + $0x18] sm:$0xff]
  %v441 = vld [vmem:[%s1 + $0x20] sm:$0xff]
  %v442 = vld [vmem:[%s1 + $0x28] sm:$0xff]
  %v443 = vld [vmem:[%s1 + $0x30] sm:$0xff]
  %v444 = vld [vmem:[%s1 + $0x38] sm:$0xff]
  %v445 = vld [vmem:[%s1 + $0x40] sm:$0xff]
  %v446 = vld [vmem:[%s1 + $0x48] sm:$0xff]
  %v447 = vld [vmem:[%s1 + $0x50] sm:$0xff]
  %v448 = vld [vmem:[%s1 + $0x58] sm:$0xff]
  %v449 = vld [vmem:[%s1 + $0x60] sm:$0xff]
  %v450 = vld [vmem:[%s1 + $0x68] sm:$0xff]
  %v451 = vld [vmem:[%s1 + $0x70] sm:$0xff]
  %v452 = vld [vmem:[%s1 + $0x78] sm:$0xff]
  %v453 = vld [vmem:[%s1 + $0x80] sm:$0xff]
  %v454 = vld [vmem:[%s1 + $0x88] sm:$0xff]
  %v455 = vld [vmem:[%s1 + $0x90] sm:$0xff]
  %v456 = vld [vmem:[%s1 + $0x98] sm:$0xff]
  %v457 = vld [vmem:[%s1 + $0xa0] sm:$0xff]
  %v458 = vld [vmem:[%s1 + $0xa8] sm:$0xff]
  %v459 = vld [vmem:[%s1 + $0xb0] sm:$0xff]
  %v460 = vld [vmem:[%s1 + $0xb8] sm:$0xff]
  %v461 = vld [vmem:[%s1 + $0xc0] sm:$0xff]
  %v487 = vunpack.c.l.b16 %v437
  %v488 = vunpack.c.h.b16 %v437
  %v489 = vunpack.c.l.b16 %v438
  %v490 = vunpack.c.h.b16 %v438
  %v491 = vunpack.c.l.b16 %v439
  %v492 = vunpack.c.h.b16 %v439
  %v493 = vunpack.c.l.b16 %v440
  %v494 = vunpack.c.h.b16 %v440
  %v495 = vunpack.c.l.b16 %v441
  %v496 = vunpack.c.h.b16 %v441
  %v497 = vunpack.c.l.b16 %v442
  %v498 = vunpack.c.h.b16 %v442
  %v499 = vunpack.c.l.b16 %v443
  %v500 = vunpack.c.h.b16 %v443
  %v501 = vunpack.c.l.b16 %v444
  %v502 = vunpack.c.h.b16 %v444
  %v503 = vunpack.c.l.b16 %v445
  %v504 = vunpack.c.h.b16 %v445
  %v505 = vunpack.c.l.b16 %v446
  %v506 = vunpack.c.h.b16 %v446
  %v507 = vunpack.c.l.b16 %v447
  %v508 = vunpack.c.h.b16 %v447
  %v509 = vunpack.c.l.b16 %v448
  %v510 = vunpack.c.h.b16 %v448
  %v511 = vunpack.c.l.b16 %v449
  %v512 = vunpack.c.h.b16 %v449
  %v513 = vunpack.c.l.b16 %v450
  %v514 = vunpack.c.h.b16 %v450
  %v515 = vunpack.c.l.b16 %v451
  %v516 = vunpack.c.h.b16 %v451
  %v517 = vunpack.c.l.b16 %v452
  %v518 = vunpack.c.h.b16 %v452
  %v519 = vunpack.c.l.b16 %v453
  %v520 = vunpack.c.h.b16 %v453
  %v521 = vunpack.c.l.b16 %v454
  %v522 = vunpack.c.h.b16 %v454
  %v523 = vunpack.c.l.b16 %v455
  %v524 = vunpack.c.h.b16 %v455
  %v525 = vunpack.c.l.b16 %v456
  %v526 = vunpack.c.h.b16 %v456
  %v527 = vunpack.c.l.b16 %v457
  %v528 = vunpack.c.h.b16 %v457
  %v529 = vunpack.c.l.b16 %v458
  %v530 = vunpack.c.h.b16 %v458
  %v531 = vunpack.c.l.b16 %v459
  %v532 = vunpack.c.h.b16 %v459
  %v533 = vunpack.c.l.b16 %v460
  %v534 = vunpack.c.h.b16 %v460
  %v535 = vunpack.c.l.b16 %v461
  %v536 = vunpack.c.h.b16 %v461
  %v537 = vpack.c.b16 %v489, %v487
  %v538 = vpack.c.b16 %v490, %v488
  %v539 = vpack.c.b16 %v493, %v491
  %v540 = vpack.c.b16 %v494, %v492
  %v541 = vpack.c.b16 %v497, %v495
  %v542 = vpack.c.b16 %v498, %v496
  %v543 = vpack.c.b16 %v501, %v499
  %v544 = vpack.c.b16 %v502, %v500
  %v545 = vpack.c.b16 %v505, %v503
  %v546 = vpack.c.b16 %v506, %v504
  %v547 = vpack.c.b16 %v509, %v507
  %v548 = vpack.c.b16 %v510, %v508
  %v549 = vpack.c.b16 %v513, %v511
  %v550 = vpack.c.b16 %v514, %v512
  %v551 = vpack.c.b16 %v517, %v515
  %v552 = vpack.c.b16 %v518, %v516
  %v553 = vpack.c.b16 %v521, %v519
  %v554 = vpack.c.b16 %v522, %v520
  %v555 = vpack.c.b16 %v525, %v523
  %v556 = vpack.c.b16 %v526, %v524
  %v557 = vpack.c.b16 %v529, %v527
  %v558 = vpack.c.b16 %v530, %v528
  %v559 = vpack.c.b16 %v533, %v531
  %v560 = vpack.c.b16 %v534, %v532
  %v561 = vpack.c.b16 %v535, %v535
  %v562 = vpack.c.b16 %v536, %v536
  %589 = vmatprep.subr.bf16.mxu0 0
  %590 = vmatpush1.bf16.msra.mxu0 %v269
  %591 = vmatprep.subr.bf16.mxu0 0
  %592 = vmatpush1.bf16.msra.mxu0 %v270
  %593 = vmatprep.subr.bf16.mxu0 0
  %594 = vmatpush1.bf16.msra.mxu0 %v271
  %595 = vmatprep.subr.bf16.mxu0 0
  %596 = vmatpush1.bf16.msra.mxu0 %v272
  %597 = vmatprep.subr.bf16.mxu0 0
  %598 = vmatpush1.bf16.msra.mxu0 %v273
  %599 = vmatprep.subr.bf16.mxu0 0
  %600 = vmatpush1.bf16.msra.mxu0 %v274
  %601 = vmatprep.subr.bf16.mxu0 0
  %602 = vmatpush1.bf16.msra.mxu0 %v275
  %603 = vmatprep.subr.bf16.mxu0 0
  %604 = vmatpush1.bf16.msra.mxu0 %v276
  %605 = vmatprep.subr.bf16.mxu0 0
  %606 = vmatpush1.bf16.msra.mxu0 %v277
  %607 = vmatprep.subr.bf16.mxu0 0
  %608 = vmatpush1.bf16.msra.mxu0 %v278
  %609 = vmatprep.subr.bf16.mxu0 0
  %610 = vmatpush1.bf16.msra.mxu0 %v279
  %611 = vmatprep.subr.bf16.mxu0 0
  %612 = vmatpush1.bf16.msra.mxu0 %v280
  %613 = vmatprep.subr.bf16.mxu0 0
  %614 = vmatpush1.bf16.msra.mxu0 %v281
  %615 = vmatprep.subr.bf16.mxu0 0
  %616 = vmatpush1.bf16.msra.mxu0 %v282
  %617 = vmatprep.subr.bf16.mxu0 0
  %618 = vmatpush1.bf16.msra.mxu0 %v283
  %619 = vmatprep.subr.bf16.mxu0 0
  %620 = vmatpush1.bf16.msra.mxu0 %v284
  %621 = vmatprep.mubr.bf16.mxu0 %v538
  %622 = vmatmul.mubr.bf16.gmra.mrb[0].mxu0 %v537
  %v623 = vpop.f32.mrb[0].mxu0
  %v624 = vadd.f32 0.0, %v623
  %v625 = vpop.f32.mrb[0].mxu0
  %v626 = vpop.f32.mrb[0].mxu0
  %v627 = vadd.f32 0.0, %v626
  %v628 = vpop.f32.mrb[0].mxu0
  %629 = vmatprep.mubr.bf16.mxu0 %v540
  %630 = vmatmul.mubr.bf16.gmra.mrb[0].mxu0 %v539
  %v631 = vpop.f32.mrb[0].mxu0
  %v632 = vadd.f32 0.0, %v631
  %v633 = vpop.f32.mrb[0].mxu0
  %v634 = vpop.f32.mrb[0].mxu0
  %v635 = vadd.f32 0.0, %v634
  %v636 = vpop.f32.mrb[0].mxu0
  %637 = vmatprep.mubr.bf16.mxu0 %v542
  %638 = vmatmul.mubr.bf16.gmra.mrb[0].mxu0 %v541
  %v639 = vpop.f32.mrb[0].mxu0
  %v640 = vadd.f32 0.0, %v639
  %v641 = vpop.f32.mrb[0].mxu0
  %v642 = vpop.f32.mrb[0].mxu0
  %v643 = vadd.f32 0.0, %v642
  %v644 = vpop.f32.mrb[0].mxu0
  %645 = vmatprep.mubr.bf16.mxu0 %v544
  %646 = vmatmul.mubr.bf16.gmra.mrb[0].mxu0 %v543
  %v647 = vpop.f32.mrb[0].mxu0
  %v648 = vadd.f32 0.0, %v647
  %v649 = vpop.f32.mrb[0].mxu0
  %v650 = vpop.f32.mrb[0].mxu0
  %v651 = vadd.f32 0.0, %v650
  %v652 = vpop.f32.mrb[0].mxu0
  %653 = vmatprep.mubr.bf16.mxu0 %v546
  %654 = vmatmul.mubr.bf16.gmra.mrb[0].mxu0 %v545
  %v655 = vpop.f32.mrb[0].mxu0
  %v656 = vadd.f32 0.0, %v655
  %v657 = vpop.f32.mrb[0].mxu0
  %v658 = vpop.f32.mrb[0].mxu0
  %v659 = vadd.f32 0.0, %v658
  %v660 = vpop.f32.mrb[0].mxu0
  %661 = vmatprep.mubr.bf16.mxu0 %v548
  %662 = vmatmul.mubr.bf16.gmra.mrb[0].mxu0 %v547
  %v663 = vpop.f32.mrb[0].mxu0
  %v664 = vadd.f32 0.0, %v663
  %v665 = vpop.f32.mrb[0].mxu0
  %v666 = vpop.f32.mrb[0].mxu0
  %v667 = vadd.f32 0.0, %v666
  %v668 = vpop.f32.mrb[0].mxu0
  %669 = vmatprep.mubr.bf16.mxu0 %v550
  %670 = vmatmul.mubr.bf16.gmra.mrb[0].mxu0 %v549
  %v671 = vpop.f32.mrb[0].mxu0
  %v672 = vadd.f32 0.0, %v671
  %v673 = vpop.f32.mrb[0].mxu0
  %v674 = vpop.f32.mrb[0].mxu0
  %v675 = vadd.f32 0.0, %v674
  %v676 = vpop.f32.mrb[0].mxu0
  %677 = vmatprep.mubr.bf16.mxu0 %v552
  %678 = vmatmul.mubr.bf16.gmra.mrb[0].mxu0 %v551
  %v679 = vpop.f32.mrb[0].mxu0
  %v680 = vadd.f32 0.0, %v679
  %v681 = vpop.f32.mrb[0].mxu0
  %v682 = vpop.f32.mrb[0].mxu0
  %v683 = vadd.f32 0.0, %v682
  %v684 = vpop.f32.mrb[0].mxu0
  %685 = vmatprep.mubr.bf16.mxu0 %v554
  %686 = vmatmul.mubr.bf16.gmra.mrb[0].mxu0 %v553
  %v687 = vpop.f32.mrb[0].mxu0
  %v688 = vadd.f32 0.0, %v687
  %v689 = vpop.f32.mrb[0].mxu0
  %v690 = vpop.f32.mrb[0].mxu0
  %v691 = vadd.f32 0.0, %v690
  %v692 = vpop.f32.mrb[0].mxu0
  %693 = vmatprep.mubr.bf16.mxu0 %v556
  %694 = vmatmul.mubr.bf16.gmra.mrb[0].mxu0 %v555
  %v695 = vpop.f32.mrb[0].mxu0
  %v696 = vadd.f32 0.0, %v695
  %v697 = vpop.f32.mrb[0].mxu0
  %v698 = vpop.f32.mrb[0].mxu0
  %v699 = vadd.f32 0.0, %v698
  %v700 = vpop.f32.mrb[0].mxu0
  %701 = vmatprep.mubr.bf16.mxu0 %v558
  %702 = vmatmul.mubr.bf16.gmra.mrb[0].mxu0 %v557
  %v703 = vpop.f32.mrb[0].mxu0
  %v704 = vadd.f32 0.0, %v703
  %v705 = vpop.f32.mrb[0].mxu0
  %v706 = vpop.f32.mrb[0].mxu0
  %v707 = vadd.f32 0.0, %v706
  %v708 = vpop.f32.mrb[0].mxu0
  %709 = vmatprep.mubr.bf16.mxu0 %v560
  %710 = vmatmul.mubr.bf16.gmra.mrb[0].mxu0 %v559
  %v711 = vpop.f32.mrb[0].mxu0
  %v712 = vadd.f32 0.0, %v711
  %v713 = vpop.f32.mrb[0].mxu0
  %v714 = vpop.f32.mrb[0].mxu0
  %v715 = vadd.f32 0.0, %v714
  %v716 = vpop.f32.mrb[0].mxu0
  %717 = vmatprep.mubr.bf16.mxu0 %v562
  %718 = vmatmul.mubr.bf16.gmra.mrb[0].mxu0 %v561
  %v719 = vpop.f32.mrb[0].mxu0
  %v720 = vadd.f32 0.0, %v719
  %v721 = vpop.f32.mrb[0].mxu0
  %v722 = vpop.f32.mrb[0].mxu0
  %v723 = vpop.f32.mrb[0].mxu0
  %724 = vdwg.mxu0
  %v725 = vmax.f32 %v336, %v624
  %v726 = vmax.f32 %v339, %v627
  %v727 = vmax.f32 %v344, %v632
  %v728 = vmax.f32 %v347, %v635
  %v729 = vmax.f32 %v352, %v640
  %v730 = vmax.f32 %v355, %v643
  %v731 = vmax.f32 %v360, %v648
  %v732 = vmax.f32 %v363, %v651
  %v733 = vmax.f32 %v368, %v656
  %v734 = vmax.f32 %v371, %v659
  %v735 = vmax.f32 %v376, %v664
  %v736 = vmax.f32 %v379, %v667
  %v737 = vmax.f32 %v384, %v672
  %v738 = vmax.f32 %v387, %v675
  %v739 = vmax.f32 %v392, %v680
  %v740 = vmax.f32 %v395, %v683
  %v741 = vmax.f32 %v400, %v688
  %v742 = vmax.f32 %v403, %v691
  %v743 = vmax.f32 %v408, %v696
  %v744 = vmax.f32 %v411, %v699
  %v745 = vmax.f32 %v416, %v704
  %v746 = vmax.f32 %v419, %v707
  %v747 = vmax.f32 %v424, %v712
  %v748 = vmax.f32 %v427, %v715
  %v749 = vmax.f32 %v432, %v720
  %v750 = vld [vmem:[%s2] sm:$0xff]
  %v751 = vld [vmem:[%s2 + $0x8] sm:$0xff]
  %v752 = vld [vmem:[%s2 + $0x10] sm:$0xff]
  %v753 = vld [vmem:[%s2 + $0x18] sm:$0xff]
  %v754 = vld [vmem:[%s2 + $0x20] sm:$0xff]
  %v755 = vld [vmem:[%s2 + $0x28] sm:$0xff]
  %v756 = vld [vmem:[%s2 + $0x30] sm:$0xff]
  %v757 = vld [vmem:[%s2 + $0x38] sm:$0xff]
  %v758 = vld [vmem:[%s2 + $0x40] sm:$0xff]
  %v759 = vld [vmem:[%s2 + $0x48] sm:$0xff]
  %v760 = vld [vmem:[%s2 + $0x50] sm:$0xff]
  %v761 = vld [vmem:[%s2 + $0x58] sm:$0xff]
  %v762 = vld [vmem:[%s2 + $0x60] sm:$0xff]
  %v763 = vld [vmem:[%s2 + $0x68] sm:$0xff]
  %v764 = vld [vmem:[%s2 + $0x70] sm:$0xff]
  %v765 = vld [vmem:[%s2 + $0x78] sm:$0xff]
  %v766 = vld [vmem:[%s2 + $0x80] sm:$0xff]
  %v767 = vld [vmem:[%s2 + $0x88] sm:$0xff]
  %v768 = vld [vmem:[%s2 + $0x90] sm:$0xff]
  %v769 = vld [vmem:[%s2 + $0x98] sm:$0xff]
  %v770 = vld [vmem:[%s2 + $0xa0] sm:$0xff]
  %v771 = vld [vmem:[%s2 + $0xa8] sm:$0xff]
  %v772 = vld [vmem:[%s2 + $0xb0] sm:$0xff]
  %v773 = vld [vmem:[%s2 + $0xb8] sm:$0xff]
  %v774 = vld [vmem:[%s2 + $0xc0] sm:$0xff]
  %v800 = vunpack.c.l.b16 %v750
  %v801 = vunpack.c.h.b16 %v750
  %v802 = vunpack.c.l.b16 %v751
  %v803 = vunpack.c.h.b16 %v751
  %v804 = vunpack.c.l.b16 %v752
  %v805 = vunpack.c.h.b16 %v752
  %v806 = vunpack.c.l.b16 %v753
  %v807 = vunpack.c.h.b16 %v753
  %v808 = vunpack.c.l.b16 %v754
  %v809 = vunpack.c.h.b16 %v754
  %v810 = vunpack.c.l.b16 %v755
  %v811 = vunpack.c.h.b16 %v755
  %v812 = vunpack.c.l.b16 %v756
  %v813 = vunpack.c.h.b16 %v756
  %v814 = vunpack.c.l.b16 %v757
  %v815 = vunpack.c.h.b16 %v757
  %v816 = vunpack.c.l.b16 %v758
  %v817 = vunpack.c.h.b16 %v758
  %v818 = vunpack.c.l.b16 %v759
  %v819 = vunpack.c.h.b16 %v759
  %v820 = vunpack.c.l.b16 %v760
  %v821 = vunpack.c.h.b16 %v760
  %v822 = vunpack.c.l.b16 %v761
  %v823 = vunpack.c.h.b16 %v761
  %v824 = vunpack.c.l.b16 %v762
  %v825 = vunpack.c.h.b16 %v762
  %v826 = vunpack.c.l.b16 %v763
  %v827 = vunpack.c.h.b16 %v763
  %v828 = vunpack.c.l.b16 %v764
  %v829 = vunpack.c.h.b16 %v764
  %v830 = vunpack.c.l.b16 %v765
  %v831 = vunpack.c.h.b16 %v765
  %v832 = vunpack.c.l.b16 %v766
  %v833 = vunpack.c.h.b16 %v766
  %v834 = vunpack.c.l.b16 %v767
  %v835 = vunpack.c.h.b16 %v767
  %v836 = vunpack.c.l.b16 %v768
  %v837 = vunpack.c.h.b16 %v768
  %v838 = vunpack.c.l.b16 %v769
  %v839 = vunpack.c.h.b16 %v769
  %v840 = vunpack.c.l.b16 %v770
  %v841 = vunpack.c.h.b16 %v770
  %v842 = vunpack.c.l.b16 %v771
  %v843 = vunpack.c.h.b16 %v771
  %v844 = vunpack.c.l.b16 %v772
  %v845 = vunpack.c.h.b16 %v772
  %v846 = vunpack.c.l.b16 %v773
  %v847 = vunpack.c.h.b16 %v773
  %v848 = vunpack.c.l.b16 %v774
  %v849 = vunpack.c.h.b16 %v774
  %v850 = vpack.c.b16 %v802, %v800
  %v851 = vpack.c.b16 %v803, %v801
  %v852 = vpack.c.b16 %v806, %v804
  %v853 = vpack.c.b16 %v807, %v805
  %v854 = vpack.c.b16 %v810, %v808
  %v855 = vpack.c.b16 %v811, %v809
  %v856 = vpack.c.b16 %v814, %v812
  %v857 = vpack.c.b16 %v815, %v813
  %v858 = vpack.c.b16 %v818, %v816
  %v859 = vpack.c.b16 %v819, %v817
  %v860 = vpack.c.b16 %v822, %v820
  %v861 = vpack.c.b16 %v823, %v821
  %v862 = vpack.c.b16 %v826, %v824
  %v863 = vpack.c.b16 %v827, %v825
  %v864 = vpack.c.b16 %v830, %v828
  %v865 = vpack.c.b16 %v831, %v829
  %v866 = vpack.c.b16 %v834, %v832
  %v867 = vpack.c.b16 %v835, %v833
  %v868 = vpack.c.b16 %v838, %v836
  %v869 = vpack.c.b16 %v839, %v837
  %v870 = vpack.c.b16 %v842, %v840
  %v871 = vpack.c.b16 %v843, %v841
  %v872 = vpack.c.b16 %v846, %v844
  %v873 = vpack.c.b16 %v847, %v845
  %v874 = vpack.c.b16 %v848, %v848
  %v875 = vpack.c.b16 %v849, %v849
  %902 = vmatprep.subr.bf16.mxu0 0
  %903 = vmatpush1.bf16.msra.mxu0 %v269
  %904 = vmatprep.subr.bf16.mxu0 0
  %905 = vmatpush1.bf16.msra.mxu0 %v270
  %906 = vmatprep.subr.bf16.mxu0 0
  %907 = vmatpush1.bf16.msra.mxu0 %v271
  %908 = vmatprep.subr.bf16.mxu0 0
  %909 = vmatpush1.bf16.msra.mxu0 %v272
  %910 = vmatprep.subr.bf16.mxu0 0
  %911 = vmatpush1.bf16.msra.mxu0 %v273
  %912 = vmatprep.subr.bf16.mxu0 0
  %913 = vmatpush1.bf16.msra.mxu0 %v274
  %914 = vmatprep.subr.bf16.mxu0 0
  %915 = vmatpush1.bf16.msra.mxu0 %v275
  %916 = vmatprep.subr.bf16.mxu0 0
  %917 = vmatpush1.bf16.msra.mxu0 %v276
  %918 = vmatprep.subr.bf16.mxu0 0
  %919 = vmatpush1.bf16.msra.mxu0 %v277
  %920 = vmatprep.subr.bf16.mxu0 0
  %921 = vmatpush1.bf16.msra.mxu0 %v278
  %922 = vmatprep.subr.bf16.mxu0 0
  %923 = vmatpush1.bf16.msra.mxu0 %v279
  %924 = vmatprep.subr.bf16.mxu0 0
  %925 = vmatpush1.bf16.msra.mxu0 %v280
  %926 = vmatprep.subr.bf16.mxu0 0
  %927 = vmatpush1.bf16.msra.mxu0 %v281
  %928 = vmatprep.subr.bf16.mxu0 0
  %929 = vmatpush1.bf16.msra.mxu0 %v282
  %930 = vmatprep.subr.bf16.mxu0 0
  %931 = vmatpush1.bf16.msra.mxu0 %v283
  %932 = vmatprep.subr.bf16.mxu0 0
  %933 = vmatpush1.bf16.msra.mxu0 %v284
  %934 = vmatprep.mubr.bf16.mxu0 %v851
  %935 = vmatmul.mubr.bf16.gmra.mrb[0].mxu0 %v850
  %v936 = vpop.f32.mrb[0].mxu0
  %v937 = vadd.f32 0.0, %v936
  %v938 = vpop.f32.mrb[0].mxu0
  %v939 = vpop.f32.mrb[0].mxu0
  %v940 = vadd.f32 0.0, %v939
  %v941 = vpop.f32.mrb[0].mxu0
  %942 = vmatprep.mubr.bf16.mxu0 %v853
  %943 = vmatmul.mubr.bf16.gmra.mrb[0].mxu0 %v852
  %v944 = vpop.f32.mrb[0].mxu0
  %v945 = vadd.f32 0.0, %v944
  %v946 = vpop.f32.mrb[0].mxu0
  %v947 = vpop.f32.mrb[0].mxu0
  %v948 = vadd.f32 0.0, %v947
  %v949 = vpop.f32.mrb[0].mxu0
  %950 = vmatprep.mubr.bf16.mxu0 %v855
  %951 = vmatmul.mubr.bf16.gmra.mrb[0].mxu0 %v854
  %v952 = vpop.f32.mrb[0].mxu0
  %v953 = vadd.f32 0.0, %v952
  %v954 = vpop.f32.mrb[0].mxu0
  %v955 = vpop.f32.mrb[0].mxu0
  %v956 = vadd.f32 0.0, %v955
  %v957 = vpop.f32.mrb[0].mxu0
  %958 = vmatprep.mubr.bf16.mxu0 %v857
  %959 = vmatmul.mubr.bf16.gmra.mrb[0].mxu0 %v856
  %v960 = vpop.f32.mrb[0].mxu0
  %v961 = vadd.f32 0.0, %v960
  %v962 = vpop.f32.mrb[0].mxu0
  %v963 = vpop.f32.mrb[0].mxu0
  %v964 = vadd.f32 0.0, %v963
  %v965 = vpop.f32.mrb[0].mxu0
  %966 = vmatprep.mubr.bf16.mxu0 %v859
  %967 = vmatmul.mubr.bf16.gmra.mrb[0].mxu0 %v858
  %v968 = vpop.f32.mrb[0].mxu0
  %v969 = vadd.f32 0.0, %v968
  %v970 = vpop.f32.mrb[0].mxu0
  %v971 = vpop.f32.mrb[0].mxu0
  %v972 = vadd.f32 0.0, %v971
  %v973 = vpop.f32.mrb[0].mxu0
  %974 = vmatprep.mubr.bf16.mxu0 %v861
  %975 = vmatmul.mubr.bf16.gmra.mrb[0].mxu0 %v860
  %v976 = vpop.f32.mrb[0].mxu0
  %v977 = vadd.f32 0.0, %v976
  %v978 = vpop.f32.mrb[0].mxu0
  %v979 = vpop.f32.mrb[0].mxu0
  %v980 = vadd.f32 0.0, %v979
  %v981 = vpop.f32.mrb[0].mxu0
  %982 = vmatprep.mubr.bf16.mxu0 %v863
  %983 = vmatmul.mubr.bf16.gmra.mrb[0].mxu0 %v862
  %v984 = vpop.f32.mrb[0].mxu0
  %v985 = vadd.f32 0.0, %v984
  %v986 = vpop.f32.mrb[0].mxu0
  %v987 = vpop.f32.mrb[0].mxu0
  %v988 = vadd.f32 0.0, %v987
  %v989 = vpop.f32.mrb[0].mxu0
  %990 = vmatprep.mubr.bf16.mxu0 %v865
  %991 = vmatmul.mubr.bf16.gmra.mrb[0].mxu0 %v864
  %v992 = vpop.f32.mrb[0].mxu0
  %v993 = vadd.f32 0.0, %v992
  %v994 = vpop.f32.mrb[0].mxu0
  %v995 = vpop.f32.mrb[0].mxu0
  %v996 = vadd.f32 0.0, %v995
  %v997 = vpop.f32.mrb[0].mxu0
  %998 = vmatprep.mubr.bf16.mxu0 %v867
  %999 = vmatmul.mubr.bf16.gmra.mrb[0].mxu0 %v866
  %v1000 = vpop.f32.mrb[0].mxu0
  %v1001 = vadd.f32 0.0, %v1000
  %v1002 = vpop.f32.mrb[0].mxu0
  %v1003 = vpop.f32.mrb[0].mxu0
  %v1004 = vadd.f32 0.0, %v1003
  %v1005 = vpop.f32.mrb[0].mxu0
  %1006 = vmatprep.mubr.bf16.mxu0 %v869
  %1007 = vmatmul.mubr.bf16.gmra.mrb[0].mxu0 %v868
  %v1008 = vpop.f32.mrb[0].mxu0
  %v1009 = vadd.f32 0.0, %v1008
  %v1010 = vpop.f32.mrb[0].mxu0
  %v1011 = vpop.f32.mrb[0].mxu0
  %v1012 = vadd.f32 0.0, %v1011
  %v1013 = vpop.f32.mrb[0].mxu0
  %1014 = vmatprep.mubr.bf16.mxu0 %v871
  %1015 = vmatmul.mubr.bf16.gmra.mrb[0].mxu0 %v870
  %v1016 = vpop.f32.mrb[0].mxu0
  %v1017 = vadd.f32 0.0, %v1016
  %v1018 = vpop.f32.mrb[0].mxu0
  %v1019 = vpop.f32.mrb[0].mxu0
  %v1020 = vadd.f32 0.0, %v1019
  %v1021 = vpop.f32.mrb[0].mxu0
  %1022 = vmatprep.mubr.bf16.mxu0 %v873
  %1023 = vmatmul.mubr.bf16.gmra.mrb[0].mxu0 %v872
  %v1024 = vpop.f32.mrb[0].mxu0
  %v1025 = vadd.f32 0.0, %v1024
  %v1026 = vpop.f32.mrb[0].mxu0
  %v1027 = vpop.f32.mrb[0].mxu0
  %v1028 = vadd.f32 0.0, %v1027
  %v1029 = vpop.f32.mrb[0].mxu0
  %1030 = vmatprep.mubr.bf16.mxu0 %v875
  %1031 = vmatmul.mubr.bf16.gmra.mrb[0].mxu0 %v874
  %v1032 = vpop.f32.mrb[0].mxu0
  %v1033 = vadd.f32 0.0, %v1032
  %v1034 = vpop.f32.mrb[0].mxu0
  %v1035 = vpop.f32.mrb[0].mxu0
  %v1036 = vpop.f32.mrb[0].mxu0
  %1037 = vdwg.mxu0
  %v1038 = vld [vmem:[%s3] sm:$0xff]
  %v1039 = vld [vmem:[%s3 + $0x8] sm:$0xff]
  %v1040 = vld [vmem:[%s3 + $0x10] sm:$0xff]
  %v1041 = vld [vmem:[%s3 + $0x18] sm:$0xff]
  %v1042 = vld [vmem:[%s3 + $0x20] sm:$0xff]
  %v1043 = vld [vmem:[%s3 + $0x28] sm:$0xff]
  %v1044 = vld [vmem:[%s3 + $0x30] sm:$0xff]
  %v1045 = vld [vmem:[%s3 + $0x38] sm:$0xff]
  %v1046 = vld [vmem:[%s3 + $0x40] sm:$0xff]
  %v1047 = vld [vmem:[%s3 + $0x48] sm:$0xff]
  %v1048 = vld [vmem:[%s3 + $0x50] sm:$0xff]
  %v1049 = vld [vmem:[%s3 + $0x58] sm:$0xff]
  %v1050 = vld [vmem:[%s3 + $0x60] sm:$0xff]
  %v1051 = vld [vmem:[%s3 + $0x68] sm:$0xff]
  %v1052 = vld [vmem:[%s3 + $0x70] sm:$0xff]
  %v1053 = vld [vmem:[%s3 + $0x78] sm:$0xff]
  %v1054 = vld [vmem:[%s3 + $0x80] sm:$0xff]
  %v1055 = vld [vmem:[%s3 + $0x88] sm:$0xff]
  %v1056 = vld [vmem:[%s3 + $0x90] sm:$0xff]
  %v1057 = vld [vmem:[%s3 + $0x98] sm:$0xff]
  %v1058 = vld [vmem:[%s3 + $0xa0] sm:$0xff]
  %v1059 = vld [vmem:[%s3 + $0xa8] sm:$0xff]
  %v1060 = vld [vmem:[%s3 + $0xb0] sm:$0xff]
  %v1061 = vld [vmem:[%s3 + $0xb8] sm:$0xff]
  %v1062 = vld [vmem:[%s3 + $0xc0] sm:$0xff]
  %v1088 = vunpack.c.l.b16 %v1038
  %v1089 = vunpack.c.h.b16 %v1038
  %v1090 = vunpack.c.l.b16 %v1039
  %v1091 = vunpack.c.h.b16 %v1039
  %v1092 = vunpack.c.l.b16 %v1040
  %v1093 = vunpack.c.h.b16 %v1040
  %v1094 = vunpack.c.l.b16 %v1041
  %v1095 = vunpack.c.h.b16 %v1041
  %v1096 = vunpack.c.l.b16 %v1042
  %v1097 = vunpack.c.h.b16 %v1042
  %v1098 = vunpack.c.l.b16 %v1043
  %v1099 = vunpack.c.h.b16 %v1043
  %v1100 = vunpack.c.l.b16 %v1044
  %v1101 = vunpack.c.h.b16 %v1044
  %v1102 = vunpack.c.l.b16 %v1045
  %v1103 = vunpack.c.h.b16 %v1045
  %v1104 = vunpack.c.l.b16 %v1046
  %v1105 = vunpack.c.h.b16 %v1046
  %v1106 = vunpack.c.l.b16 %v1047
  %v1107 = vunpack.c.h.b16 %v1047
  %v1108 = vunpack.c.l.b16 %v1048
  %v1109 = vunpack.c.h.b16 %v1048
  %v1110 = vunpack.c.l.b16 %v1049
  %v1111 = vunpack.c.h.b16 %v1049
  %v1112 = vunpack.c.l.b16 %v1050
  %v1113 = vunpack.c.h.b16 %v1050
  %v1114 = vunpack.c.l.b16 %v1051
  %v1115 = vunpack.c.h.b16 %v1051
  %v1116 = vunpack.c.l.b16 %v1052
  %v1117 = vunpack.c.h.b16 %v1052
  %v1118 = vunpack.c.l.b16 %v1053
  %v1119 = vunpack.c.h.b16 %v1053
  %v1120 = vunpack.c.l.b16 %v1054
  %v1121 = vunpack.c.h.b16 %v1054
  %v1122 = vunpack.c.l.b16 %v1055
  %v1123 = vunpack.c.h.b16 %v1055
  %v1124 = vunpack.c.l.b16 %v1056
  %v1125 = vunpack.c.h.b16 %v1056
  %v1126 = vunpack.c.l.b16 %v1057
  %v1127 = vunpack.c.h.b16 %v1057
  %v1128 = vunpack.c.l.b16 %v1058
  %v1129 = vunpack.c.h.b16 %v1058
  %v1130 = vunpack.c.l.b16 %v1059
  %v1131 = vunpack.c.h.b16 %v1059
  %v1132 = vunpack.c.l.b16 %v1060
  %v1133 = vunpack.c.h.b16 %v1060
  %v1134 = vunpack.c.l.b16 %v1061
  %v1135 = vunpack.c.h.b16 %v1061
  %v1136 = vunpack.c.l.b16 %v1062
  %v1137 = vunpack.c.h.b16 %v1062
  %v1138 = vpack.c.b16 %v1090, %v1088
  %v1139 = vpack.c.b16 %v1091, %v1089
  %v1140 = vpack.c.b16 %v1094, %v1092
  %v1141 = vpack.c.b16 %v1095, %v1093
  %v1142 = vpack.c.b16 %v1098, %v1096
  %v1143 = vpack.c.b16 %v1099, %v1097
  %v1144 = vpack.c.b16 %v1102, %v1100
  %v1145 = vpack.c.b16 %v1103, %v1101
  %v1146 = vpack.c.b16 %v1106, %v1104
  %v1147 = vpack.c.b16 %v1107, %v1105
  %v1148 = vpack.c.b16 %v1110, %v1108
  %v1149 = vpack.c.b16 %v1111, %v1109
  %v1150 = vpack.c.b16 %v1114, %v1112
  %v1151 = vpack.c.b16 %v1115, %v1113
  %v1152 = vpack.c.b16 %v1118, %v1116
  %v1153 = vpack.c.b16 %v1119, %v1117
  %v1154 = vpack.c.b16 %v1122, %v1120
  %v1155 = vpack.c.b16 %v1123, %v1121
  %v1156 = vpack.c.b16 %v1126, %v1124
  %v1157 = vpack.c.b16 %v1127, %v1125
  %v1158 = vpack.c.b16 %v1130, %v1128
  %v1159 = vpack.c.b16 %v1131, %v1129
  %v1160 = vpack.c.b16 %v1134, %v1132
  %v1161 = vpack.c.b16 %v1135, %v1133
  %v1162 = vpack.c.b16 %v1136, %v1136
  %v1163 = vpack.c.b16 %v1137, %v1137
  %1190 = vmatprep.subr.bf16.mxu0 0
  %1191 = vmatpush1.bf16.msra.mxu0 %v269
  %1192 = vmatprep.subr.bf16.mxu0 0
  %1193 = vmatpush1.bf16.msra.mxu0 %v270
  %1194 = vmatprep.subr.bf16.mxu0 0
  %1195 = vmatpush1.bf16.msra.mxu0 %v271
  %1196 = vmatprep.subr.bf16.mxu0 0
  %1197 = vmatpush1.bf16.msra.mxu0 %v272
  %1198 = vmatprep.subr.bf16.mxu0 0
  %1199 = vmatpush1.bf16.msra.mxu0 %v273
  %1200 = vmatprep.subr.bf16.mxu0 0
  %1201 = vmatpush1.bf16.msra.mxu0 %v274
  %1202 = vmatprep.subr.bf16.mxu0 0
  %1203 = vmatpush1.bf16.msra.mxu0 %v275
  %1204 = vmatprep.subr.bf16.mxu0 0
  %1205 = vmatpush1.bf16.msra.mxu0 %v276
  %1206 = vmatprep.subr.bf16.mxu0 0
  %1207 = vmatpush1.bf16.msra.mxu0 %v277
  %1208 = vmatprep.subr.bf16.mxu0 0
  %1209 = vmatpush1.bf16.msra.mxu0 %v278
  %1210 = vmatprep.subr.bf16.mxu0 0
  %1211 = vmatpush1.bf16.msra.mxu0 %v279
  %1212 = vmatprep.subr.bf16.mxu0 0
  %1213 = vmatpush1.bf16.msra.mxu0 %v280
  %1214 = vmatprep.subr.bf16.mxu0 0
  %1215 = vmatpush1.bf16.msra.mxu0 %v281
  %1216 = vmatprep.subr.bf16.mxu0 0
  %1217 = vmatpush1.bf16.msra.mxu0 %v282
  %1218 = vmatprep.subr.bf16.mxu0 0
  %1219 = vmatpush1.bf16.msra.mxu0 %v283
  %1220 = vmatprep.subr.bf16.mxu0 0
  %1221 = vmatpush1.bf16.msra.mxu0 %v284
  %1222 = vmatprep.mubr.bf16.mxu0 %v1139
  %1223 = vmatmul.mubr.bf16.gmra.mrb[0].mxu0 %v1138
  %v1224 = vpop.f32.mrb[0].mxu0
  %v1225 = vadd.f32 0.0, %v1224
  %v1226 = vpop.f32.mrb[0].mxu0
  %v1227 = vpop.f32.mrb[0].mxu0
  %v1228 = vadd.f32 0.0, %v1227
  %v1229 = vpop.f32.mrb[0].mxu0
  %1230 = vmatprep.mubr.bf16.mxu0 %v1141
  %1231 = vmatmul.mubr.bf16.gmra.mrb[0].mxu0 %v1140
  %v1232 = vpop.f32.mrb[0].mxu0
  %v1233 = vadd.f32 0.0, %v1232
  %v1234 = vpop.f32.mrb[0].mxu0
  %v1235 = vpop.f32.mrb[0].mxu0
  %v1236 = vadd.f32 0.0, %v1235
  %v1237 = vpop.f32.mrb[0].mxu0
  %1238 = vmatprep.mubr.bf16.mxu0 %v1143
  %1239 = vmatmul.mubr.bf16.gmra.mrb[0].mxu0 %v1142
  %v1240 = vpop.f32.mrb[0].mxu0
  %v1241 = vadd.f32 0.0, %v1240
  %v1242 = vpop.f32.mrb[0].mxu0
  %v1243 = vpop.f32.mrb[0].mxu0
  %v1244 = vadd.f32 0.0, %v1243
  %v1245 = vpop.f32.mrb[0].mxu0
  %1246 = vmatprep.mubr.bf16.mxu0 %v1145
  %1247 = vmatmul.mubr.bf16.gmra.mrb[0].mxu0 %v1144
  %v1248 = vpop.f32.mrb[0].mxu0
  %v1249 = vadd.f32 0.0, %v1248
  %v1250 = vpop.f32.mrb[0].mxu0
  %v1251 = vpop.f32.mrb[0].mxu0
  %v1252 = vadd.f32 0.0, %v1251
  %v1253 = vpop.f32.mrb[0].mxu0
  %1254 = vmatprep.mubr.bf16.mxu0 %v1147
  %1255 = vmatmul.mubr.bf16.gmra.mrb[0].mxu0 %v1146
  %v1256 = vpop.f32.mrb[0].mxu0
  %v1257 = vadd.f32 0.0, %v1256
  %v1258 = vpop.f32.mrb[0].mxu0
  %v1259 = vpop.f32.mrb[0].mxu0
  %v1260 = vadd.f32 0.0, %v1259
  %v1261 = vpop.f32.mrb[0].mxu0
  %1262 = vmatprep.mubr.bf16.mxu0 %v1149
  %1263 = vmatmul.mubr.bf16.gmra.mrb[0].mxu0 %v1148
  %v1264 = vpop.f32.mrb[0].mxu0
  %v1265 = vadd.f32 0.0, %v1264
  %v1266 = vpop.f32.mrb[0].mxu0
  %v1267 = vpop.f32.mrb[0].mxu0
  %v1268 = vadd.f32 0.0, %v1267
  %v1269 = vpop.f32.mrb[0].mxu0
  %1270 = vmatprep.mubr.bf16.mxu0 %v1151
  %1271 = vmatmul.mubr.bf16.gmra.mrb[0].mxu0 %v1150
  %v1272 = vpop.f32.mrb[0].mxu0
  %v1273 = vadd.f32 0.0, %v1272
  %v1274 = vpop.f32.mrb[0].mxu0
  %v1275 = vpop.f32.mrb[0].mxu0
  %v1276 = vadd.f32 0.0, %v1275
  %v1277 = vpop.f32.mrb[0].mxu0
  %1278 = vmatprep.mubr.bf16.mxu0 %v1153
  %1279 = vmatmul.mubr.bf16.gmra.mrb[0].mxu0 %v1152
  %v1280 = vpop.f32.mrb[0].mxu0
  %v1281 = vadd.f32 0.0, %v1280
  %v1282 = vpop.f32.mrb[0].mxu0
  %v1283 = vpop.f32.mrb[0].mxu0
  %v1284 = vadd.f32 0.0, %v1283
  %v1285 = vpop.f32.mrb[0].mxu0
  %1286 = vmatprep.mubr.bf16.mxu0 %v1155
  %1287 = vmatmul.mubr.bf16.gmra.mrb[0].mxu0 %v1154
  %v1288 = vpop.f32.mrb[0].mxu0
  %v1289 = vadd.f32 0.0, %v1288
  %v1290 = vpop.f32.mrb[0].mxu0
  %v1291 = vpop.f32.mrb[0].mxu0
  %v1292 = vadd.f32 0.0, %v1291
  %v1293 = vpop.f32.mrb[0].mxu0
  %1294 = vmatprep.mubr.bf16.mxu0 %v1157
  %1295 = vmatmul.mubr.bf16.gmra.mrb[0].mxu0 %v1156
  %v1296 = vpop.f32.mrb[0].mxu0
  %v1297 = vadd.f32 0.0, %v1296
  %v1298 = vpop.f32.mrb[0].mxu0
  %v1299 = vpop.f32.mrb[0].mxu0
  %v1300 = vadd.f32 0.0, %v1299
  %v1301 = vpop.f32.mrb[0].mxu0
  %1302 = vmatprep.mubr.bf16.mxu0 %v1159
  %1303 = vmatmul.mubr.bf16.gmra.mrb[0].mxu0 %v1158
  %v1304 = vpop.f32.mrb[0].mxu0
  %v1305 = vadd.f32 0.0, %v1304
  %v1306 = vpop.f32.mrb[0].mxu0
  %v1307 = vpop.f32.mrb[0].mxu0
  %v1308 = vadd.f32 0.0, %v1307
  %v1309 = vpop.f32.mrb[0].mxu0
  %1310 = vmatprep.mubr.bf16.mxu0 %v1161
  %1311 = vmatmul.mubr.bf16.gmra.mrb[0].mxu0 %v1160
  %v1312 = vpop.f32.mrb[0].mxu0
  %v1313 = vadd.f32 0.0, %v1312
  %v1314 = vpop.f32.mrb[0].mxu0
  %v1315 = vpop.f32.mrb[0].mxu0
  %v1316 = vadd.f32 0.0, %v1315
  %v1317 = vpop.f32.mrb[0].mxu0
  %1318 = vmatprep.mubr.bf16.mxu0 %v1163
  %1319 = vmatmul.mubr.bf16.gmra.mrb[0].mxu0 %v1162
  %v1320 = vpop.f32.mrb[0].mxu0
  %v1321 = vadd.f32 0.0, %v1320
  %v1322 = vpop.f32.mrb[0].mxu0
  %v1323 = vpop.f32.mrb[0].mxu0
  %v1324 = vpop.f32.mrb[0].mxu0
  %1325 = vdwg.mxu0
  %v1326 = vmax.f32 %v937, %v1225
  %v1327 = vmax.f32 %v940, %v1228
  %v1328 = vmax.f32 %v945, %v1233
  %v1329 = vmax.f32 %v948, %v1236
  %v1330 = vmax.f32 %v953, %v1241
  %v1331 = vmax.f32 %v956, %v1244
  %v1332 = vmax.f32 %v961, %v1249
  %v1333 = vmax.f32 %v964, %v1252
  %v1334 = vmax.f32 %v969, %v1257
  %v1335 = vmax.f32 %v972, %v1260
  %v1336 = vmax.f32 %v977, %v1265
  %v1337 = vmax.f32 %v980, %v1268
  %v1338 = vmax.f32 %v985, %v1273
  %v1339 = vmax.f32 %v988, %v1276
  %v1340 = vmax.f32 %v993, %v1281
  %v1341 = vmax.f32 %v996, %v1284
  %v1342 = vmax.f32 %v1001, %v1289
  %v1343 = vmax.f32 %v1004, %v1292
  %v1344 = vmax.f32 %v1009, %v1297
  %v1345 = vmax.f32 %v1012, %v1300
  %v1346 = vmax.f32 %v1017, %v1305
  %v1347 = vmax.f32 %v1020, %v1308
  %v1348 = vmax.f32 %v1025, %v1313
  %v1349 = vmax.f32 %v1028, %v1316
  %v1350 = vmax.f32 %v1033, %v1321
  %v1351 = vmax.f32 %v725, %v1326
  %v1352 = vmax.f32 %v726, %v1327
  %v1353 = vmax.f32 %v727, %v1328
  %v1354 = vmax.f32 %v728, %v1329
  %v1355 = vmax.f32 %v729, %v1330
  %v1356 = vmax.f32 %v730, %v1331
  %v1357 = vmax.f32 %v731, %v1332
  %v1358 = vmax.f32 %v732, %v1333
  %v1359 = vmax.f32 %v733, %v1334
  %v1360 = vmax.f32 %v734, %v1335
  %v1361 = vmax.f32 %v735, %v1336
  %v1362 = vmax.f32 %v736, %v1337
  %v1363 = vmax.f32 %v737, %v1338
  %v1364 = vmax.f32 %v738, %v1339
  %v1365 = vmax.f32 %v739, %v1340
  %v1366 = vmax.f32 %v740, %v1341
  %v1367 = vmax.f32 %v741, %v1342
  %v1368 = vmax.f32 %v742, %v1343
  %v1369 = vmax.f32 %v743, %v1344
  %v1370 = vmax.f32 %v744, %v1345
  %v1371 = vmax.f32 %v745, %v1346
  %v1372 = vmax.f32 %v746, %v1347
  %v1373 = vmax.f32 %v747, %v1348
  %v1374 = vmax.f32 %v748, %v1349
  %v1375 = vmax.f32 %v749, %v1350
  %v1376 = vmax.f32 %v1351, 0.0
  %v1377 = vmax.f32 %v1352, 0.0
  %v1378 = vmax.f32 %v1353, 0.0
  %v1379 = vmax.f32 %v1354, 0.0
  %v1380 = vmax.f32 %v1355, 0.0
  %v1381 = vmax.f32 %v1356, 0.0
  %v1382 = vmax.f32 %v1357, 0.0
  %v1383 = vmax.f32 %v1358, 0.0
  %v1384 = vmax.f32 %v1359, 0.0
  %v1385 = vmax.f32 %v1360, 0.0
  %v1386 = vmax.f32 %v1361, 0.0
  %v1387 = vmax.f32 %v1362, 0.0
  %v1388 = vmax.f32 %v1363, 0.0
  %v1389 = vmax.f32 %v1364, 0.0
  %v1390 = vmax.f32 %v1365, 0.0
  %v1391 = vmax.f32 %v1366, 0.0
  %v1392 = vmax.f32 %v1367, 0.0
  %v1393 = vmax.f32 %v1368, 0.0
  %v1394 = vmax.f32 %v1369, 0.0
  %v1395 = vmax.f32 %v1370, 0.0
  %v1396 = vmax.f32 %v1371, 0.0
  %v1397 = vmax.f32 %v1372, 0.0
  %v1398 = vmax.f32 %v1373, 0.0
  %v1399 = vmax.f32 %v1374, 0.0
  %v1400 = vmax.f32 %v1375, 0.0
  %1401 = vst [vmem:[%s5] sm:$0xff] %v1376
  %1402 = vst [vmem:[%s5 + $0x8] sm:$0xff] %v1377
  %1403 = vst [vmem:[%s5 + $0x10] sm:$0xff] %v1378
  %1404 = vst [vmem:[%s5 + $0x18] sm:$0xff] %v1379
  %1405 = vst [vmem:[%s5 + $0x20] sm:$0xff] %v1380
  %1406 = vst [vmem:[%s5 + $0x28] sm:$0xff] %v1381
  %1407 = vst [vmem:[%s5 + $0x30] sm:$0xff] %v1382
  %1408 = vst [vmem:[%s5 + $0x38] sm:$0xff] %v1383
  %1409 = vst [vmem:[%s5 + $0x40] sm:$0xff] %v1384
  %1410 = vst [vmem:[%s5 + $0x48] sm:$0xff] %v1385
  %1411 = vst [vmem:[%s5 + $0x50] sm:$0xff] %v1386
  %1412 = vst [vmem:[%s5 + $0x58] sm:$0xff] %v1387
  %1413 = vst [vmem:[%s5 + $0x60] sm:$0xff] %v1388
  %1414 = vst [vmem:[%s5 + $0x68] sm:$0xff] %v1389
  %1415 = vst [vmem:[%s5 + $0x70] sm:$0xff] %v1390
  %1416 = vst [vmem:[%s5 + $0x78] sm:$0xff] %v1391
  %1417 = vst [vmem:[%s5 + $0x80] sm:$0xff] %v1392
  %1418 = vst [vmem:[%s5 + $0x88] sm:$0xff] %v1393
  %1419 = vst [vmem:[%s5 + $0x90] sm:$0xff] %v1394
  %1420 = vst [vmem:[%s5 + $0x98] sm:$0xff] %v1395
  %1421 = vst [vmem:[%s5 + $0xa0] sm:$0xff] %v1396
  %1422 = vst [vmem:[%s5 + $0xa8] sm:$0xff] %v1397
  %1423 = vst [vmem:[%s5 + $0xb0] sm:$0xff] %v1398
  %1424 = vst [vmem:[%s5 + $0xb8] sm:$0xff] %v1399
  %1425 = vst [vmem:[%s5 + $0xc0] sm:$0xff] %v1400
  // Predicated region
  $region22: #{reid_net_forward.2} parent=0 // pred_check
    _
  $region23: #{reid_net_forward.2} parent=0 // pred_check_branch
    %1427 = sbr.rel (0) target = $region25
  $region24: #{reid_net_forward.2} parent=0 // pred_region
    _
  $region25: #{reid_net_forward.2} parent=0 // pred_fallthru
    _
  // Predicated region
  $region26: #{reid_net_forward.2} parent=0 // pred_check
    _
  $region27: #{reid_net_forward.2} parent=0 // pred_check_branch
    %1429 = sbr.rel (0) target = $region29
  $region28: #{reid_net_forward.2} parent=0 // pred_region
    _
  $region29: #{reid_net_forward.2} parent=0 // pred_fallthru
    _

// kernel: reid_net_forward.3
$region0: #{reid_net_forward.3}
  #allocation0 [shape = 'u32[]', space=smem, size = 0x4, offset = 0x4, fixed_abs, tag = 'smem constant byte address 0x4 - core index']
  #allocation1 [shape = 'u32[144,128]{1,0:T(1,128)}', space=vmem, size = 0x12000, scoped, tag = 'internal scratch']
  %s0 = inlined_call_operand.vmem [shape: bf16[72,512], index: 0, kind: input, shape index: {}]
  %s1 = inlined_call_operand.vmem [shape: bf16[72,512], index: 1, kind: input, shape index: {}]
  %s2 = inlined_call_operand.vmem [shape: bf16[72,512], index: 2, kind: input, shape index: {}]
  %s3 = inlined_call_operand.vmem [shape: bf16[72,512], index: 3, kind: input, shape index: {}]
  %s4 = inlined_call_operand.vmem [shape: bf16[512,128], index: 4, kind: input, shape index: {}]
  %s5 = inlined_call_operand.vmem [shape: bf16[1152,128], index: 5, kind: input, shape index: {}]
  %s6 = inlined_call_operand.vmem [shape: bf16[128,128], index: 6, kind: input, shape index: {}]
  %s7 = inlined_call_operand.vmem [shape: bf16[128,128], index: 7, kind: input, shape index: {}]
  %s8 = inlined_call_operand.vmem [shape: f32[1,128], index: 8, kind: input, shape index: {}]
  %s9 = inlined_call_operand.vmem [shape: f32[1,128], index: 9, kind: input, shape index: {}]
  %s10 = inlined_call_operand.vmem [shape: f32[1,128], index: 10, kind: input, shape index: {}]
  %s11 = inlined_call_operand.vmem [shape: f32[8,128], index: 11, kind: output, shape index: {}]
  %s12 = sld [smem:[#allocation0]]
  $region54: #{reid_net_forward.3} parent=0
    _
  %s14 = ssub.s32 1, %s12
  %s15 = scalar_select 0, %s14, %s12
  // Predicated region
  $region2: #{reid_net_forward.3} parent=0 // pred_check
    _
  $region3: #{reid_net_forward.3} parent=0 // pred_check_branch
    %17 = sbr.rel (0) target = $region5
  $region4: #{reid_net_forward.3} parent=0 // pred_region
    _
  $region5: #{reid_net_forward.3} parent=0 // pred_fallthru
    _
  // Predicated region
  $region6: #{reid_net_forward.3} parent=0 // pred_check
    _
  $region7: #{reid_net_forward.3} parent=0 // pred_check_branch
    %19 = sbr.rel (0) target = $region9
  $region8: #{reid_net_forward.3} parent=0 // pred_region
    _
  $region9: #{reid_net_forward.3} parent=0 // pred_fallthru
    _
  // Predicated region
  $region10: #{reid_net_forward.3} parent=0 // pred_check
    _
  $region11: #{reid_net_forward.3} parent=0 // pred_check_branch
    %21 = sbr.rel (0) target = $region13
  $region12: #{reid_net_forward.3} parent=0 // pred_region
    _
  $region13: #{reid_net_forward.3} parent=0 // pred_fallthru
    _
  // Predicated region
  $region14: #{reid_net_forward.3} parent=0 // pred_check
    _
  $region15: #{reid_net_forward.3} parent=0 // pred_check_branch
    %23 = sbr.rel (0) target = $region17
  $region16: #{reid_net_forward.3} parent=0 // pred_region
    _
  $region17: #{reid_net_forward.3} parent=0 // pred_fallthru
    _
  // Predicated region
  $region18: #{reid_net_forward.3} parent=0 // pred_check
    _
  $region19: #{reid_net_forward.3} parent=0 // pred_check_branch
    %25 = sbr.rel (0) target = $region21
  $region20: #{reid_net_forward.3} parent=0 // pred_region
    _
  $region21: #{reid_net_forward.3} parent=0 // pred_fallthru
    _
  // Predicated region
  $region22: #{reid_net_forward.3} parent=0 // pred_check
    _
  $region23: #{reid_net_forward.3} parent=0 // pred_check_branch
    %27 = sbr.rel (0) target = $region25
  $region24: #{reid_net_forward.3} parent=0 // pred_region
    _
  $region25: #{reid_net_forward.3} parent=0 // pred_fallthru
    _
  // Predicated region
  $region26: #{reid_net_forward.3} parent=0 // pred_check
    _
  $region27: #{reid_net_forward.3} parent=0 // pred_check_branch
    %29 = sbr.rel (0) target = $region29
  $region28: #{reid_net_forward.3} parent=0 // pred_region
    _
  $region29: #{reid_net_forward.3} parent=0 // pred_fallthru
    _
  // Predicated region
  $region30: #{reid_net_forward.3} parent=0 // pred_check
    _
  $region31: #{reid_net_forward.3} parent=0 // pred_check_branch
    %31 = sbr.rel (0) target = $region33
  $region32: #{reid_net_forward.3} parent=0 // pred_region
    _
  $region33: #{reid_net_forward.3} parent=0 // pred_fallthru
    _
  // Predicated region
  $region34: #{reid_net_forward.3} parent=0 // pred_check
    _
  $region35: #{reid_net_forward.3} parent=0 // pred_check_branch
    %33 = sbr.rel (0) target = $region37
  $region36: #{reid_net_forward.3} parent=0 // pred_region
    _
  $region37: #{reid_net_forward.3} parent=0 // pred_fallthru
    _
  // Predicated region
  $region38: #{reid_net_forward.3} parent=0 // pred_check
    _
  $region39: #{reid_net_forward.3} parent=0 // pred_check_branch
    %35 = sbr.rel (0) target = $region41
  $region40: #{reid_net_forward.3} parent=0 // pred_region
    _
  $region41: #{reid_net_forward.3} parent=0 // pred_fallthru
    _
  // Predicated region
  $region42: #{reid_net_forward.3} parent=0 // pred_check
    _
  $region43: #{reid_net_forward.3} parent=0 // pred_check_branch
    %37 = sbr.rel (0) target = $region45
  $region44: #{reid_net_forward.3} parent=0 // pred_region
    _
  $region45: #{reid_net_forward.3} parent=0 // pred_fallthru
    _
  %v39 = vld [vmem:[%s4] sm:$0xf]
  %v40 = vld [vmem:[%s4 + $0x4] sm:$0xf]
  %v41 = vld [vmem:[%s4 + $0x8] sm:$0xf]
  %v42 = vld [vmem:[%s4 + $0xc] sm:$0xf]
  %v43 = vld [vmem:[%s4 + $0x10] sm:$0xf]
  %v44 = vld [vmem:[%s4 + $0x14] sm:$0xf]
  %v45 = vld [vmem:[%s4 + $0x18] sm:$0xf]
  %v46 = vld [vmem:[%s4 + $0x1c] sm:$0xf]
  %v47 = vld [vmem:[%s4 + $0x20] sm:$0xf]
  %v48 = vld [vmem:[%s4 + $0x24] sm:$0xf]
  %v49 = vld [vmem:[%s4 + $0x28] sm:$0xf]
  %v50 = vld [vmem:[%s4 + $0x2c] sm:$0xf]
  %v51 = vld [vmem:[%s4 + $0x30] sm:$0xf]
  %v52 = vld [vmem:[%s4 + $0x34] sm:$0xf]
  %v53 = vld [vmem:[%s4 + $0x38] sm:$0xf]
  %v54 = vld [vmem:[%s4 + $0x3c] sm:$0xf]
  %v55 = vld [vmem:[%s4 + $0x40] sm:$0xf]
  %v56 = vld [vmem:[%s4 + $0x44] sm:$0xf]
  %v57 = vld [vmem:[%s4 + $0x48] sm:$0xf]
  %v58 = vld [vmem:[%s4 + $0x4c] sm:$0xf]
  %v59 = vld [vmem:[%s4 + $0x50] sm:$0xf]
  %v60 = vld [vmem:[%s4 + $0x54] sm:$0xf]
  %v61 = vld [vmem:[%s4 + $0x58] sm:$0xf]
  %v62 = vld [vmem:[%s4 + $0x5c] sm:$0xf]
  %v63 = vld [vmem:[%s4 + $0x60] sm:$0xf]
  %v64 = vld [vmem:[%s4 + $0x64] sm:$0xf]
  %v65 = vld [vmem:[%s4 + $0x68] sm:$0xf]
  %v66 = vld [vmem:[%s4 + $0x6c] sm:$0xf]
  %v67 = vld [vmem:[%s4 + $0x70] sm:$0xf]
  %v68 = vld [vmem:[%s4 + $0x74] sm:$0xf]
  %v69 = vld [vmem:[%s4 + $0x78] sm:$0xf]
  %v70 = vld [vmem:[%s4 + $0x7c] sm:$0xf]
  %v71 = vld [vmem:[%s4 + $0x80] sm:$0xf]
  %v72 = vld [vmem:[%s4 + $0x84] sm:$0xf]
  %v73 = vld [vmem:[%s4 + $0x88] sm:$0xf]
  %v74 = vld [vmem:[%s4 + $0x8c] sm:$0xf]
  %v75 = vld [vmem:[%s4 + $0x90] sm:$0xf]
  %v76 = vld [vmem:[%s4 + $0x94] sm:$0xf]
  %v77 = vld [vmem:[%s4 + $0x98] sm:$0xf]
  %v78 = vld [vmem:[%s4 + $0x9c] sm:$0xf]
  %v79 = vld [vmem:[%s4 + $0xa0] sm:$0xf]
  %v80 = vld [vmem:[%s4 + $0xa4] sm:$0xf]
  %v81 = vld [vmem:[%s4 + $0xa8] sm:$0xf]
  %v82 = vld [vmem:[%s4 + $0xac] sm:$0xf]
  %v83 = vld [vmem:[%s4 + $0xb0] sm:$0xf]
  %v84 = vld [vmem:[%s4 + $0xb4] sm:$0xf]
  %v85 = vld [vmem:[%s4 + $0xb8] sm:$0xf]
  %v86 = vld [vmem:[%s4 + $0xbc] sm:$0xf]
  %v87 = vld [vmem:[%s4 + $0xc0] sm:$0xf]
  %v88 = vld [vmem:[%s4 + $0xc4] sm:$0xf]
  %v89 = vld [vmem:[%s4 + $0xc8] sm:$0xf]
  %v90 = vld [vmem:[%s4 + $0xcc] sm:$0xf]
  %v91 = vld [vmem:[%s4 + $0xd0] sm:$0xf]
  %v92 = vld [vmem:[%s4 + $0xd4] sm:$0xf]
  %v93 = vld [vmem:[%s4 + $0xd8] sm:$0xf]
  %v94 = vld [vmem:[%s4 + $0xdc] sm:$0xf]
  %v95 = vld [vmem:[%s4 + $0xe0] sm:$0xf]
  %v96 = vld [vmem:[%s4 + $0xe4] sm:$0xf]
  %v97 = vld [vmem:[%s4 + $0xe8] sm:$0xf]
  %v98 = vld [vmem:[%s4 + $0xec] sm:$0xf]
  %v99 = vld [vmem:[%s4 + $0xf0] sm:$0xf]
  %v100 = vld [vmem:[%s4 + $0xf4] sm:$0xf]
  %v101 = vld [vmem:[%s4 + $0xf8] sm:$0xf]
  %v102 = vld [vmem:[%s4 + $0xfc] sm:$0xf]
  %v103 = vld [vmem:[%s0] sm:$0xff]
  %v104 = vld [vmem:[%s0 + $0x8] sm:$0xff]
  %v105 = vld [vmem:[%s0 + $0x10] sm:$0xff]
  %v106 = vld [vmem:[%s0 + $0x18] sm:$0xff]
  %v107 = vld [vmem:[%s0 + $0x20] sm:$0xff]
  %v108 = vld [vmem:[%s0 + $0x28] sm:$0xff]
  %v109 = vld [vmem:[%s0 + $0x30] sm:$0xff]
  %v110 = vld [vmem:[%s0 + $0x38] sm:$0xff]
  %v111 = vld [vmem:[%s0 + $0x40] sm:$0xff]
  %v112 = vld [vmem:[%s0 + $0x48] sm:$0xff]
  %v113 = vld [vmem:[%s0 + $0x50] sm:$0xff]
  %v114 = vld [vmem:[%s0 + $0x58] sm:$0xff]
  %v115 = vld [vmem:[%s0 + $0x60] sm:$0xff]
  %v116 = vld [vmem:[%s0 + $0x68] sm:$0xff]
  %v117 = vld [vmem:[%s0 + $0x70] sm:$0xff]
  %v118 = vld [vmem:[%s0 + $0x78] sm:$0xff]
  %v119 = vld [vmem:[%s0 + $0x80] sm:$0xff]
  %v120 = vld [vmem:[%s0 + $0x88] sm:$0xff]
  %v139 = vunpack.c.l.b16 %v103
  %v140 = vunpack.c.h.b16 %v103
  %v141 = vunpack.c.l.b16 %v104
  %v142 = vunpack.c.h.b16 %v104
  %v143 = vunpack.c.l.b16 %v105
  %v144 = vunpack.c.h.b16 %v105
  %v145 = vunpack.c.l.b16 %v106
  %v146 = vunpack.c.h.b16 %v106
  %v147 = vunpack.c.l.b16 %v107
  %v148 = vunpack.c.h.b16 %v107
  %v149 = vunpack.c.l.b16 %v108
  %v150 = vunpack.c.h.b16 %v108
  %v151 = vunpack.c.l.b16 %v109
  %v152 = vunpack.c.h.b16 %v109
  %v153 = vunpack.c.l.b16 %v110
  %v154 = vunpack.c.h.b16 %v110
  %v155 = vunpack.c.l.b16 %v111
  %v156 = vunpack.c.h.b16 %v111
  %v157 = vunpack.c.l.b16 %v112
  %v158 = vunpack.c.h.b16 %v112
  %v159 = vunpack.c.l.b16 %v113
  %v160 = vunpack.c.h.b16 %v113
  %v161 = vunpack.c.l.b16 %v114
  %v162 = vunpack.c.h.b16 %v114
  %v163 = vunpack.c.l.b16 %v115
  %v164 = vunpack.c.h.b16 %v115
  %v165 = vunpack.c.l.b16 %v116
  %v166 = vunpack.c.h.b16 %v116
  %v167 = vunpack.c.l.b16 %v117
  %v168 = vunpack.c.h.b16 %v117
  %v169 = vunpack.c.l.b16 %v118
  %v170 = vunpack.c.h.b16 %v118
  %v171 = vunpack.c.l.b16 %v119
  %v172 = vunpack.c.h.b16 %v119
  %v173 = vunpack.c.l.b16 %v120
  %v174 = vunpack.c.h.b16 %v120
  %v175 = vpack.c.b16 %v143, %v139
  %v176 = vpack.c.b16 %v144, %v140
  %v177 = vpack.c.b16 %v145, %v141
  %v178 = vpack.c.b16 %v146, %v142
  %v179 = vpack.c.b16 %v151, %v147
  %v180 = vpack.c.b16 %v152, %v148
  %v181 = vpack.c.b16 %v153, %v149
  %v182 = vpack.c.b16 %v154, %v150
  %v183 = vpack.c.b16 %v159, %v155
  %v184 = vpack.c.b16 %v160, %v156
  %v185 = vpack.c.b16 %v161, %v157
  %v186 = vpack.c.b16 %v162, %v158
  %v187 = vpack.c.b16 %v167, %v163
  %v188 = vpack.c.b16 %v168, %v164
  %v189 = vpack.c.b16 %v169, %v165
  %v190 = vpack.c.b16 %v170, %v166
  %v191 = vpack.c.b16 %v171, %v171
  %v192 = vpack.c.b16 %v172, %v172
  %v193 = vpack.c.b16 %v173, %v173
  %v194 = vpack.c.b16 %v174, %v174
  %v279 = vunpack.c.l.b16 %v39
  %v280 = vunpack.c.l.b16 %v40
  %v281 = vunpack.c.l.b16 %v41
  %v282 = vunpack.c.l.b16 %v42
  %v283 = vunpack.c.l.b16 %v43
  %v284 = vunpack.c.l.b16 %v44
  %v285 = vunpack.c.l.b16 %v45
  %v286 = vunpack.c.l.b16 %v46
  %v287 = vunpack.c.l.b16 %v47
  %v288 = vunpack.c.l.b16 %v48
  %v289 = vunpack.c.l.b16 %v49
  %v290 = vunpack.c.l.b16 %v50
  %v291 = vunpack.c.l.b16 %v51
  %v292 = vunpack.c.l.b16 %v52
  %v293 = vunpack.c.l.b16 %v53
  %v294 = vunpack.c.l.b16 %v54
  %v295 = vunpack.c.l.b16 %v55
  %v296 = vunpack.c.l.b16 %v56
  %v297 = vunpack.c.l.b16 %v57
  %v298 = vunpack.c.l.b16 %v58
  %v299 = vunpack.c.l.b16 %v59
  %v300 = vunpack.c.l.b16 %v60
  %v301 = vunpack.c.l.b16 %v61
  %v302 = vunpack.c.l.b16 %v62
  %v303 = vunpack.c.l.b16 %v63
  %v304 = vunpack.c.l.b16 %v64
  %v305 = vunpack.c.l.b16 %v65
  %v306 = vunpack.c.l.b16 %v66
  %v307 = vunpack.c.l.b16 %v67
  %v308 = vunpack.c.l.b16 %v68
  %v309 = vunpack.c.l.b16 %v69
  %v310 = vunpack.c.l.b16 %v70
  %v311 = vunpack.c.l.b16 %v71
  %v312 = vunpack.c.l.b16 %v72
  %v313 = vunpack.c.l.b16 %v73
  %v314 = vunpack.c.l.b16 %v74
  %v315 = vunpack.c.l.b16 %v75
  %v316 = vunpack.c.l.b16 %v76
  %v317 = vunpack.c.l.b16 %v77
  %v318 = vunpack.c.l.b16 %v78
  %v319 = vunpack.c.l.b16 %v79
  %v320 = vunpack.c.l.b16 %v80
  %v321 = vunpack.c.l.b16 %v81
  %v322 = vunpack.c.l.b16 %v82
  %v323 = vunpack.c.l.b16 %v83
  %v324 = vunpack.c.l.b16 %v84
  %v325 = vunpack.c.l.b16 %v85
  %v326 = vunpack.c.l.b16 %v86
  %v327 = vunpack.c.l.b16 %v87
  %v328 = vunpack.c.l.b16 %v88
  %v329 = vunpack.c.l.b16 %v89
  %v330 = vunpack.c.l.b16 %v90
  %v331 = vunpack.c.l.b16 %v91
  %v332 = vunpack.c.l.b16 %v92
  %v333 = vunpack.c.l.b16 %v93
  %v334 = vunpack.c.l.b16 %v94
  %v335 = vunpack.c.l.b16 %v95
  %v336 = vunpack.c.l.b16 %v96
  %v337 = vunpack.c.l.b16 %v97
  %v338 = vunpack.c.l.b16 %v98
  %v339 = vunpack.c.l.b16 %v99
  %v340 = vunpack.c.l.b16 %v100
  %v341 = vunpack.c.l.b16 %v101
  %v342 = vunpack.c.l.b16 %v102
  %v343 = vpack.c.b16 %v280, %v279
  %v344 = vpack.c.b16 %v282, %v281
  %v345 = vpack.c.b16 %v284, %v283
  %v346 = vpack.c.b16 %v286, %v285
  %v347 = vpack.c.b16 %v288, %v287
  %v348 = vpack.c.b16 %v290, %v289
  %v349 = vpack.c.b16 %v292, %v291
  %v350 = vpack.c.b16 %v294, %v293
  %v351 = vpack.c.b16 %v296, %v295
  %v352 = vpack.c.b16 %v298, %v297
  %v353 = vpack.c.b16 %v300, %v299
  %v354 = vpack.c.b16 %v302, %v301
  %v355 = vpack.c.b16 %v304, %v303
  %v356 = vpack.c.b16 %v306, %v305
  %v357 = vpack.c.b16 %v308, %v307
  %v358 = vpack.c.b16 %v310, %v309
  %v359 = vpack.c.b16 %v312, %v311
  %v360 = vpack.c.b16 %v314, %v313
  %v361 = vpack.c.b16 %v316, %v315
  %v362 = vpack.c.b16 %v318, %v317
  %v363 = vpack.c.b16 %v320, %v319
  %v364 = vpack.c.b16 %v322, %v321
  %v365 = vpack.c.b16 %v324, %v323
  %v366 = vpack.c.b16 %v326, %v325
  %v367 = vpack.c.b16 %v328, %v327
  %v368 = vpack.c.b16 %v330, %v329
  %v369 = vpack.c.b16 %v332, %v331
  %v370 = vpack.c.b16 %v334, %v333
  %v371 = vpack.c.b16 %v336, %v335
  %v372 = vpack.c.b16 %v338, %v337
  %v373 = vpack.c.b16 %v340, %v339
  %v374 = vpack.c.b16 %v342, %v341
  %407 = vmatprep.subr.bf16.mxu0 0
  %408 = vmatpush1.bf16.msra.mxu0 %v343
  %409 = vmatprep.subr.bf16.mxu0 0
  %410 = vmatpush1.bf16.msra.mxu0 %v344
  %411 = vmatprep.subr.bf16.mxu0 0
  %412 = vmatpush1.bf16.msra.mxu0 %v345
  %413 = vmatprep.subr.bf16.mxu0 0
  %414 = vmatpush1.bf16.msra.mxu0 %v346
  %415 = vmatprep.subr.bf16.mxu0 0
  %416 = vmatpush1.bf16.msra.mxu0 %v347
  %417 = vmatprep.subr.bf16.mxu0 0
  %418 = vmatpush1.bf16.msra.mxu0 %v348
  %419 = vmatprep.subr.bf16.mxu0 0
  %420 = vmatpush1.bf16.msra.mxu0 %v349
  %421 = vmatprep.subr.bf16.mxu0 0
  %422 = vmatpush1.bf16.msra.mxu0 %v350
  %423 = vmatprep.subr.bf16.mxu0 0
  %424 = vmatpush1.bf16.msra.mxu0 %v351
  %425 = vmatprep.subr.bf16.mxu0 0
  %426 = vmatpush1.bf16.msra.mxu0 %v352
  %427 = vmatprep.subr.bf16.mxu0 0
  %428 = vmatpush1.bf16.msra.mxu0 %v353
  %429 = vmatprep.subr.bf16.mxu0 0
  %430 = vmatpush1.bf16.msra.mxu0 %v354
  %431 = vmatprep.subr.bf16.mxu0 0
  %432 = vmatpush1.bf16.msra.mxu0 %v355
  %433 = vmatprep.subr.bf16.mxu0 0
  %434 = vmatpush1.bf16.msra.mxu0 %v356
  %435 = vmatprep.subr.bf16.mxu0 0
  %436 = vmatpush1.bf16.msra.mxu0 %v357
  %437 = vmatprep.subr.bf16.mxu0 0
  %438 = vmatpush1.bf16.msra.mxu0 %v358
  %439 = vmatprep.mubr.bf16.mxu0 %v176
  %440 = vmatmul.mubr.bf16.gmra.mrb[0].mxu0 %v175
  %v441 = vpop.f32.mrb[0].mxu0
  %v442 = vadd.f32 0.0, %v441
  %v443 = vpop.f32.mrb[0].mxu0
  %v444 = vpop.f32.mrb[0].mxu0
  %v445 = vadd.f32 0.0, %v444
  %v446 = vpop.f32.mrb[0].mxu0
  %447 = vmatprep.mubr.bf16.mxu0 %v180
  %448 = vmatmul.mubr.bf16.gmra.mrb[0].mxu0 %v179
  %v449 = vpop.f32.mrb[0].mxu0
  %v450 = vadd.f32 0.0, %v449
  %v451 = vpop.f32.mrb[0].mxu0
  %v452 = vpop.f32.mrb[0].mxu0
  %v453 = vadd.f32 0.0, %v452
  %v454 = vpop.f32.mrb[0].mxu0
  %455 = vmatprep.mubr.bf16.mxu0 %v184
  %456 = vmatmul.mubr.bf16.gmra.mrb[0].mxu0 %v183
  %v457 = vpop.f32.mrb[0].mxu0
  %v458 = vadd.f32 0.0, %v457
  %v459 = vpop.f32.mrb[0].mxu0
  %v460 = vpop.f32.mrb[0].mxu0
  %v461 = vadd.f32 0.0, %v460
  %v462 = vpop.f32.mrb[0].mxu0
  %463 = vmatprep.mubr.bf16.mxu0 %v188
  %464 = vmatmul.mubr.bf16.gmra.mrb[0].mxu0 %v187
  %v465 = vpop.f32.mrb[0].mxu0
  %v466 = vadd.f32 0.0, %v465
  %v467 = vpop.f32.mrb[0].mxu0
  %v468 = vpop.f32.mrb[0].mxu0
  %v469 = vadd.f32 0.0, %v468
  %v470 = vpop.f32.mrb[0].mxu0
  %471 = vmatprep.mubr.bf16.mxu0 %v192
  %472 = vmatmul.mubr.bf16.gmra.mrb[0].mxu0 %v191
  %v473 = vpop.f32.mrb[0].mxu0
  %v474 = vadd.f32 0.0, %v473
  %v475 = vpop.f32.mrb[0].mxu0
  %v476 = vpop.f32.mrb[0].mxu0
  %v477 = vpop.f32.mrb[0].mxu0
  %478 = vdwg.mxu0
  %479 = vmatprep.subr.bf16.mxu0 0
  %480 = vmatpush1.bf16.msra.mxu0 %v359
  %481 = vmatprep.subr.bf16.mxu0 0
  %482 = vmatpush1.bf16.msra.mxu0 %v360
  %483 = vmatprep.subr.bf16.mxu0 0
  %484 = vmatpush1.bf16.msra.mxu0 %v361
  %485 = vmatprep.subr.bf16.mxu0 0
  %486 = vmatpush1.bf16.msra.mxu0 %v362
  %487 = vmatprep.subr.bf16.mxu0 0
  %488 = vmatpush1.bf16.msra.mxu0 %v363
  %489 = vmatprep.subr.bf16.mxu0 0
  %490 = vmatpush1.bf16.msra.mxu0 %v364
  %491 = vmatprep.subr.bf16.mxu0 0
  %492 = vmatpush1.bf16.msra.mxu0 %v365
  %493 = vmatprep.subr.bf16.mxu0 0
  %494 = vmatpush1.bf16.msra.mxu0 %v366
  %495 = vmatprep.subr.bf16.mxu0 0
  %496 = vmatpush1.bf16.msra.mxu0 %v367
  %497 = vmatprep.subr.bf16.mxu0 0
  %498 = vmatpush1.bf16.msra.mxu0 %v368
  %499 = vmatprep.subr.bf16.mxu0 0
  %500 = vmatpush1.bf16.msra.mxu0 %v369
  %501 = vmatprep.subr.bf16.mxu0 0
  %502 = vmatpush1.bf16.msra.mxu0 %v370
  %503 = vmatprep.subr.bf16.mxu0 0
  %504 = vmatpush1.bf16.msra.mxu0 %v371
  %505 = vmatprep.subr.bf16.mxu0 0
  %506 = vmatpush1.bf16.msra.mxu0 %v372
  %507 = vmatprep.subr.bf16.mxu0 0
  %508 = vmatpush1.bf16.msra.mxu0 %v373
  %509 = vmatprep.subr.bf16.mxu0 0
  %510 = vmatpush1.bf16.msra.mxu0 %v374
  %511 = vmatprep.mubr.bf16.mxu0 %v178
  %512 = vmatmul.mubr.bf16.gmra.mrb[0].mxu0 %v177
  %v513 = vpop.f32.mrb[0].mxu0
  %v514 = vadd.f32 %v442, %v513
  %v515 = vpop.f32.mrb[0].mxu0
  %v516 = vpop.f32.mrb[0].mxu0
  %v517 = vadd.f32 %v445, %v516
  %v518 = vpop.f32.mrb[0].mxu0
  %519 = vmatprep.mubr.bf16.mxu0 %v182
  %520 = vmatmul.mubr.bf16.gmra.mrb[0].mxu0 %v181
  %v521 = vpop.f32.mrb[0].mxu0
  %v522 = vadd.f32 %v450, %v521
  %v523 = vpop.f32.mrb[0].mxu0
  %v524 = vpop.f32.mrb[0].mxu0
  %v525 = vadd.f32 %v453, %v524
  %v526 = vpop.f32.mrb[0].mxu0
  %527 = vmatprep.mubr.bf16.mxu0 %v186
  %528 = vmatmul.mubr.bf16.gmra.mrb[0].mxu0 %v185
  %v529 = vpop.f32.mrb[0].mxu0
  %v530 = vadd.f32 %v458, %v529
  %v531 = vpop.f32.mrb[0].mxu0
  %v532 = vpop.f32.mrb[0].mxu0
  %v533 = vadd.f32 %v461, %v532
  %v534 = vpop.f32.mrb[0].mxu0
  %535 = vmatprep.mubr.bf16.mxu0 %v190
  %536 = vmatmul.mubr.bf16.gmra.mrb[0].mxu0 %v189
  %v537 = vpop.f32.mrb[0].mxu0
  %v538 = vadd.f32 %v466, %v537
  %v539 = vpop.f32.mrb[0].mxu0
  %v540 = vpop.f32.mrb[0].mxu0
  %v541 = vadd.f32 %v469, %v540
  %v542 = vpop.f32.mrb[0].mxu0
  %543 = vmatprep.mubr.bf16.mxu0 %v194
  %544 = vmatmul.mubr.bf16.gmra.mrb[0].mxu0 %v193
  %v545 = vpop.f32.mrb[0].mxu0
  %v546 = vadd.f32 %v474, %v545
  %v547 = vpop.f32.mrb[0].mxu0
  %v548 = vpop.f32.mrb[0].mxu0
  %v549 = vpop.f32.mrb[0].mxu0
  %550 = vdwg.mxu0
  %v551 = vld [vmem:[%s1] sm:$0xff]
  %v552 = vld [vmem:[%s1 + $0x8] sm:$0xff]
  %v553 = vld [vmem:[%s1 + $0x10] sm:$0xff]
  %v554 = vld [vmem:[%s1 + $0x18] sm:$0xff]
  %v555 = vld [vmem:[%s1 + $0x20] sm:$0xff]
  %v556 = vld [vmem:[%s1 + $0x28] sm:$0xff]
  %v557 = vld [vmem:[%s1 + $0x30] sm:$0xff]
  %v558 = vld [vmem:[%s1 + $0x38] sm:$0xff]
  %v559 = vld [vmem:[%s1 + $0x40] sm:$0xff]
  %v560 = vld [vmem:[%s1 + $0x48] sm:$0xff]
  %v561 = vld [vmem:[%s1 + $0x50] sm:$0xff]
  %v562 = vld [vmem:[%s1 + $0x58] sm:$0xff]
  %v563 = vld [vmem:[%s1 + $0x60] sm:$0xff]
  %v564 = vld [vmem:[%s1 + $0x68] sm:$0xff]
  %v565 = vld [vmem:[%s1 + $0x70] sm:$0xff]
  %v566 = vld [vmem:[%s1 + $0x78] sm:$0xff]
  %v567 = vld [vmem:[%s1 + $0x80] sm:$0xff]
  %v568 = vld [vmem:[%s1 + $0x88] sm:$0xff]
  %v587 = vunpack.c.l.b16 %v551
  %v588 = vunpack.c.h.b16 %v551
  %v589 = vunpack.c.l.b16 %v552
  %v590 = vunpack.c.h.b16 %v552
  %v591 = vunpack.c.l.b16 %v553
  %v592 = vunpack.c.h.b16 %v553
  %v593 = vunpack.c.l.b16 %v554
  %v594 = vunpack.c.h.b16 %v554
  %v595 = vunpack.c.l.b16 %v555
  %v596 = vunpack.c.h.b16 %v555
  %v597 = vunpack.c.l.b16 %v556
  %v598 = vunpack.c.h.b16 %v556
  %v599 = vunpack.c.l.b16 %v557
  %v600 = vunpack.c.h.b16 %v557
  %v601 = vunpack.c.l.b16 %v558
  %v602 = vunpack.c.h.b16 %v558
  %v603 = vunpack.c.l.b16 %v559
  %v604 = vunpack.c.h.b16 %v559
  %v605 = vunpack.c.l.b16 %v560
  %v606 = vunpack.c.h.b16 %v560
  %v607 = vunpack.c.l.b16 %v561
  %v608 = vunpack.c.h.b16 %v561
  %v609 = vunpack.c.l.b16 %v562
  %v610 = vunpack.c.h.b16 %v562
  %v611 = vunpack.c.l.b16 %v563
  %v612 = vunpack.c.h.b16 %v563
  %v613 = vunpack.c.l.b16 %v564
  %v614 = vunpack.c.h.b16 %v564
  %v615 = vunpack.c.l.b16 %v565
  %v616 = vunpack.c.h.b16 %v565
  %v617 = vunpack.c.l.b16 %v566
  %v618 = vunpack.c.h.b16 %v566
  %v619 = vunpack.c.l.b16 %v567
  %v620 = vunpack.c.h.b16 %v567
  %v621 = vunpack.c.l.b16 %v568
  %v622 = vunpack.c.h.b16 %v568
  %v623 = vpack.c.b16 %v591, %v587
  %v624 = vpack.c.b16 %v592, %v588
  %v625 = vpack.c.b16 %v593, %v589
  %v626 = vpack.c.b16 %v594, %v590
  %v627 = vpack.c.b16 %v599, %v595
  %v628 = vpack.c.b16 %v600, %v596
  %v629 = vpack.c.b16 %v601, %v597
  %v630 = vpack.c.b16 %v602, %v598
  %v631 = vpack.c.b16 %v607, %v603
  %v632 = vpack.c.b16 %v608, %v604
  %v633 = vpack.c.b16 %v609, %v605
  %v634 = vpack.c.b16 %v610, %v606
  %v635 = vpack.c.b16 %v615, %v611
  %v636 = vpack.c.b16 %v616, %v612
  %v637 = vpack.c.b16 %v617, %v613
  %v638 = vpack.c.b16 %v618, %v614
  %v639 = vpack.c.b16 %v619, %v619
  %v640 = vpack.c.b16 %v620, %v620
  %v641 = vpack.c.b16 %v621, %v621
  %v642 = vpack.c.b16 %v622, %v622
  %663 = vmatprep.subr.bf16.mxu0 0
  %664 = vmatpush1.bf16.msra.mxu0 %v343
  %665 = vmatprep.subr.bf16.mxu0 0
  %666 = vmatpush1.bf16.msra.mxu0 %v344
  %667 = vmatprep.subr.bf16.mxu0 0
  %668 = vmatpush1.bf16.msra.mxu0 %v345
  %669 = vmatprep.subr.bf16.mxu0 0
  %670 = vmatpush1.bf16.msra.mxu0 %v346
  %671 = vmatprep.subr.bf16.mxu0 0
  %672 = vmatpush1.bf16.msra.mxu0 %v347
  %673 = vmatprep.subr.bf16.mxu0 0
  %674 = vmatpush1.bf16.msra.mxu0 %v348
  %675 = vmatprep.subr.bf16.mxu0 0
  %676 = vmatpush1.bf16.msra.mxu0 %v349
  %677 = vmatprep.subr.bf16.mxu0 0
  %678 = vmatpush1.bf16.msra.mxu0 %v350
  %679 = vmatprep.subr.bf16.mxu0 0
  %680 = vmatpush1.bf16.msra.mxu0 %v351
  %681 = vmatprep.subr.bf16.mxu0 0
  %682 = vmatpush1.bf16.msra.mxu0 %v352
  %683 = vmatprep.subr.bf16.mxu0 0
  %684 = vmatpush1.bf16.msra.mxu0 %v353
  %685 = vmatprep.subr.bf16.mxu0 0
  %686 = vmatpush1.bf16.msra.mxu0 %v354
  %687 = vmatprep.subr.bf16.mxu0 0
  %688 = vmatpush1.bf16.msra.mxu0 %v355
  %689 = vmatprep.subr.bf16.mxu0 0
  %690 = vmatpush1.bf16.msra.mxu0 %v356
  %691 = vmatprep.subr.bf16.mxu0 0
  %692 = vmatpush1.bf16.msra.mxu0 %v357
  %693 = vmatprep.subr.bf16.mxu0 0
  %694 = vmatpush1.bf16.msra.mxu0 %v358
  %695 = vmatprep.mubr.bf16.mxu0 %v624
  %696 = vmatmul.mubr.bf16.gmra.mrb[0].mxu0 %v623
  %v697 = vpop.f32.mrb[0].mxu0
  %v698 = vadd.f32 0.0, %v697
  %v699 = vpop.f32.mrb[0].mxu0
  %v700 = vpop.f32.mrb[0].mxu0
  %v701 = vadd.f32 0.0, %v700
  %v702 = vpop.f32.mrb[0].mxu0
  %703 = vmatprep.mubr.bf16.mxu0 %v628
  %704 = vmatmul.mubr.bf16.gmra.mrb[0].mxu0 %v627
  %v705 = vpop.f32.mrb[0].mxu0
  %v706 = vadd.f32 0.0, %v705
  %v707 = vpop.f32.mrb[0].mxu0
  %v708 = vpop.f32.mrb[0].mxu0
  %v709 = vadd.f32 0.0, %v708
  %v710 = vpop.f32.mrb[0].mxu0
  %711 = vmatprep.mubr.bf16.mxu0 %v632
  %712 = vmatmul.mubr.bf16.gmra.mrb[0].mxu0 %v631
  %v713 = vpop.f32.mrb[0].mxu0
  %v714 = vadd.f32 0.0, %v713
  %v715 = vpop.f32.mrb[0].mxu0
  %v716 = vpop.f32.mrb[0].mxu0
  %v717 = vadd.f32 0.0, %v716
  %v718 = vpop.f32.mrb[0].mxu0
  %719 = vmatprep.mubr.bf16.mxu0 %v636
  %720 = vmatmul.mubr.bf16.gmra.mrb[0].mxu0 %v635
  %v721 = vpop.f32.mrb[0].mxu0
  %v722 = vadd.f32 0.0, %v721
  %v723 = vpop.f32.mrb[0].mxu0
  %v724 = vpop.f32.mrb[0].mxu0
  %v725 = vadd.f32 0.0, %v724
  %v726 = vpop.f32.mrb[0].mxu0
  %727 = vmatprep.mubr.bf16.mxu0 %v640
  %728 = vmatmul.mubr.bf16.gmra.mrb[0].mxu0 %v639
  %v729 = vpop.f32.mrb[0].mxu0
  %v730 = vadd.f32 0.0, %v729
  %v731 = vpop.f32.mrb[0].mxu0
  %v732 = vpop.f32.mrb[0].mxu0
  %v733 = vpop.f32.mrb[0].mxu0
  %734 = vdwg.mxu0
  %735 = vmatprep.subr.bf16.mxu0 0
  %736 = vmatpush1.bf16.msra.mxu0 %v359
  %737 = vmatprep.subr.bf16.mxu0 0
  %738 = vmatpush1.bf16.msra.mxu0 %v360
  %739 = vmatprep.subr.bf16.mxu0 0
  %740 = vmatpush1.bf16.msra.mxu0 %v361
  %741 = vmatprep.subr.bf16.mxu0 0
  %742 = vmatpush1.bf16.msra.mxu0 %v362
  %743 = vmatprep.subr.bf16.mxu0 0
  %744 = vmatpush1.bf16.msra.mxu0 %v363
  %745 = vmatprep.subr.bf16.mxu0 0
  %746 = vmatpush1.bf16.msra.mxu0 %v364
  %747 = vmatprep.subr.bf16.mxu0 0
  %748 = vmatpush1.bf16.msra.mxu0 %v365
  %749 = vmatprep.subr.bf16.mxu0 0
  %750 = vmatpush1.bf16.msra.mxu0 %v366
  %751 = vmatprep.subr.bf16.mxu0 0
  %752 = vmatpush1.bf16.msra.mxu0 %v367
  %753 = vmatprep.subr.bf16.mxu0 0
  %754 = vmatpush1.bf16.msra.mxu0 %v368
  %755 = vmatprep.subr.bf16.mxu0 0
  %756 = vmatpush1.bf16.msra.mxu0 %v369
  %757 = vmatprep.subr.bf16.mxu0 0
  %758 = vmatpush1.bf16.msra.mxu0 %v370
  %759 = vmatprep.subr.bf16.mxu0 0
  %760 = vmatpush1.bf16.msra.mxu0 %v371
  %761 = vmatprep.subr.bf16.mxu0 0
  %762 = vmatpush1.bf16.msra.mxu0 %v372
  %763 = vmatprep.subr.bf16.mxu0 0
  %764 = vmatpush1.bf16.msra.mxu0 %v373
  %765 = vmatprep.subr.bf16.mxu0 0
  %766 = vmatpush1.bf16.msra.mxu0 %v374
  %767 = vmatprep.mubr.bf16.mxu0 %v626
  %768 = vmatmul.mubr.bf16.gmra.mrb[0].mxu0 %v625
  %v769 = vpop.f32.mrb[0].mxu0
  %v770 = vadd.f32 %v698, %v769
  %v771 = vpop.f32.mrb[0].mxu0
  %v772 = vpop.f32.mrb[0].mxu0
  %v773 = vadd.f32 %v701, %v772
  %v774 = vpop.f32.mrb[0].mxu0
  %775 = vmatprep.mubr.bf16.mxu0 %v630
  %776 = vmatmul.mubr.bf16.gmra.mrb[0].mxu0 %v629
  %v777 = vpop.f32.mrb[0].mxu0
  %v778 = vadd.f32 %v706, %v777
  %v779 = vpop.f32.mrb[0].mxu0
  %v780 = vpop.f32.mrb[0].mxu0
  %v781 = vadd.f32 %v709, %v780
  %v782 = vpop.f32.mrb[0].mxu0
  %783 = vmatprep.mubr.bf16.mxu0 %v634
  %784 = vmatmul.mubr.bf16.gmra.mrb[0].mxu0 %v633
  %v785 = vpop.f32.mrb[0].mxu0
  %v786 = vadd.f32 %v714, %v785
  %v787 = vpop.f32.mrb[0].mxu0
  %v788 = vpop.f32.mrb[0].mxu0
  %v789 = vadd.f32 %v717, %v788
  %v790 = vpop.f32.mrb[0].mxu0
  %791 = vmatprep.mubr.bf16.mxu0 %v638
  %792 = vmatmul.mubr.bf16.gmra.mrb[0].mxu0 %v637
  %v793 = vpop.f32.mrb[0].mxu0
  %v794 = vadd.f32 %v722, %v793
  %v795 = vpop.f32.mrb[0].mxu0
  %v796 = vpop.f32.mrb[0].mxu0
  %v797 = vadd.f32 %v725, %v796
  %v798 = vpop.f32.mrb[0].mxu0
  %799 = vmatprep.mubr.bf16.mxu0 %v642
  %800 = vmatmul.mubr.bf16.gmra.mrb[0].mxu0 %v641
  %v801 = vpop.f32.mrb[0].mxu0
  %v802 = vadd.f32 %v730, %v801
  %v803 = vpop.f32.mrb[0].mxu0
  %v804 = vpop.f32.mrb[0].mxu0
  %v805 = vpop.f32.mrb[0].mxu0
  %806 = vdwg.mxu0
  %v807 = vmax.f32 %v514, %v770
  %v808 = vmax.f32 %v517, %v773
  %v809 = vmax.f32 %v522, %v778
  %v810 = vmax.f32 %v525, %v781
  %v811 = vmax.f32 %v530, %v786
  %v812 = vmax.f32 %v533, %v789
  %v813 = vmax.f32 %v538, %v794
  %v814 = vmax.f32 %v541, %v797
  %v815 = vmax.f32 %v546, %v802
  %v816 = vld [vmem:[%s2] sm:$0xff]
  %v817 = vld [vmem:[%s2 + $0x8] sm:$0xff]
  %v818 = vld [vmem:[%s2 + $0x10] sm:$0xff]
  %v819 = vld [vmem:[%s2 + $0x18] sm:$0xff]
  %v820 = vld [vmem:[%s2 + $0x20] sm:$0xff]
  %v821 = vld [vmem:[%s2 + $0x28] sm:$0xff]
  %v822 = vld [vmem:[%s2 + $0x30] sm:$0xff]
  %v823 = vld [vmem:[%s2 + $0x38] sm:$0xff]
  %v824 = vld [vmem:[%s2 + $0x40] sm:$0xff]
  %v825 = vld [vmem:[%s2 + $0x48] sm:$0xff]
  %v826 = vld [vmem:[%s2 + $0x50] sm:$0xff]
  %v827 = vld [vmem:[%s2 + $0x58] sm:$0xff]
  %v828 = vld [vmem:[%s2 + $0x60] sm:$0xff]
  %v829 = vld [vmem:[%s2 + $0x68] sm:$0xff]
  %v830 = vld [vmem:[%s2 + $0x70] sm:$0xff]
  %v831 = vld [vmem:[%s2 + $0x78] sm:$0xff]
  %v832 = vld [vmem:[%s2 + $0x80] sm:$0xff]
  %v833 = vld [vmem:[%s2 + $0x88] sm:$0xff]
  %v852 = vunpack.c.l.b16 %v816
  %v853 = vunpack.c.h.b16 %v816
  %v854 = vunpack.c.l.b16 %v817
  %v855 = vunpack.c.h.b16 %v817
  %v856 = vunpack.c.l.b16 %v818
  %v857 = vunpack.c.h.b16 %v818
  %v858 = vunpack.c.l.b16 %v819
  %v859 = vunpack.c.h.b16 %v819
  %v860 = vunpack.c.l.b16 %v820
  %v861 = vunpack.c.h.b16 %v820
  %v862 = vunpack.c.l.b16 %v821
  %v863 = vunpack.c.h.b16 %v821
  %v864 = vunpack.c.l.b16 %v822
  %v865 = vunpack.c.h.b16 %v822
  %v866 = vunpack.c.l.b16 %v823
  %v867 = vunpack.c.h.b16 %v823
  %v868 = vunpack.c.l.b16 %v824
  %v869 = vunpack.c.h.b16 %v824
  %v870 = vunpack.c.l.b16 %v825
  %v871 = vunpack.c.h.b16 %v825
  %v872 = vunpack.c.l.b16 %v826
  %v873 = vunpack.c.h.b16 %v826
  %v874 = vunpack.c.l.b16 %v827
  %v875 = vunpack.c.h.b16 %v827
  %v876 = vunpack.c.l.b16 %v828
  %v877 = vunpack.c.h.b16 %v828
  %v878 = vunpack.c.l.b16 %v829
  %v879 = vunpack.c.h.b16 %v829
  %v880 = vunpack.c.l.b16 %v830
  %v881 = vunpack.c.h.b16 %v830
  %v882 = vunpack.c.l.b16 %v831
  %v883 = vunpack.c.h.b16 %v831
  %v884 = vunpack.c.l.b16 %v832
  %v885 = vunpack.c.h.b16 %v832
  %v886 = vunpack.c.l.b16 %v833
  %v887 = vunpack.c.h.b16 %v833
  %v888 = vpack.c.b16 %v856, %v852
  %v889 = vpack.c.b16 %v857, %v853
  %v890 = vpack.c.b16 %v858, %v854
  %v891 = vpack.c.b16 %v859, %v855
  %v892 = vpack.c.b16 %v864, %v860
  %v893 = vpack.c.b16 %v865, %v861
  %v894 = vpack.c.b16 %v866, %v862
  %v895 = vpack.c.b16 %v867, %v863
  %v896 = vpack.c.b16 %v872, %v868
  %v897 = vpack.c.b16 %v873, %v869
  %v898 = vpack.c.b16 %v874, %v870
  %v899 = vpack.c.b16 %v875, %v871
  %v900 = vpack.c.b16 %v880, %v876
  %v901 = vpack.c.b16 %v881, %v877
  %v902 = vpack.c.b16 %v882, %v878
  %v903 = vpack.c.b16 %v883, %v879
  %v904 = vpack.c.b16 %v884, %v884
  %v905 = vpack.c.b16 %v885, %v885
  %v906 = vpack.c.b16 %v886, %v886
  %v907 = vpack.c.b16 %v887, %v887
  %928 = vmatprep.subr.bf16.mxu0 0
  %929 = vmatpush1.bf16.msra.mxu0 %v343
  %930 = vmatprep.subr.bf16.mxu0 0
  %931 = vmatpush1.bf16.msra.mxu0 %v344
  %932 = vmatprep.subr.bf16.mxu0 0
  %933 = vmatpush1.bf16.msra.mxu0 %v345
  %934 = vmatprep.subr.bf16.mxu0 0
  %935 = vmatpush1.bf16.msra.mxu0 %v346
  %936 = vmatprep.subr.bf16.mxu0 0
  %937 = vmatpush1.bf16.msra.mxu0 %v347
  %938 = vmatprep.subr.bf16.mxu0 0
  %939 = vmatpush1.bf16.msra.mxu0 %v348
  %940 = vmatprep.subr.bf16.mxu0 0
  %941 = vmatpush1.bf16.msra.mxu0 %v349
  %942 = vmatprep.subr.bf16.mxu0 0
  %943 = vmatpush1.bf16.msra.mxu0 %v350
  %944 = vmatprep.subr.bf16.mxu0 0
  %945 = vmatpush1.bf16.msra.mxu0 %v351
  %946 = vmatprep.subr.bf16.mxu0 0
  %947 = vmatpush1.bf16.msra.mxu0 %v352
  %948 = vmatprep.subr.bf16.mxu0 0
  %949 = vmatpush1.bf16.msra.mxu0 %v353
  %950 = vmatprep.subr.bf16.mxu0 0
  %951 = vmatpush1.bf16.msra.mxu0 %v354
  %952 = vmatprep.subr.bf16.mxu0 0
  %953 = vmatpush1.bf16.msra.mxu0 %v355
  %954 = vmatprep.subr.bf16.mxu0 0
  %955 = vmatpush1.bf16.msra.mxu0 %v356
  %956 = vmatprep.subr.bf16.mxu0 0
  %957 = vmatpush1.bf16.msra.mxu0 %v357
  %958 = vmatprep.subr.bf16.mxu0 0
  %959 = vmatpush1.bf16.msra.mxu0 %v358
  %960 = vmatprep.mubr.bf16.mxu0 %v889
  %961 = vmatmul.mubr.bf16.gmra.mrb[0].mxu0 %v888
  %v962 = vpop.f32.mrb[0].mxu0
  %v963 = vadd.f32 0.0, %v962
  %v964 = vpop.f32.mrb[0].mxu0
  %v965 = vpop.f32.mrb[0].mxu0
  %v966 = vadd.f32 0.0, %v965
  %v967 = vpop.f32.mrb[0].mxu0
  %968 = vmatprep.mubr.bf16.mxu0 %v893
  %969 = vmatmul.mubr.bf16.gmra.mrb[0].mxu0 %v892
  %v970 = vpop.f32.mrb[0].mxu0
  %v971 = vadd.f32 0.0, %v970
  %v972 = vpop.f32.mrb[0].mxu0
  %v973 = vpop.f32.mrb[0].mxu0
  %v974 = vadd.f32 0.0, %v973
  %v975 = vpop.f32.mrb[0].mxu0
  %976 = vmatprep.mubr.bf16.mxu0 %v897
  %977 = vmatmul.mubr.bf16.gmra.mrb[0].mxu0 %v896
  %v978 = vpop.f32.mrb[0].mxu0
  %v979 = vadd.f32 0.0, %v978
  %v980 = vpop.f32.mrb[0].mxu0
  %v981 = vpop.f32.mrb[0].mxu0
  %v982 = vadd.f32 0.0, %v981
  %v983 = vpop.f32.mrb[0].mxu0
  %984 = vmatprep.mubr.bf16.mxu0 %v901
  %985 = vmatmul.mubr.bf16.gmra.mrb[0].mxu0 %v900
  %v986 = vpop.f32.mrb[0].mxu0
  %v987 = vadd.f32 0.0, %v986
  %v988 = vpop.f32.mrb[0].mxu0
  %v989 = vpop.f32.mrb[0].mxu0
  %v990 = vadd.f32 0.0, %v989
  %v991 = vpop.f32.mrb[0].mxu0
  %992 = vmatprep.mubr.bf16.mxu0 %v905
  %993 = vmatmul.mubr.bf16.gmra.mrb[0].mxu0 %v904
  %v994 = vpop.f32.mrb[0].mxu0
  %v995 = vadd.f32 0.0, %v994
  %v996 = vpop.f32.mrb[0].mxu0
  %v997 = vpop.f32.mrb[0].mxu0
  %v998 = vpop.f32.mrb[0].mxu0
  %999 = vdwg.mxu0
  %1000 = vmatprep.subr.bf16.mxu0 0
  %1001 = vmatpush1.bf16.msra.mxu0 %v359
  %1002 = vmatprep.subr.bf16.mxu0 0
  %1003 = vmatpush1.bf16.msra.mxu0 %v360
  %1004 = vmatprep.subr.bf16.mxu0 0
  %1005 = vmatpush1.bf16.msra.mxu0 %v361
  %1006 = vmatprep.subr.bf16.mxu0 0
  %1007 = vmatpush1.bf16.msra.mxu0 %v362
  %1008 = vmatprep.subr.bf16.mxu0 0
  %1009 = vmatpush1.bf16.msra.mxu0 %v363
  %1010 = vmatprep.subr.bf16.mxu0 0
  %1011 = vmatpush1.bf16.msra.mxu0 %v364
  %1012 = vmatprep.subr.bf16.mxu0 0
  %1013 = vmatpush1.bf16.msra.mxu0 %v365
  %1014 = vmatprep.subr.bf16.mxu0 0
  %1015 = vmatpush1.bf16.msra.mxu0 %v366
  %1016 = vmatprep.subr.bf16.mxu0 0
  %1017 = vmatpush1.bf16.msra.mxu0 %v367
  %1018 = vmatprep.subr.bf16.mxu0 0
  %1019 = vmatpush1.bf16.msra.mxu0 %v368
  %1020 = vmatprep.subr.bf16.mxu0 0
  %1021 = vmatpush1.bf16.msra.mxu0 %v369
  %1022 = vmatprep.subr.bf16.mxu0 0
  %1023 = vmatpush1.bf16.msra.mxu0 %v370
  %1024 = vmatprep.subr.bf16.mxu0 0
  %1025 = vmatpush1.bf16.msra.mxu0 %v371
  %1026 = vmatprep.subr.bf16.mxu0 0
  %1027 = vmatpush1.bf16.msra.mxu0 %v372
  %1028 = vmatprep.subr.bf16.mxu0 0
  %1029 = vmatpush1.bf16.msra.mxu0 %v373
  %1030 = vmatprep.subr.bf16.mxu0 0
  %1031 = vmatpush1.bf16.msra.mxu0 %v374
  %1032 = vmatprep.mubr.bf16.mxu0 %v891
  %1033 = vmatmul.mubr.bf16.gmra.mrb[0].mxu0 %v890
  %v1034 = vpop.f32.mrb[0].mxu0
  %v1035 = vadd.f32 %v963, %v1034
  %v1036 = vpop.f32.mrb[0].mxu0
  %v1037 = vpop.f32.mrb[0].mxu0
  %v1038 = vadd.f32 %v966, %v1037
  %v1039 = vpop.f32.mrb[0].mxu0
  %1040 = vmatprep.mubr.bf16.mxu0 %v895
  %1041 = vmatmul.mubr.bf16.gmra.mrb[0].mxu0 %v894
  %v1042 = vpop.f32.mrb[0].mxu0
  %v1043 = vadd.f32 %v971, %v1042
  %v1044 = vpop.f32.mrb[0].mxu0
  %v1045 = vpop.f32.mrb[0].mxu0
  %v1046 = vadd.f32 %v974, %v1045
  %v1047 = vpop.f32.mrb[0].mxu0
  %1048 = vmatprep.mubr.bf16.mxu0 %v899
  %1049 = vmatmul.mubr.bf16.gmra.mrb[0].mxu0 %v898
  %v1050 = vpop.f32.mrb[0].mxu0
  %v1051 = vadd.f32 %v979, %v1050
  %v1052 = vpop.f32.mrb[0].mxu0
  %v1053 = vpop.f32.mrb[0].mxu0
  %v1054 = vadd.f32 %v982, %v1053
  %v1055 = vpop.f32.mrb[0].mxu0
  %1056 = vmatprep.mubr.bf16.mxu0 %v903
  %1057 = vmatmul.mubr.bf16.gmra.mrb[0].mxu0 %v902
  %v1058 = vpop.f32.mrb[0].mxu0
  %v1059 = vadd.f32 %v987, %v1058
  %v1060 = vpop.f32.mrb[0].mxu0
  %v1061 = vpop.f32.mrb[0].mxu0
  %v1062 = vadd.f32 %v990, %v1061
  %v1063 = vpop.f32.mrb[0].mxu0
  %1064 = vmatprep.mubr.bf16.mxu0 %v907
  %1065 = vmatmul.mubr.bf16.gmra.mrb[0].mxu0 %v906
  %v1066 = vpop.f32.mrb[0].mxu0
  %v1067 = vadd.f32 %v995, %v1066
  %v1068 = vpop.f32.mrb[0].mxu0
  %v1069 = vpop.f32.mrb[0].mxu0
  %v1070 = vpop.f32.mrb[0].mxu0
  %1071 = vdwg.mxu0
  %v1072 = vld [vmem:[%s3] sm:$0xff]
  %v1073 = vld [vmem:[%s3 + $0x8] sm:$0xff]
  %v1074 = vld [vmem:[%s3 + $0x10] sm:$0xff]
  %v1075 = vld [vmem:[%s3 + $0x18] sm:$0xff]
  %v1076 = vld [vmem:[%s3 + $0x20] sm:$0xff]
  %v1077 = vld [vmem:[%s3 + $0x28] sm:$0xff]
  %v1078 = vld [vmem:[%s3 + $0x30] sm:$0xff]
  %v1079 = vld [vmem:[%s3 + $0x38] sm:$0xff]
  %v1080 = vld [vmem:[%s3 + $0x40] sm:$0xff]
  %v1081 = vld [vmem:[%s3 + $0x48] sm:$0xff]
  %v1082 = vld [vmem:[%s3 + $0x50] sm:$0xff]
  %v1083 = vld [vmem:[%s3 + $0x58] sm:$0xff]
  %v1084 = vld [vmem:[%s3 + $0x60] sm:$0xff]
  %v1085 = vld [vmem:[%s3 + $0x68] sm:$0xff]
  %v1086 = vld [vmem:[%s3 + $0x70] sm:$0xff]
  %v1087 = vld [vmem:[%s3 + $0x78] sm:$0xff]
  %v1088 = vld [vmem:[%s3 + $0x80] sm:$0xff]
  %v1089 = vld [vmem:[%s3 + $0x88] sm:$0xff]
  %v1108 = vunpack.c.l.b16 %v1072
  %v1109 = vunpack.c.h.b16 %v1072
  %v1110 = vunpack.c.l.b16 %v1073
  %v1111 = vunpack.c.h.b16 %v1073
  %v1112 = vunpack.c.l.b16 %v1074
  %v1113 = vunpack.c.h.b16 %v1074
  %v1114 = vunpack.c.l.b16 %v1075
  %v1115 = vunpack.c.h.b16 %v1075
  %v1116 = vunpack.c.l.b16 %v1076
  %v1117 = vunpack.c.h.b16 %v1076
  %v1118 = vunpack.c.l.b16 %v1077
  %v1119 = vunpack.c.h.b16 %v1077
  %v1120 = vunpack.c.l.b16 %v1078
  %v1121 = vunpack.c.h.b16 %v1078
  %v1122 = vunpack.c.l.b16 %v1079
  %v1123 = vunpack.c.h.b16 %v1079
  %v1124 = vunpack.c.l.b16 %v1080
  %v1125 = vunpack.c.h.b16 %v1080
  %v1126 = vunpack.c.l.b16 %v1081
  %v1127 = vunpack.c.h.b16 %v1081
  %v1128 = vunpack.c.l.b16 %v1082
  %v1129 = vunpack.c.h.b16 %v1082
  %v1130 = vunpack.c.l.b16 %v1083
  %v1131 = vunpack.c.h.b16 %v1083
  %v1132 = vunpack.c.l.b16 %v1084
  %v1133 = vunpack.c.h.b16 %v1084
  %v1134 = vunpack.c.l.b16 %v1085
  %v1135 = vunpack.c.h.b16 %v1085
  %v1136 = vunpack.c.l.b16 %v1086
  %v1137 = vunpack.c.h.b16 %v1086
  %v1138 = vunpack.c.l.b16 %v1087
  %v1139 = vunpack.c.h.b16 %v1087
  %v1140 = vunpack.c.l.b16 %v1088
  %v1141 = vunpack.c.h.b16 %v1088
  %v1142 = vunpack.c.l.b16 %v1089
  %v1143 = vunpack.c.h.b16 %v1089
  %v1144 = vpack.c.b16 %v1112, %v1108
  %v1145 = vpack.c.b16 %v1113, %v1109
  %v1146 = vpack.c.b16 %v1114, %v1110
  %v1147 = vpack.c.b16 %v1115, %v1111
  %v1148 = vpack.c.b16 %v1120, %v1116
  %v1149 = vpack.c.b16 %v1121, %v1117
  %v1150 = vpack.c.b16 %v1122, %v1118
  %v1151 = vpack.c.b16 %v1123, %v1119
  %v1152 = vpack.c.b16 %v1128, %v1124
  %v1153 = vpack.c.b16 %v1129, %v1125
  %v1154 = vpack.c.b16 %v1130, %v1126
  %v1155 = vpack.c.b16 %v1131, %v1127
  %v1156 = vpack.c.b16 %v1136, %v1132
  %v1157 = vpack.c.b16 %v1137, %v1133
  %v1158 = vpack.c.b16 %v1138, %v1134
  %v1159 = vpack.c.b16 %v1139, %v1135
  %v1160 = vpack.c.b16 %v1140, %v1140
  %v1161 = vpack.c.b16 %v1141, %v1141
  %v1162 = vpack.c.b16 %v1142, %v1142
  %v1163 = vpack.c.b16 %v1143, %v1143
  %1184 = vmatprep.subr.bf16.mxu0 0
  %1185 = vmatpush1.bf16.msra.mxu0 %v343
  %1186 = vmatprep.subr.bf16.mxu0 0
  %1187 = vmatpush1.bf16.msra.mxu0 %v344
  %1188 = vmatprep.subr.bf16.mxu0 0
  %1189 = vmatpush1.bf16.msra.mxu0 %v345
  %1190 = vmatprep.subr.bf16.mxu0 0
  %1191 = vmatpush1.bf16.msra.mxu0 %v346
  %1192 = vmatprep.subr.bf16.mxu0 0
  %1193 = vmatpush1.bf16.msra.mxu0 %v347
  %1194 = vmatprep.subr.bf16.mxu0 0
  %1195 = vmatpush1.bf16.msra.mxu0 %v348
  %1196 = vmatprep.subr.bf16.mxu0 0
  %1197 = vmatpush1.bf16.msra.mxu0 %v349
  %1198 = vmatprep.subr.bf16.mxu0 0
  %1199 = vmatpush1.bf16.msra.mxu0 %v350
  %1200 = vmatprep.subr.bf16.mxu0 0
  %1201 = vmatpush1.bf16.msra.mxu0 %v351
  %1202 = vmatprep.subr.bf16.mxu0 0
  %1203 = vmatpush1.bf16.msra.mxu0 %v352
  %1204 = vmatprep.subr.bf16.mxu0 0
  %1205 = vmatpush1.bf16.msra.mxu0 %v353
  %1206 = vmatprep.subr.bf16.mxu0 0
  %1207 = vmatpush1.bf16.msra.mxu0 %v354
  %1208 = vmatprep.subr.bf16.mxu0 0
  %1209 = vmatpush1.bf16.msra.mxu0 %v355
  %1210 = vmatprep.subr.bf16.mxu0 0
  %1211 = vmatpush1.bf16.msra.mxu0 %v356
  %1212 = vmatprep.subr.bf16.mxu0 0
  %1213 = vmatpush1.bf16.msra.mxu0 %v357
  %1214 = vmatprep.subr.bf16.mxu0 0
  %1215 = vmatpush1.bf16.msra.mxu0 %v358
  %1216 = vmatprep.mubr.bf16.mxu0 %v1145
  %1217 = vmatmul.mubr.bf16.gmra.mrb[0].mxu0 %v1144
  %v1218 = vpop.f32.mrb[0].mxu0
  %v1219 = vadd.f32 0.0, %v1218
  %v1220 = vpop.f32.mrb[0].mxu0
  %v1221 = vpop.f32.mrb[0].mxu0
  %v1222 = vadd.f32 0.0, %v1221
  %v1223 = vpop.f32.mrb[0].mxu0
  %1224 = vmatprep.mubr.bf16.mxu0 %v1149
  %1225 = vmatmul.mubr.bf16.gmra.mrb[0].mxu0 %v1148
  %v1226 = vpop.f32.mrb[0].mxu0
  %v1227 = vadd.f32 0.0, %v1226
  %v1228 = vpop.f32.mrb[0].mxu0
  %v1229 = vpop.f32.mrb[0].mxu0
  %v1230 = vadd.f32 0.0, %v1229
  %v1231 = vpop.f32.mrb[0].mxu0
  %1232 = vmatprep.mubr.bf16.mxu0 %v1153
  %1233 = vmatmul.mubr.bf16.gmra.mrb[0].mxu0 %v1152
  %v1234 = vpop.f32.mrb[0].mxu0
  %v1235 = vadd.f32 0.0, %v1234
  %v1236 = vpop.f32.mrb[0].mxu0
  %v1237 = vpop.f32.mrb[0].mxu0
  %v1238 = vadd.f32 0.0, %v1237
  %v1239 = vpop.f32.mrb[0].mxu0
  %1240 = vmatprep.mubr.bf16.mxu0 %v1157
  %1241 = vmatmul.mubr.bf16.gmra.mrb[0].mxu0 %v1156
  %v1242 = vpop.f32.mrb[0].mxu0
  %v1243 = vadd.f32 0.0, %v1242
  %v1244 = vpop.f32.mrb[0].mxu0
  %v1245 = vpop.f32.mrb[0].mxu0
  %v1246 = vadd.f32 0.0, %v1245
  %v1247 = vpop.f32.mrb[0].mxu0
  %1248 = vmatprep.mubr.bf16.mxu0 %v1161
  %1249 = vmatmul.mubr.bf16.gmra.mrb[0].mxu0 %v1160
  %v1250 = vpop.f32.mrb[0].mxu0
  %v1251 = vadd.f32 0.0, %v1250
  %v1252 = vpop.f32.mrb[0].mxu0
  %v1253 = vpop.f32.mrb[0].mxu0
  %v1254 = vpop.f32.mrb[0].mxu0
  %1255 = vdwg.mxu0
  %1256 = vmatprep.subr.bf16.mxu0 0
  %1257 = vmatpush1.bf16.msra.mxu0 %v359
  %1258 = vmatprep.subr.bf16.mxu0 0
  %1259 = vmatpush1.bf16.msra.mxu0 %v360
  %1260 = vmatprep.subr.bf16.mxu0 0
  %1261 = vmatpush1.bf16.msra.mxu0 %v361
  %1262 = vmatprep.subr.bf16.mxu0 0
  %1263 = vmatpush1.bf16.msra.mxu0 %v362
  %1264 = vmatprep.subr.bf16.mxu0 0
  %1265 = vmatpush1.bf16.msra.mxu0 %v363
  %1266 = vmatprep.subr.bf16.mxu0 0
  %1267 = vmatpush1.bf16.msra.mxu0 %v364
  %1268 = vmatprep.subr.bf16.mxu0 0
  %1269 = vmatpush1.bf16.msra.mxu0 %v365
  %1270 = vmatprep.subr.bf16.mxu0 0
  %1271 = vmatpush1.bf16.msra.mxu0 %v366
  %1272 = vmatprep.subr.bf16.mxu0 0
  %1273 = vmatpush1.bf16.msra.mxu0 %v367
  %1274 = vmatprep.subr.bf16.mxu0 0
  %1275 = vmatpush1.bf16.msra.mxu0 %v368
  %1276 = vmatprep.subr.bf16.mxu0 0
  %1277 = vmatpush1.bf16.msra.mxu0 %v369
  %1278 = vmatprep.subr.bf16.mxu0 0
  %1279 = vmatpush1.bf16.msra.mxu0 %v370
  %1280 = vmatprep.subr.bf16.mxu0 0
  %1281 = vmatpush1.bf16.msra.mxu0 %v371
  %1282 = vmatprep.subr.bf16.mxu0 0
  %1283 = vmatpush1.bf16.msra.mxu0 %v372
  %1284 = vmatprep.subr.bf16.mxu0 0
  %1285 = vmatpush1.bf16.msra.mxu0 %v373
  %1286 = vmatprep.subr.bf16.mxu0 0
  %1287 = vmatpush1.bf16.msra.mxu0 %v374
  %1288 = vmatprep.mubr.bf16.mxu0 %v1147
  %1289 = vmatmul.mubr.bf16.gmra.mrb[0].mxu0 %v1146
  %v1290 = vpop.f32.mrb[0].mxu0
  %v1291 = vadd.f32 %v1219, %v1290
  %v1292 = vpop.f32.mrb[0].mxu0
  %v1293 = vpop.f32.mrb[0].mxu0
  %v1294 = vadd.f32 %v1222, %v1293
  %v1295 = vpop.f32.mrb[0].mxu0
  %1296 = vmatprep.mubr.bf16.mxu0 %v1151
  %1297 = vmatmul.mubr.bf16.gmra.mrb[0].mxu0 %v1150
  %v1298 = vpop.f32.mrb[0].mxu0
  %v1299 = vadd.f32 %v1227, %v1298
  %v1300 = vpop.f32.mrb[0].mxu0
  %v1301 = vpop.f32.mrb[0].mxu0
  %v1302 = vadd.f32 %v1230, %v1301
  %v1303 = vpop.f32.mrb[0].mxu0
  %1304 = vmatprep.mubr.bf16.mxu0 %v1155
  %1305 = vmatmul.mubr.bf16.gmra.mrb[0].mxu0 %v1154
  %v1306 = vpop.f32.mrb[0].mxu0
  %v1307 = vadd.f32 %v1235, %v1306
  %v1308 = vpop.f32.mrb[0].mxu0
  %v1309 = vpop.f32.mrb[0].mxu0
  %v1310 = vadd.f32 %v1238, %v1309
  %v1311 = vpop.f32.mrb[0].mxu0
  %1312 = vmatprep.mubr.bf16.mxu0 %v1159
  %1313 = vmatmul.mubr.bf16.gmra.mrb[0].mxu0 %v1158
  %v1314 = vpop.f32.mrb[0].mxu0
  %v1315 = vadd.f32 %v1243, %v1314
  %v1316 = vpop.f32.mrb[0].mxu0
  %v1317 = vpop.f32.mrb[0].mxu0
  %v1318 = vadd.f32 %v1246, %v1317
  %v1319 = vpop.f32.mrb[0].mxu0
  %1320 = vmatprep.mubr.bf16.mxu0 %v1163
  %1321 = vmatmul.mubr.bf16.gmra.mrb[0].mxu0 %v1162
  %v1322 = vpop.f32.mrb[0].mxu0
  %v1323 = vadd.f32 %v1251, %v1322
  %v1324 = vpop.f32.mrb[0].mxu0
  %v1325 = vpop.f32.mrb[0].mxu0
  %v1326 = vpop.f32.mrb[0].mxu0
  %1327 = vdwg.mxu0
  %v1328 = vmax.f32 %v1035, %v1291
  %v1329 = vmax.f32 %v1038, %v1294
  %v1330 = vmax.f32 %v1043, %v1299
  %v1331 = vmax.f32 %v1046, %v1302
  %v1332 = vmax.f32 %v1051, %v1307
  %v1333 = vmax.f32 %v1054, %v1310
  %v1334 = vmax.f32 %v1059, %v1315
  %v1335 = vmax.f32 %v1062, %v1318
  %v1336 = vmax.f32 %v1067, %v1323
  %v1337 = vmax.f32 %v807, %v1328
  %v1338 = vmax.f32 %v808, %v1329
  %v1339 = vmax.f32 %v809, %v1330
  %v1340 = vmax.f32 %v810, %v1331
  %v1341 = vmax.f32 %v811, %v1332
  %v1342 = vmax.f32 %v812, %v1333
  %v1343 = vmax.f32 %v813, %v1334
  %v1344 = vmax.f32 %v814, %v1335
  %v1345 = vmax.f32 %v815, %v1336
  %v1346 = vmax.f32 %v1337, 0.0
  %v1347 = vmax.f32 %v1338, 0.0
  %v1348 = vmax.f32 %v1339, 0.0
  %v1349 = vmax.f32 %v1340, 0.0
  %v1350 = vmax.f32 %v1341, 0.0
  %v1351 = vmax.f32 %v1342, 0.0
  %v1352 = vmax.f32 %v1343, 0.0
  %v1353 = vmax.f32 %v1344, 0.0
  %v1354 = vmax.f32 %v1345, 0.0
  %v1355 = vpack.c.bf16 %v1346, %v1346
  %v1356 = vld [vmem:[%s5] sm:$0xf]
  %v1357 = vld [vmem:[%s5 + $0x4] sm:$0xf]
  %v1358 = vld [vmem:[%s5 + $0x8] sm:$0xf]
  %v1359 = vld [vmem:[%s5 + $0xc] sm:$0xf]
  %v1360 = vld [vmem:[%s5 + $0x10] sm:$0xf]
  %v1361 = vld [vmem:[%s5 + $0x14] sm:$0xf]
  %v1362 = vld [vmem:[%s5 + $0x18] sm:$0xf]
  %v1363 = vld [vmem:[%s5 + $0x1c] sm:$0xf]
  %v1364 = vld [vmem:[%s5 + $0x20] sm:$0xf]
  %v1365 = vld [vmem:[%s5 + $0x24] sm:$0xf]
  %v1366 = vld [vmem:[%s5 + $0x28] sm:$0xf]
  %v1367 = vld [vmem:[%s5 + $0x2c] sm:$0xf]
  %v1368 = vld [vmem:[%s5 + $0x30] sm:$0xf]
  %v1369 = vld [vmem:[%s5 + $0x34] sm:$0xf]
  %v1370 = vld [vmem:[%s5 + $0x38] sm:$0xf]
  %v1371 = vld [vmem:[%s5 + $0x3c] sm:$0xf]
  %v1372 = vpack.c.bf16 %v1347, %v1347
  %v1373 = vld [vmem:[%s5 + $0x40] sm:$0xf]
  %v1374 = vld [vmem:[%s5 + $0x44] sm:$0xf]
  %v1375 = vld [vmem:[%s5 + $0x48] sm:$0xf]
  %v1376 = vld [vmem:[%s5 + $0x4c] sm:$0xf]
  %v1377 = vld [vmem:[%s5 + $0x50] sm:$0xf]
  %v1378 = vld [vmem:[%s5 + $0x54] sm:$0xf]
  %v1379 = vld [vmem:[%s5 + $0x58] sm:$0xf]
  %v1380 = vld [vmem:[%s5 + $0x5c] sm:$0xf]
  %v1381 = vld [vmem:[%s5 + $0x60] sm:$0xf]
  %v1382 = vld [vmem:[%s5 + $0x64] sm:$0xf]
  %v1383 = vld [vmem:[%s5 + $0x68] sm:$0xf]
  %v1384 = vld [vmem:[%s5 + $0x6c] sm:$0xf]
  %v1385 = vld [vmem:[%s5 + $0x70] sm:$0xf]
  %v1386 = vld [vmem:[%s5 + $0x74] sm:$0xf]
  %v1387 = vld [vmem:[%s5 + $0x78] sm:$0xf]
  %v1388 = vld [vmem:[%s5 + $0x7c] sm:$0xf]
  %v1405 = vunpack.c.l.b16 %v1373
  %v1406 = vunpack.c.l.b16 %v1374
  %v1407 = vunpack.c.l.b16 %v1375
  %v1408 = vunpack.c.l.b16 %v1376
  %v1409 = vunpack.c.l.b16 %v1377
  %v1410 = vunpack.c.l.b16 %v1378
  %v1411 = vunpack.c.l.b16 %v1379
  %v1412 = vunpack.c.l.b16 %v1380
  %v1413 = vunpack.c.l.b16 %v1381
  %v1414 = vunpack.c.l.b16 %v1382
  %v1415 = vunpack.c.l.b16 %v1383
  %v1416 = vunpack.c.l.b16 %v1384
  %v1417 = vunpack.c.l.b16 %v1385
  %v1418 = vunpack.c.l.b16 %v1386
  %v1419 = vunpack.c.l.b16 %v1387
  %v1420 = vunpack.c.l.b16 %v1388
  %v1421 = vpack.c.b16 %v1406, %v1405
  %v1422 = vpack.c.b16 %v1408, %v1407
  %v1423 = vpack.c.b16 %v1410, %v1409
  %v1424 = vpack.c.b16 %v1412, %v1411
  %v1425 = vpack.c.b16 %v1414, %v1413
  %v1426 = vpack.c.b16 %v1416, %v1415
  %v1427 = vpack.c.b16 %v1418, %v1417
  %v1428 = vpack.c.b16 %v1420, %v1419
  %1437 = vmatprep.subr.bf16.mxu0 0
  %1438 = vmatpush1.bf16.msra.mxu0 %v1421
  %1439 = vmatprep.subr.bf16.mxu0 0
  %1440 = vmatpush1.bf16.msra.mxu0 %v1422
  %1441 = vmatprep.subr.bf16.mxu0 0
  %1442 = vmatpush1.bf16.msra.mxu0 %v1423
  %1443 = vmatprep.subr.bf16.mxu0 0
  %1444 = vmatpush1.bf16.msra.mxu0 %v1424
  %1445 = vmatprep.subr.bf16.mxu0 0
  %1446 = vmatpush1.bf16.msra.mxu0 %v1425
  %1447 = vmatprep.subr.bf16.mxu0 0
  %1448 = vmatpush1.bf16.msra.mxu0 %v1426
  %1449 = vmatprep.subr.bf16.mxu0 0
  %1450 = vmatpush1.bf16.msra.mxu0 %v1427
  %1451 = vmatprep.subr.bf16.mxu0 0
  %1452 = vmatpush1.bf16.msra.mxu0 %v1428
  %1453 = vmatprep.subr.bf16.mxu0 0
  %1454 = vmatpush1.bf16.msra.mxu0 0
  %1455 = vmatprep.subr.bf16.mxu0 0
  %1456 = vmatpush1.bf16.msra.mxu0 0
  %1457 = vmatprep.subr.bf16.mxu0 0
  %1458 = vmatpush1.bf16.msra.mxu0 0
  %1459 = vmatprep.subr.bf16.mxu0 0
  %1460 = vmatpush1.bf16.msra.mxu0 0
  %1461 = vmatprep.subr.bf16.mxu0 0
  %1462 = vmatpush1.bf16.msra.mxu0 0
  %1463 = vmatprep.subr.bf16.mxu0 0
  %1464 = vmatpush1.bf16.msra.mxu0 0
  %1465 = vmatprep.subr.bf16.mxu0 0
  %1466 = vmatpush1.bf16.msra.mxu0 0
  %1467 = vmatprep.subr.bf16.mxu0 0
  %1468 = vmatpush1.bf16.msra.mxu0 0
  %1469 = vmatprep.mubr.bf16.mxu0 0
  %1470 = vmatmul.mubr.bf16.gmra.mrb[0].mxu0 %v1372
  %v1471 = vpop.f32.mrb[0].mxu0
  %v1472 = vadd.f32 0.0, %v1471
  %v1473 = vpop.f32.mrb[0].mxu0
  %v1474 = vpop.f32.mrb[0].mxu0
  %v1475 = vpop.f32.mrb[0].mxu0
  %1476 = vdwg.mxu0
  %v1493 = vunpack.c.l.b16 %v1356
  %v1494 = vunpack.c.l.b16 %v1357
  %v1495 = vunpack.c.l.b16 %v1358
  %v1496 = vunpack.c.l.b16 %v1359
  %v1497 = vunpack.c.l.b16 %v1360
  %v1498 = vunpack.c.l.b16 %v1361
  %v1499 = vunpack.c.l.b16 %v1362
  %v1500 = vunpack.c.l.b16 %v1363
  %v1501 = vunpack.c.l.b16 %v1364
  %v1502 = vunpack.c.l.b16 %v1365
  %v1503 = vunpack.c.l.b16 %v1366
  %v1504 = vunpack.c.l.b16 %v1367
  %v1505 = vunpack.c.l.b16 %v1368
  %v1506 = vunpack.c.l.b16 %v1369
  %v1507 = vunpack.c.l.b16 %v1370
  %v1508 = vunpack.c.l.b16 %v1371
  %v1509 = vpack.c.b16 %v1494, %v1493
  %v1510 = vpack.c.b16 %v1496, %v1495
  %v1511 = vpack.c.b16 %v1498, %v1497
  %v1512 = vpack.c.b16 %v1500, %v1499
  %v1513 = vpack.c.b16 %v1502, %v1501
  %v1514 = vpack.c.b16 %v1504, %v1503
  %v1515 = vpack.c.b16 %v1506, %v1505
  %v1516 = vpack.c.b16 %v1508, %v1507
  %1525 = vmatprep.subr.bf16.mxu0 0
  %1526 = vmatpush1.bf16.msra.mxu0 %v1509
  %1527 = vmatprep.subr.bf16.mxu0 0
  %1528 = vmatpush1.bf16.msra.mxu0 %v1510
  %1529 = vmatprep.subr.bf16.mxu0 0
  %1530 = vmatpush1.bf16.msra.mxu0 %v1511
  %1531 = vmatprep.subr.bf16.mxu0 0
  %1532 = vmatpush1.bf16.msra.mxu0 %v1512
  %1533 = vmatprep.subr.bf16.mxu0 0
  %1534 = vmatpush1.bf16.msra.mxu0 %v1513
  %1535 = vmatprep.subr.bf16.mxu0 0
  %1536 = vmatpush1.bf16.msra.mxu0 %v1514
  %1537 = vmatprep.subr.bf16.mxu0 0
  %1538 = vmatpush1.bf16.msra.mxu0 %v1515
  %1539 = vmatprep.subr.bf16.mxu0 0
  %1540 = vmatpush1.bf16.msra.mxu0 %v1516
  %1541 = vmatprep.subr.bf16.mxu0 0
  %1542 = vmatpush1.bf16.msra.mxu0 0
  %1543 = vmatprep.subr.bf16.mxu0 0
  %1544 = vmatpush1.bf16.msra.mxu0 0
  %1545 = vmatprep.subr.bf16.mxu0 0
  %1546 = vmatpush1.bf16.msra.mxu0 0
  %1547 = vmatprep.subr.bf16.mxu0 0
  %1548 = vmatpush1.bf16.msra.mxu0 0
  %1549 = vmatprep.subr.bf16.mxu0 0
  %1550 = vmatpush1.bf16.msra.mxu0 0
  %1551 = vmatprep.subr.bf16.mxu0 0
  %1552 = vmatpush1.bf16.msra.mxu0 0
  %1553 = vmatprep.subr.bf16.mxu0 0
  %1554 = vmatpush1.bf16.msra.mxu0 0
  %1555 = vmatprep.subr.bf16.mxu0 0
  %1556 = vmatpush1.bf16.msra.mxu0 0
  %1557 = vmatprep.mubr.bf16.mxu0 0
  %1558 = vmatmul.mubr.bf16.gmra.mrb[0].mxu0 %v1355
  %v1559 = vpop.f32.mrb[0].mxu0
  %v1560 = vadd.f32 %v1472, %v1559
  %v1561 = vpop.f32.mrb[0].mxu0
  %v1562 = vpop.f32.mrb[0].mxu0
  %v1563 = vpop.f32.mrb[0].mxu0
  %1564 = vdwg.mxu0
  %v1565 = vpack.c.bf16 %v1348, %v1348
  %v1566 = vld [vmem:[%s5 + $0x80] sm:$0xf]
  %v1567 = vld [vmem:[%s5 + $0x84] sm:$0xf]
  %v1568 = vld [vmem:[%s5 + $0x88] sm:$0xf]
  %v1569 = vld [vmem:[%s5 + $0x8c] sm:$0xf]
  %v1570 = vld [vmem:[%s5 + $0x90] sm:$0xf]
  %v1571 = vld [vmem:[%s5 + $0x94] sm:$0xf]
  %v1572 = vld [vmem:[%s5 + $0x98] sm:$0xf]
  %v1573 = vld [vmem:[%s5 + $0x9c] sm:$0xf]
  %v1574 = vld [vmem:[%s5 + $0xa0] sm:$0xf]
  %v1575 = vld [vmem:[%s5 + $0xa4] sm:$0xf]
  %v1576 = vld [vmem:[%s5 + $0xa8] sm:$0xf]
  %v1577 = vld [vmem:[%s5 + $0xac] sm:$0xf]
  %v1578 = vld [vmem:[%s5 + $0xb0] sm:$0xf]
  %v1579 = vld [vmem:[%s5 + $0xb4] sm:$0xf]
  %v1580 = vld [vmem:[%s5 + $0xb8] sm:$0xf]
  %v1581 = vld [vmem:[%s5 + $0xbc] sm:$0xf]
  %v1598 = vunpack.c.l.b16 %v1566
  %v1599 = vunpack.c.l.b16 %v1567
  %v1600 = vunpack.c.l.b16 %v1568
  %v1601 = vunpack.c.l.b16 %v1569
  %v1602 = vunpack.c.l.b16 %v1570
  %v1603 = vunpack.c.l.b16 %v1571
  %v1604 = vunpack.c.l.b16 %v1572
  %v1605 = vunpack.c.l.b16 %v1573
  %v1606 = vunpack.c.l.b16 %v1574
  %v1607 = vunpack.c.l.b16 %v1575
  %v1608 = vunpack.c.l.b16 %v1576
  %v1609 = vunpack.c.l.b16 %v1577
  %v1610 = vunpack.c.l.b16 %v1578
  %v1611 = vunpack.c.l.b16 %v1579
  %v1612 = vunpack.c.l.b16 %v1580
  %v1613 = vunpack.c.l.b16 %v1581
  %v1614 = vpack.c.b16 %v1599, %v1598
  %v1615 = vpack.c.b16 %v1601, %v1600
  %v1616 = vpack.c.b16 %v1603, %v1602
  %v1617 = vpack.c.b16 %v1605, %v1604
  %v1618 = vpack.c.b16 %v1607, %v1606
  %v1619 = vpack.c.b16 %v1609, %v1608
  %v1620 = vpack.c.b16 %v1611, %v1610
  %v1621 = vpack.c.b16 %v1613, %v1612
  %1630 = vmatprep.subr.bf16.mxu0 0
  %1631 = vmatpush1.bf16.msra.mxu0 %v1614
  %1632 = vmatprep.subr.bf16.mxu0 0
  %1633 = vmatpush1.bf16.msra.mxu0 %v1615
  %1634 = vmatprep.subr.bf16.mxu0 0
  %1635 = vmatpush1.bf16.msra.mxu0 %v1616
  %1636 = vmatprep.subr.bf16.mxu0 0
  %1637 = vmatpush1.bf16.msra.mxu0 %v1617
  %1638 = vmatprep.subr.bf16.mxu0 0
  %1639 = vmatpush1.bf16.msra.mxu0 %v1618
  %1640 = vmatprep.subr.bf16.mxu0 0
  %1641 = vmatpush1.bf16.msra.mxu0 %v1619
  %1642 = vmatprep.subr.bf16.mxu0 0
  %1643 = vmatpush1.bf16.msra.mxu0 %v1620
  %1644 = vmatprep.subr.bf16.mxu0 0
  %1645 = vmatpush1.bf16.msra.mxu0 %v1621
  %1646 = vmatprep.subr.bf16.mxu0 0
  %1647 = vmatpush1.bf16.msra.mxu0 0
  %1648 = vmatprep.subr.bf16.mxu0 0
  %1649 = vmatpush1.bf16.msra.mxu0 0
  %1650 = vmatprep.subr.bf16.mxu0 0
  %1651 = vmatpush1.bf16.msra.mxu0 0
  %1652 = vmatprep.subr.bf16.mxu0 0
  %1653 = vmatpush1.bf16.msra.mxu0 0
  %1654 = vmatprep.subr.bf16.mxu0 0
  %1655 = vmatpush1.bf16.msra.mxu0 0
  %1656 = vmatprep.subr.bf16.mxu0 0
  %1657 = vmatpush1.bf16.msra.mxu0 0
  %1658 = vmatprep.subr.bf16.mxu0 0
  %1659 = vmatpush1.bf16.msra.mxu0 0
  %1660 = vmatprep.subr.bf16.mxu0 0
  %1661 = vmatpush1.bf16.msra.mxu0 0
  %1662 = vmatprep.mubr.bf16.mxu0 0
  %1663 = vmatmul.mubr.bf16.gmra.mrb[0].mxu0 %v1565
  %v1664 = vpop.f32.mrb[0].mxu0
  %v1665 = vadd.f32 0.0, %v1664
  %v1666 = vpop.f32.mrb[0].mxu0
  %v1667 = vpop.f32.mrb[0].mxu0
  %v1668 = vpop.f32.mrb[0].mxu0
  %1669 = vdwg.mxu0
  %v1670 = vadd.f32 %v1560, %v1665
  %v1671 = vpack.c.bf16 %v1349, %v1349
  %v1672 = vld [vmem:[%s5 + $0xc0] sm:$0xf]
  %v1673 = vld [vmem:[%s5 + $0xc4] sm:$0xf]
  %v1674 = vld [vmem:[%s5 + $0xc8] sm:$0xf]
  %v1675 = vld [vmem:[%s5 + $0xcc] sm:$0xf]
  %v1676 = vld [vmem:[%s5 + $0xd0] sm:$0xf]
  %v1677 = vld [vmem:[%s5 + $0xd4] sm:$0xf]
  %v1678 = vld [vmem:[%s5 + $0xd8] sm:$0xf]
  %v1679 = vld [vmem:[%s5 + $0xdc] sm:$0xf]
  %v1680 = vld [vmem:[%s5 + $0xe0] sm:$0xf]
  %v1681 = vld [vmem:[%s5 + $0xe4] sm:$0xf]
  %v1682 = vld [vmem:[%s5 + $0xe8] sm:$0xf]
  %v1683 = vld [vmem:[%s5 + $0xec] sm:$0xf]
  %v1684 = vld [vmem:[%s5 + $0xf0] sm:$0xf]
  %v1685 = vld [vmem:[%s5 + $0xf4] sm:$0xf]
  %v1686 = vld [vmem:[%s5 + $0xf8] sm:$0xf]
  %v1687 = vld [vmem:[%s5 + $0xfc] sm:$0xf]
  %v1704 = vunpack.c.l.b16 %v1672
  %v1705 = vunpack.c.l.b16 %v1673
  %v1706 = vunpack.c.l.b16 %v1674
  %v1707 = vunpack.c.l.b16 %v1675
  %v1708 = vunpack.c.l.b16 %v1676
  %v1709 = vunpack.c.l.b16 %v1677
  %v1710 = vunpack.c.l.b16 %v1678
  %v1711 = vunpack.c.l.b16 %v1679
  %v1712 = vunpack.c.l.b16 %v1680
  %v1713 = vunpack.c.l.b16 %v1681
  %v1714 = vunpack.c.l.b16 %v1682
  %v1715 = vunpack.c.l.b16 %v1683
  %v1716 = vunpack.c.l.b16 %v1684
  %v1717 = vunpack.c.l.b16 %v1685
  %v1718 = vunpack.c.l.b16 %v1686
  %v1719 = vunpack.c.l.b16 %v1687
  %v1720 = vpack.c.b16 %v1705, %v1704
  %v1721 = vpack.c.b16 %v1707, %v1706
  %v1722 = vpack.c.b16 %v1709, %v1708
  %v1723 = vpack.c.b16 %v1711, %v1710
  %v1724 = vpack.c.b16 %v1713, %v1712
  %v1725 = vpack.c.b16 %v1715, %v1714
  %v1726 = vpack.c.b16 %v1717, %v1716
  %v1727 = vpack.c.b16 %v1719, %v1718
  %1736 = vmatprep.subr.bf16.mxu0 0
  %1737 = vmatpush1.bf16.msra.mxu0 %v1720
  %1738 = vmatprep.subr.bf16.mxu0 0
  %1739 = vmatpush1.bf16.msra.mxu0 %v1721
  %1740 = vmatprep.subr.bf16.mxu0 0
  %1741 = vmatpush1.bf16.msra.mxu0 %v1722
  %1742 = vmatprep.subr.bf16.mxu0 0
  %1743 = vmatpush1.bf16.msra.mxu0 %v1723
  %1744 = vmatprep.subr.bf16.mxu0 0
  %1745 = vmatpush1.bf16.msra.mxu0 %v1724
  %1746 = vmatprep.subr.bf16.mxu0 0
  %1747 = vmatpush1.bf16.msra.mxu0 %v1725
  %1748 = vmatprep.subr.bf16.mxu0 0
  %1749 = vmatpush1.bf16.msra.mxu0 %v1726
  %1750 = vmatprep.subr.bf16.mxu0 0
  %1751 = vmatpush1.bf16.msra.mxu0 %v1727
  %1752 = vmatprep.subr.bf16.mxu0 0
  %1753 = vmatpush1.bf16.msra.mxu0 0
  %1754 = vmatprep.subr.bf16.mxu0 0
  %1755 = vmatpush1.bf16.msra.mxu0 0
  %1756 = vmatprep.subr.bf16.mxu0 0
  %1757 = vmatpush1.bf16.msra.mxu0 0
  %1758 = vmatprep.subr.bf16.mxu0 0
  %1759 = vmatpush1.bf16.msra.mxu0 0
  %1760 = vmatprep.subr.bf16.mxu0 0
  %1761 = vmatpush1.bf16.msra.mxu0 0
  %1762 = vmatprep.subr.bf16.mxu0 0
  %1763 = vmatpush1.bf16.msra.mxu0 0
  %1764 = vmatprep.subr.bf16.mxu0 0
  %1765 = vmatpush1.bf16.msra.mxu0 0
  %1766 = vmatprep.subr.bf16.mxu0 0
  %1767 = vmatpush1.bf16.msra.mxu0 0
  %1768 = vmatprep.mubr.bf16.mxu0 0
  %1769 = vmatmul.mubr.bf16.gmra.mrb[0].mxu0 %v1671
  %v1770 = vpop.f32.mrb[0].mxu0
  %v1771 = vadd.f32 0.0, %v1770
  %v1772 = vpop.f32.mrb[0].mxu0
  %v1773 = vpop.f32.mrb[0].mxu0
  %v1774 = vpop.f32.mrb[0].mxu0
  %1775 = vdwg.mxu0
  %v1776 = vadd.f32 %v1670, %v1771
  %v1777 = vpack.c.bf16 %v1350, %v1350
  %v1778 = vld [vmem:[%s5 + $0x100] sm:$0xf]
  %v1779 = vld [vmem:[%s5 + $0x104] sm:$0xf]
  %v1780 = vld [vmem:[%s5 + $0x108] sm:$0xf]
  %v1781 = vld [vmem:[%s5 + $0x10c] sm:$0xf]
  %v1782 = vld [vmem:[%s5 + $0x110] sm:$0xf]
  %v1783 = vld [vmem:[%s5 + $0x114] sm:$0xf]
  %v1784 = vld [vmem:[%s5 + $0x118] sm:$0xf]
  %v1785 = vld [vmem:[%s5 + $0x11c] sm:$0xf]
  %v1786 = vld [vmem:[%s5 + $0x120] sm:$0xf]
  %v1787 = vld [vmem:[%s5 + $0x124] sm:$0xf]
  %v1788 = vld [vmem:[%s5 + $0x128] sm:$0xf]
  %v1789 = vld [vmem:[%s5 + $0x12c] sm:$0xf]
  %v1790 = vld [vmem:[%s5 + $0x130] sm:$0xf]
  %v1791 = vld [vmem:[%s5 + $0x134] sm:$0xf]
  %v1792 = vld [vmem:[%s5 + $0x138] sm:$0xf]
  %v1793 = vld [vmem:[%s5 + $0x13c] sm:$0xf]
  %v1810 = vunpack.c.l.b16 %v1778
  %v1811 = vunpack.c.l.b16 %v1779
  %v1812 = vunpack.c.l.b16 %v1780
  %v1813 = vunpack.c.l.b16 %v1781
  %v1814 = vunpack.c.l.b16 %v1782
  %v1815 = vunpack.c.l.b16 %v1783
  %v1816 = vunpack.c.l.b16 %v1784
  %v1817 = vunpack.c.l.b16 %v1785
  %v1818 = vunpack.c.l.b16 %v1786
  %v1819 = vunpack.c.l.b16 %v1787
  %v1820 = vunpack.c.l.b16 %v1788
  %v1821 = vunpack.c.l.b16 %v1789
  %v1822 = vunpack.c.l.b16 %v1790
  %v1823 = vunpack.c.l.b16 %v1791
  %v1824 = vunpack.c.l.b16 %v1792
  %v1825 = vunpack.c.l.b16 %v1793
  %v1826 = vpack.c.b16 %v1811, %v1810
  %v1827 = vpack.c.b16 %v1813, %v1812
  %v1828 = vpack.c.b16 %v1815, %v1814
  %v1829 = vpack.c.b16 %v1817, %v1816
  %v1830 = vpack.c.b16 %v1819, %v1818
  %v1831 = vpack.c.b16 %v1821, %v1820
  %v1832 = vpack.c.b16 %v1823, %v1822
  %v1833 = vpack.c.b16 %v1825, %v1824
  %1842 = vmatprep.subr.bf16.mxu0 0
  %1843 = vmatpush1.bf16.msra.mxu0 %v1826
  %1844 = vmatprep.subr.bf16.mxu0 0
  %1845 = vmatpush1.bf16.msra.mxu0 %v1827
  %1846 = vmatprep.subr.bf16.mxu0 0
  %1847 = vmatpush1.bf16.msra.mxu0 %v1828
  %1848 = vmatprep.subr.bf16.mxu0 0
  %1849 = vmatpush1.bf16.msra.mxu0 %v1829
  %1850 = vmatprep.subr.bf16.mxu0 0
  %1851 = vmatpush1.bf16.msra.mxu0 %v1830
  %1852 = vmatprep.subr.bf16.mxu0 0
  %1853 = vmatpush1.bf16.msra.mxu0 %v1831
  %1854 = vmatprep.subr.bf16.mxu0 0
  %1855 = vmatpush1.bf16.msra.mxu0 %v1832
  %1856 = vmatprep.subr.bf16.mxu0 0
  %1857 = vmatpush1.bf16.msra.mxu0 %v1833
  %1858 = vmatprep.subr.bf16.mxu0 0
  %1859 = vmatpush1.bf16.msra.mxu0 0
  %1860 = vmatprep.subr.bf16.mxu0 0
  %1861 = vmatpush1.bf16.msra.mxu0 0
  %1862 = vmatprep.subr.bf16.mxu0 0
  %1863 = vmatpush1.bf16.msra.mxu0 0
  %1864 = vmatprep.subr.bf16.mxu0 0
  %1865 = vmatpush1.bf16.msra.mxu0 0
  %1866 = vmatprep.subr.bf16.mxu0 0
  %1867 = vmatpush1.bf16.msra.mxu0 0
  %1868 = vmatprep.subr.bf16.mxu0 0
  %1869 = vmatpush1.bf16.msra.mxu0 0
  %1870 = vmatprep.subr.bf16.mxu0 0
  %1871 = vmatpush1.bf16.msra.mxu0 0
  %1872 = vmatprep.subr.bf16.mxu0 0
  %1873 = vmatpush1.bf16.msra.mxu0 0
  %1874 = vmatprep.mubr.bf16.mxu0 0
  %1875 = vmatmul.mubr.bf16.gmra.mrb[0].mxu0 %v1777
  %v1876 = vpop.f32.mrb[0].mxu0
  %v1877 = vadd.f32 0.0, %v1876
  %v1878 = vpop.f32.mrb[0].mxu0
  %v1879 = vpop.f32.mrb[0].mxu0
  %v1880 = vpop.f32.mrb[0].mxu0
  %1881 = vdwg.mxu0
  %v1882 = vadd.f32 %v1776, %v1877
  %v1883 = vpack.c.bf16 %v1351, %v1351
  %v1884 = vld [vmem:[%s5 + $0x140] sm:$0xf]
  %v1885 = vld [vmem:[%s5 + $0x144] sm:$0xf]
  %v1886 = vld [vmem:[%s5 + $0x148] sm:$0xf]
  %v1887 = vld [vmem:[%s5 + $0x14c] sm:$0xf]
  %v1888 = vld [vmem:[%s5 + $0x150] sm:$0xf]
  %v1889 = vld [vmem:[%s5 + $0x154] sm:$0xf]
  %v1890 = vld [vmem:[%s5 + $0x158] sm:$0xf]
  %v1891 = vld [vmem:[%s5 + $0x15c] sm:$0xf]
  %v1892 = vld [vmem:[%s5 + $0x160] sm:$0xf]
  %v1893 = vld [vmem:[%s5 + $0x164] sm:$0xf]
  %v1894 = vld [vmem:[%s5 + $0x168] sm:$0xf]
  %v1895 = vld [vmem:[%s5 + $0x16c] sm:$0xf]
  %v1896 = vld [vmem:[%s5 + $0x170] sm:$0xf]
  %v1897 = vld [vmem:[%s5 + $0x174] sm:$0xf]
  %v1898 = vld [vmem:[%s5 + $0x178] sm:$0xf]
  %v1899 = vld [vmem:[%s5 + $0x17c] sm:$0xf]
  %v1916 = vunpack.c.l.b16 %v1884
  %v1917 = vunpack.c.l.b16 %v1885
  %v1918 = vunpack.c.l.b16 %v1886
  %v1919 = vunpack.c.l.b16 %v1887
  %v1920 = vunpack.c.l.b16 %v1888
  %v1921 = vunpack.c.l.b16 %v1889
  %v1922 = vunpack.c.l.b16 %v1890
  %v1923 = vunpack.c.l.b16 %v1891
  %v1924 = vunpack.c.l.b16 %v1892
  %v1925 = vunpack.c.l.b16 %v1893
  %v1926 = vunpack.c.l.b16 %v1894
  %v1927 = vunpack.c.l.b16 %v1895
  %v1928 = vunpack.c.l.b16 %v1896
  %v1929 = vunpack.c.l.b16 %v1897
  %v1930 = vunpack.c.l.b16 %v1898
  %v1931 = vunpack.c.l.b16 %v1899
  %v1932 = vpack.c.b16 %v1917, %v1916
  %v1933 = vpack.c.b16 %v1919, %v1918
  %v1934 = vpack.c.b16 %v1921, %v1920
  %v1935 = vpack.c.b16 %v1923, %v1922
  %v1936 = vpack.c.b16 %v1925, %v1924
  %v1937 = vpack.c.b16 %v1927, %v1926
  %v1938 = vpack.c.b16 %v1929, %v1928
  %v1939 = vpack.c.b16 %v1931, %v1930
  %1948 = vmatprep.subr.bf16.mxu0 0
  %1949 = vmatpush1.bf16.msra.mxu0 %v1932
  %1950 = vmatprep.subr.bf16.mxu0 0
  %1951 = vmatpush1.bf16.msra.mxu0 %v1933
  %1952 = vmatprep.subr.bf16.mxu0 0
  %1953 = vmatpush1.bf16.msra.mxu0 %v1934
  %1954 = vmatprep.subr.bf16.mxu0 0
  %1955 = vmatpush1.bf16.msra.mxu0 %v1935
  %1956 = vmatprep.subr.bf16.mxu0 0
  %1957 = vmatpush1.bf16.msra.mxu0 %v1936
  %1958 = vmatprep.subr.bf16.mxu0 0
  %1959 = vmatpush1.bf16.msra.mxu0 %v1937
  %1960 = vmatprep.subr.bf16.mxu0 0
  %1961 = vmatpush1.bf16.msra.mxu0 %v1938
  %1962 = vmatprep.subr.bf16.mxu0 0
  %1963 = vmatpush1.bf16.msra.mxu0 %v1939
  %1964 = vmatprep.subr.bf16.mxu0 0
  %1965 = vmatpush1.bf16.msra.mxu0 0
  %1966 = vmatprep.subr.bf16.mxu0 0
  %1967 = vmatpush1.bf16.msra.mxu0 0
  %1968 = vmatprep.subr.bf16.mxu0 0
  %1969 = vmatpush1.bf16.msra.mxu0 0
  %1970 = vmatprep.subr.bf16.mxu0 0
  %1971 = vmatpush1.bf16.msra.mxu0 0
  %1972 = vmatprep.subr.bf16.mxu0 0
  %1973 = vmatpush1.bf16.msra.mxu0 0
  %1974 = vmatprep.subr.bf16.mxu0 0
  %1975 = vmatpush1.bf16.msra.mxu0 0
  %1976 = vmatprep.subr.bf16.mxu0 0
  %1977 = vmatpush1.bf16.msra.mxu0 0
  %1978 = vmatprep.subr.bf16.mxu0 0
  %1979 = vmatpush1.bf16.msra.mxu0 0
  %1980 = vmatprep.mubr.bf16.mxu0 0
  %1981 = vmatmul.mubr.bf16.gmra.mrb[0].mxu0 %v1883
  %v1982 = vpop.f32.mrb[0].mxu0
  %v1983 = vadd.f32 0.0, %v1982
  %v1984 = vpop.f32.mrb[0].mxu0
  %v1985 = vpop.f32.mrb[0].mxu0
  %v1986 = vpop.f32.mrb[0].mxu0
  %1987 = vdwg.mxu0
  %v1988 = vadd.f32 %v1882, %v1983
  %v1989 = vpack.c.bf16 %v1352, %v1352
  %v1990 = vld [vmem:[%s5 + $0x180] sm:$0xf]
  %v1991 = vld [vmem:[%s5 + $0x184] sm:$0xf]
  %v1992 = vld [vmem:[%s5 + $0x188] sm:$0xf]
  %v1993 = vld [vmem:[%s5 + $0x18c] sm:$0xf]
  %v1994 = vld [vmem:[%s5 + $0x190] sm:$0xf]
  %v1995 = vld [vmem:[%s5 + $0x194] sm:$0xf]
  %v1996 = vld [vmem:[%s5 + $0x198] sm:$0xf]
  %v1997 = vld [vmem:[%s5 + $0x19c] sm:$0xf]
  %v1998 = vld [vmem:[%s5 + $0x1a0] sm:$0xf]
  %v1999 = vld [vmem:[%s5 + $0x1a4] sm:$0xf]
  %v2000 = vld [vmem:[%s5 + $0x1a8] sm:$0xf]
  %v2001 = vld [vmem:[%s5 + $0x1ac] sm:$0xf]
  %v2002 = vld [vmem:[%s5 + $0x1b0] sm:$0xf]
  %v2003 = vld [vmem:[%s5 + $0x1b4] sm:$0xf]
  %v2004 = vld [vmem:[%s5 + $0x1b8] sm:$0xf]
  %v2005 = vld [vmem:[%s5 + $0x1bc] sm:$0xf]
  %v2022 = vunpack.c.l.b16 %v1990
  %v2023 = vunpack.c.l.b16 %v1991
  %v2024 = vunpack.c.l.b16 %v1992
  %v2025 = vunpack.c.l.b16 %v1993
  %v2026 = vunpack.c.l.b16 %v1994
  %v2027 = vunpack.c.l.b16 %v1995
  %v2028 = vunpack.c.l.b16 %v1996
  %v2029 = vunpack.c.l.b16 %v1997
  %v2030 = vunpack.c.l.b16 %v1998
  %v2031 = vunpack.c.l.b16 %v1999
  %v2032 = vunpack.c.l.b16 %v2000
  %v2033 = vunpack.c.l.b16 %v2001
  %v2034 = vunpack.c.l.b16 %v2002
  %v2035 = vunpack.c.l.b16 %v2003
  %v2036 = vunpack.c.l.b16 %v2004
  %v2037 = vunpack.c.l.b16 %v2005
  %v2038 = vpack.c.b16 %v2023, %v2022
  %v2039 = vpack.c.b16 %v2025, %v2024
  %v2040 = vpack.c.b16 %v2027, %v2026
  %v2041 = vpack.c.b16 %v2029, %v2028
  %v2042 = vpack.c.b16 %v2031, %v2030
  %v2043 = vpack.c.b16 %v2033, %v2032
  %v2044 = vpack.c.b16 %v2035, %v2034
  %v2045 = vpack.c.b16 %v2037, %v2036
  %2054 = vmatprep.subr.bf16.mxu0 0
  %2055 = vmatpush1.bf16.msra.mxu0 %v2038
  %2056 = vmatprep.subr.bf16.mxu0 0
  %2057 = vmatpush1.bf16.msra.mxu0 %v2039
  %2058 = vmatprep.subr.bf16.mxu0 0
  %2059 = vmatpush1.bf16.msra.mxu0 %v2040
  %2060 = vmatprep.subr.bf16.mxu0 0
  %2061 = vmatpush1.bf16.msra.mxu0 %v2041
  %2062 = vmatprep.subr.bf16.mxu0 0
  %2063 = vmatpush1.bf16.msra.mxu0 %v2042
  %2064 = vmatprep.subr.bf16.mxu0 0
  %2065 = vmatpush1.bf16.msra.mxu0 %v2043
  %2066 = vmatprep.subr.bf16.mxu0 0
  %2067 = vmatpush1.bf16.msra.mxu0 %v2044
  %2068 = vmatprep.subr.bf16.mxu0 0
  %2069 = vmatpush1.bf16.msra.mxu0 %v2045
  %2070 = vmatprep.subr.bf16.mxu0 0
  %2071 = vmatpush1.bf16.msra.mxu0 0
  %2072 = vmatprep.subr.bf16.mxu0 0
  %2073 = vmatpush1.bf16.msra.mxu0 0
  %2074 = vmatprep.subr.bf16.mxu0 0
  %2075 = vmatpush1.bf16.msra.mxu0 0
  %2076 = vmatprep.subr.bf16.mxu0 0
  %2077 = vmatpush1.bf16.msra.mxu0 0
  %2078 = vmatprep.subr.bf16.mxu0 0
  %2079 = vmatpush1.bf16.msra.mxu0 0
  %2080 = vmatprep.subr.bf16.mxu0 0
  %2081 = vmatpush1.bf16.msra.mxu0 0
  %2082 = vmatprep.subr.bf16.mxu0 0
  %2083 = vmatpush1.bf16.msra.mxu0 0
  %2084 = vmatprep.subr.bf16.mxu0 0
  %2085 = vmatpush1.bf16.msra.mxu0 0
  %2086 = vmatprep.mubr.bf16.mxu0 0
  %2087 = vmatmul.mubr.bf16.gmra.mrb[0].mxu0 %v1989
  %v2088 = vpop.f32.mrb[0].mxu0
  %v2089 = vadd.f32 0.0, %v2088
  %v2090 = vpop.f32.mrb[0].mxu0
  %v2091 = vpop.f32.mrb[0].mxu0
  %v2092 = vpop.f32.mrb[0].mxu0
  %2093 = vdwg.mxu0
  %v2094 = vadd.f32 %v1988, %v2089
  %v2095 = vpack.c.bf16 %v1353, %v1353
  %v2096 = vld [vmem:[%s5 + $0x1c0] sm:$0xf]
  %v2097 = vld [vmem:[%s5 + $0x1c4] sm:$0xf]
  %v2098 = vld [vmem:[%s5 + $0x1c8] sm:$0xf]
  %v2099 = vld [vmem:[%s5 + $0x1cc] sm:$0xf]
  %v2100 = vld [vmem:[%s5 + $0x1d0] sm:$0xf]
  %v2101 = vld [vmem:[%s5 + $0x1d4] sm:$0xf]
  %v2102 = vld [vmem:[%s5 + $0x1d8] sm:$0xf]
  %v2103 = vld [vmem:[%s5 + $0x1dc] sm:$0xf]
  %v2104 = vld [vmem:[%s5 + $0x1e0] sm:$0xf]
  %v2105 = vld [vmem:[%s5 + $0x1e4] sm:$0xf]
  %v2106 = vld [vmem:[%s5 + $0x1e8] sm:$0xf]
  %v2107 = vld [vmem:[%s5 + $0x1ec] sm:$0xf]
  %v2108 = vld [vmem:[%s5 + $0x1f0] sm:$0xf]
  %v2109 = vld [vmem:[%s5 + $0x1f4] sm:$0xf]
  %v2110 = vld [vmem:[%s5 + $0x1f8] sm:$0xf]
  %v2111 = vld [vmem:[%s5 + $0x1fc] sm:$0xf]
  %v2128 = vunpack.c.l.b16 %v2096
  %v2129 = vunpack.c.l.b16 %v2097
  %v2130 = vunpack.c.l.b16 %v2098
  %v2131 = vunpack.c.l.b16 %v2099
  %v2132 = vunpack.c.l.b16 %v2100
  %v2133 = vunpack.c.l.b16 %v2101
  %v2134 = vunpack.c.l.b16 %v2102
  %v2135 = vunpack.c.l.b16 %v2103
  %v2136 = vunpack.c.l.b16 %v2104
  %v2137 = vunpack.c.l.b16 %v2105
  %v2138 = vunpack.c.l.b16 %v2106
  %v2139 = vunpack.c.l.b16 %v2107
  %v2140 = vunpack.c.l.b16 %v2108
  %v2141 = vunpack.c.l.b16 %v2109
  %v2142 = vunpack.c.l.b16 %v2110
  %v2143 = vunpack.c.l.b16 %v2111
  %v2144 = vpack.c.b16 %v2129, %v2128
  %v2145 = vpack.c.b16 %v2131, %v2130
  %v2146 = vpack.c.b16 %v2133, %v2132
  %v2147 = vpack.c.b16 %v2135, %v2134
  %v2148 = vpack.c.b16 %v2137, %v2136
  %v2149 = vpack.c.b16 %v2139, %v2138
  %v2150 = vpack.c.b16 %v2141, %v2140
  %v2151 = vpack.c.b16 %v2143, %v2142
  %2160 = vmatprep.subr.bf16.mxu0 0
  %2161 = vmatpush1.bf16.msra.mxu0 %v2144
  %2162 = vmatprep.subr.bf16.mxu0 0
  %2163 = vmatpush1.bf16.msra.mxu0 %v2145
  %2164 = vmatprep.subr.bf16.mxu0 0
  %2165 = vmatpush1.bf16.msra.mxu0 %v2146
  %2166 = vmatprep.subr.bf16.mxu0 0
  %2167 = vmatpush1.bf16.msra.mxu0 %v2147
  %2168 = vmatprep.subr.bf16.mxu0 0
  %2169 = vmatpush1.bf16.msra.mxu0 %v2148
  %2170 = vmatprep.subr.bf16.mxu0 0
  %2171 = vmatpush1.bf16.msra.mxu0 %v2149
  %2172 = vmatprep.subr.bf16.mxu0 0
  %2173 = vmatpush1.bf16.msra.mxu0 %v2150
  %2174 = vmatprep.subr.bf16.mxu0 0
  %2175 = vmatpush1.bf16.msra.mxu0 %v2151
  %2176 = vmatprep.subr.bf16.mxu0 0
  %2177 = vmatpush1.bf16.msra.mxu0 0
  %2178 = vmatprep.subr.bf16.mxu0 0
  %2179 = vmatpush1.bf16.msra.mxu0 0
  %2180 = vmatprep.subr.bf16.mxu0 0
  %2181 = vmatpush1.bf16.msra.mxu0 0
  %2182 = vmatprep.subr.bf16.mxu0 0
  %2183 = vmatpush1.bf16.msra.mxu0 0
  %2184 = vmatprep.subr.bf16.mxu0 0
  %2185 = vmatpush1.bf16.msra.mxu0 0
  %2186 = vmatprep.subr.bf16.mxu0 0
  %2187 = vmatpush1.bf16.msra.mxu0 0
  %2188 = vmatprep.subr.bf16.mxu0 0
  %2189 = vmatpush1.bf16.msra.mxu0 0
  %2190 = vmatprep.subr.bf16.mxu0 0
  %2191 = vmatpush1.bf16.msra.mxu0 0
  %2192 = vmatprep.mubr.bf16.mxu0 0
  %2193 = vmatmul.mubr.bf16.gmra.mrb[0].mxu0 %v2095
  %v2194 = vpop.f32.mrb[0].mxu0
  %v2195 = vadd.f32 0.0, %v2194
  %v2196 = vpop.f32.mrb[0].mxu0
  %v2197 = vpop.f32.mrb[0].mxu0
  %v2198 = vpop.f32.mrb[0].mxu0
  %2199 = vdwg.mxu0
  %v2200 = vadd.f32 %v2094, %v2195
  %v2201 = vpack.c.bf16 %v1354, %v1354
  %v2202 = vld [vmem:[%s5 + $0x200] sm:$0xf]
  %v2203 = vld [vmem:[%s5 + $0x204] sm:$0xf]
  %v2204 = vld [vmem:[%s5 + $0x208] sm:$0xf]
  %v2205 = vld [vmem:[%s5 + $0x20c] sm:$0xf]
  %v2206 = vld [vmem:[%s5 + $0x210] sm:$0xf]
  %v2207 = vld [vmem:[%s5 + $0x214] sm:$0xf]
  %v2208 = vld [vmem:[%s5 + $0x218] sm:$0xf]
  %v2209 = vld [vmem:[%s5 + $0x21c] sm:$0xf]
  %v2210 = vld [vmem:[%s5 + $0x220] sm:$0xf]
  %v2211 = vld [vmem:[%s5 + $0x224] sm:$0xf]
  %v2212 = vld [vmem:[%s5 + $0x228] sm:$0xf]
  %v2213 = vld [vmem:[%s5 + $0x22c] sm:$0xf]
  %v2214 = vld [vmem:[%s5 + $0x230] sm:$0xf]
  %v2215 = vld [vmem:[%s5 + $0x234] sm:$0xf]
  %v2216 = vld [vmem:[%s5 + $0x238] sm:$0xf]
  %v2217 = vld [vmem:[%s5 + $0x23c] sm:$0xf]
  %v2234 = vunpack.c.l.b16 %v2202
  %v2235 = vunpack.c.l.b16 %v2203
  %v2236 = vunpack.c.l.b16 %v2204
  %v2237 = vunpack.c.l.b16 %v2205
  %v2238 = vunpack.c.l.b16 %v2206
  %v2239 = vunpack.c.l.b16 %v2207
  %v2240 = vunpack.c.l.b16 %v2208
  %v2241 = vunpack.c.l.b16 %v2209
  %v2242 = vunpack.c.l.b16 %v2210
  %v2243 = vunpack.c.l.b16 %v2211
  %v2244 = vunpack.c.l.b16 %v2212
  %v2245 = vunpack.c.l.b16 %v2213
  %v2246 = vunpack.c.l.b16 %v2214
  %v2247 = vunpack.c.l.b16 %v2215
  %v2248 = vunpack.c.l.b16 %v2216
  %v2249 = vunpack.c.l.b16 %v2217
  %v2250 = vpack.c.b16 %v2235, %v2234
  %v2251 = vpack.c.b16 %v2237, %v2236
  %v2252 = vpack.c.b16 %v2239, %v2238
  %v2253 = vpack.c.b16 %v2241, %v2240
  %v2254 = vpack.c.b16 %v2243, %v2242
  %v2255 = vpack.c.b16 %v2245, %v2244
  %v2256 = vpack.c.b16 %v2247, %v2246
  %v2257 = vpack.c.b16 %v2249, %v2248
  %2266 = vmatprep.subr.bf16.mxu0 0
  %2267 = vmatpush1.bf16.msra.mxu0 %v2250
  %2268 = vmatprep.subr.bf16.mxu0 0
  %2269 = vmatpush1.bf16.msra.mxu0 %v2251
  %2270 = vmatprep.subr.bf16.mxu0 0
  %2271 = vmatpush1.bf16.msra.mxu0 %v2252
  %2272 = vmatprep.subr.bf16.mxu0 0
  %2273 = vmatpush1.bf16.msra.mxu0 %v2253
  %2274 = vmatprep.subr.bf16.mxu0 0
  %2275 = vmatpush1.bf16.msra.mxu0 %v2254
  %2276 = vmatprep.subr.bf16.mxu0 0
  %2277 = vmatpush1.bf16.msra.mxu0 %v2255
  %2278 = vmatprep.subr.bf16.mxu0 0
  %2279 = vmatpush1.bf16.msra.mxu0 %v2256
  %2280 = vmatprep.subr.bf16.mxu0 0
  %2281 = vmatpush1.bf16.msra.mxu0 %v2257
  %2282 = vmatprep.subr.bf16.mxu0 0
  %2283 = vmatpush1.bf16.msra.mxu0 0
  %2284 = vmatprep.subr.bf16.mxu0 0
  %2285 = vmatpush1.bf16.msra.mxu0 0
  %2286 = vmatprep.subr.bf16.mxu0 0
  %2287 = vmatpush1.bf16.msra.mxu0 0
  %2288 = vmatprep.subr.bf16.mxu0 0
  %2289 = vmatpush1.bf16.msra.mxu0 0
  %2290 = vmatprep.subr.bf16.mxu0 0
  %2291 = vmatpush1.bf16.msra.mxu0 0
  %2292 = vmatprep.subr.bf16.mxu0 0
  %2293 = vmatpush1.bf16.msra.mxu0 0
  %2294 = vmatprep.subr.bf16.mxu0 0
  %2295 = vmatpush1.bf16.msra.mxu0 0
  %2296 = vmatprep.subr.bf16.mxu0 0
  %2297 = vmatpush1.bf16.msra.mxu0 0
  %2298 = vmatprep.mubr.bf16.mxu0 0
  %2299 = vmatmul.mubr.bf16.gmra.mrb[0].mxu0 %v2201
  %v2300 = vpop.f32.mrb[0].mxu0
  %v2301 = vadd.f32 0.0, %v2300
  %v2302 = vpop.f32.mrb[0].mxu0
  %v2303 = vpop.f32.mrb[0].mxu0
  %v2304 = vpop.f32.mrb[0].mxu0
  %2305 = vdwg.mxu0
  %v2306 = vadd.f32 %v2200, %v2301
  %v2307 = vld [vmem:[%s8] sm:$0x1]
  %v2309 = vlaneseq
  %v2310 = vshrl.u32 %v2309, 7
  %v2311 = vsub.s32 0, %v2310
  %v2312 = vrot.slane %v2307, %v2311
  %v2314 = vadd.f32 %v2306, %v2312
  %v2315 = vmax.f32 %v2314, 0.0
  %v2316 = vpack.c.bf16 %v2315, %v2315
  %v2317 = vld [vmem:[%s6] sm:$0xf]
  %v2318 = vld [vmem:[%s6 + $0x4] sm:$0xf]
  %v2319 = vld [vmem:[%s6 + $0x8] sm:$0xf]
  %v2320 = vld [vmem:[%s6 + $0xc] sm:$0xf]
  %v2321 = vld [vmem:[%s6 + $0x10] sm:$0xf]
  %v2322 = vld [vmem:[%s6 + $0x14] sm:$0xf]
  %v2323 = vld [vmem:[%s6 + $0x18] sm:$0xf]
  %v2324 = vld [vmem:[%s6 + $0x1c] sm:$0xf]
  %v2325 = vld [vmem:[%s6 + $0x20] sm:$0xf]
  %v2326 = vld [vmem:[%s6 + $0x24] sm:$0xf]
  %v2327 = vld [vmem:[%s6 + $0x28] sm:$0xf]
  %v2328 = vld [vmem:[%s6 + $0x2c] sm:$0xf]
  %v2329 = vld [vmem:[%s6 + $0x30] sm:$0xf]
  %v2330 = vld [vmem:[%s6 + $0x34] sm:$0xf]
  %v2331 = vld [vmem:[%s6 + $0x38] sm:$0xf]
  %v2332 = vld [vmem:[%s6 + $0x3c] sm:$0xf]
  %v2333 = vld [vmem:[%s9] sm:$0x1]
  %v2335 = vlaneseq
  %v2336 = vshrl.u32 %v2335, 7
  %v2337 = vsub.s32 0, %v2336
  %v2338 = vrot.slane %v2333, %v2337
  %v2356 = vunpack.c.l.b16 %v2317
  %v2357 = vunpack.c.l.b16 %v2318
  %v2358 = vunpack.c.l.b16 %v2319
  %v2359 = vunpack.c.l.b16 %v2320
  %v2360 = vunpack.c.l.b16 %v2321
  %v2361 = vunpack.c.l.b16 %v2322
  %v2362 = vunpack.c.l.b16 %v2323
  %v2363 = vunpack.c.l.b16 %v2324
  %v2364 = vunpack.c.l.b16 %v2325
  %v2365 = vunpack.c.l.b16 %v2326
  %v2366 = vunpack.c.l.b16 %v2327
  %v2367 = vunpack.c.l.b16 %v2328
  %v2368 = vunpack.c.l.b16 %v2329
  %v2369 = vunpack.c.l.b16 %v2330
  %v2370 = vunpack.c.l.b16 %v2331
  %v2371 = vunpack.c.l.b16 %v2332
  %v2372 = vpack.c.b16 %v2357, %v2356
  %v2373 = vpack.c.b16 %v2359, %v2358
  %v2374 = vpack.c.b16 %v2361, %v2360
  %v2375 = vpack.c.b16 %v2363, %v2362
  %v2376 = vpack.c.b16 %v2365, %v2364
  %v2377 = vpack.c.b16 %v2367, %v2366
  %v2378 = vpack.c.b16 %v2369, %v2368
  %v2379 = vpack.c.b16 %v2371, %v2370
  %2388 = vmatprep.subr.bf16.mxu0 0
  %2389 = vmatpush1.bf16.msra.mxu0 %v2372
  %2390 = vmatprep.subr.bf16.mxu0 0
  %2391 = vmatpush1.bf16.msra.mxu0 %v2373
  %2392 = vmatprep.subr.bf16.mxu0 0
  %2393 = vmatpush1.bf16.msra.mxu0 %v2374
  %2394 = vmatprep.subr.bf16.mxu0 0
  %2395 = vmatpush1.bf16.msra.mxu0 %v2375
  %2396 = vmatprep.subr.bf16.mxu0 0
  %2397 = vmatpush1.bf16.msra.mxu0 %v2376
  %2398 = vmatprep.subr.bf16.mxu0 0
  %2399 = vmatpush1.bf16.msra.mxu0 %v2377
  %2400 = vmatprep.subr.bf16.mxu0 0
  %2401 = vmatpush1.bf16.msra.mxu0 %v2378
  %2402 = vmatprep.subr.bf16.mxu0 0
  %2403 = vmatpush1.bf16.msra.mxu0 %v2379
  %2404 = vmatprep.subr.bf16.mxu0 0
  %2405 = vmatpush1.bf16.msra.mxu0 0
  %2406 = vmatprep.subr.bf16.mxu0 0
  %2407 = vmatpush1.bf16.msra.mxu0 0
  %2408 = vmatprep.subr.bf16.mxu0 0
  %2409 = vmatpush1.bf16.msra.mxu0 0
  %2410 = vmatprep.subr.bf16.mxu0 0
  %2411 = vmatpush1.bf16.msra.mxu0 0
  %2412 = vmatprep.subr.bf16.mxu0 0
  %2413 = vmatpush1.bf16.msra.mxu0 0
  %2414 = vmatprep.subr.bf16.mxu0 0
  %2415 = vmatpush1.bf16.msra.mxu0 0
  %2416 = vmatprep.subr.bf16.mxu0 0
  %2417 = vmatpush1.bf16.msra.mxu0 0
  %2418 = vmatprep.subr.bf16.mxu0 0
  %2419 = vmatpush1.bf16.msra.mxu0 0
  %2420 = vmatprep.mubr.bf16.mxu0 0
  %2421 = vmatmul.mubr.bf16.gmra.mrb[0].mxu0 %v2316
  %v2422 = vpop.f32.mrb[0].mxu0
  %v2423 = vadd.f32 %v2338, %v2422
  %v2424 = vpop.f32.mrb[0].mxu0
  %v2425 = vpop.f32.mrb[0].mxu0
  %v2426 = vpop.f32.mrb[0].mxu0
  %2427 = vdwg.mxu0
  %v2428 = vmax.f32 %v2423, 0.0
  %v2429 = vpack.c.bf16 %v2428, %v2428
  %v2430 = vld [vmem:[%s7] sm:$0xf]
  %v2431 = vld [vmem:[%s7 + $0x4] sm:$0xf]
  %v2432 = vld [vmem:[%s7 + $0x8] sm:$0xf]
  %v2433 = vld [vmem:[%s7 + $0xc] sm:$0xf]
  %v2434 = vld [vmem:[%s7 + $0x10] sm:$0xf]
  %v2435 = vld [vmem:[%s7 + $0x14] sm:$0xf]
  %v2436 = vld [vmem:[%s7 + $0x18] sm:$0xf]
  %v2437 = vld [vmem:[%s7 + $0x1c] sm:$0xf]
  %v2438 = vld [vmem:[%s7 + $0x20] sm:$0xf]
  %v2439 = vld [vmem:[%s7 + $0x24] sm:$0xf]
  %v2440 = vld [vmem:[%s7 + $0x28] sm:$0xf]
  %v2441 = vld [vmem:[%s7 + $0x2c] sm:$0xf]
  %v2442 = vld [vmem:[%s7 + $0x30] sm:$0xf]
  %v2443 = vld [vmem:[%s7 + $0x34] sm:$0xf]
  %v2444 = vld [vmem:[%s7 + $0x38] sm:$0xf]
  %v2445 = vld [vmem:[%s7 + $0x3c] sm:$0xf]
  %v2446 = vld [vmem:[%s10] sm:$0x1]
  %v2448 = vlaneseq
  %v2449 = vshrl.u32 %v2448, 7
  %v2450 = vsub.s32 0, %v2449
  %v2451 = vrot.slane %v2446, %v2450
  %v2469 = vunpack.c.l.b16 %v2430
  %v2470 = vunpack.c.l.b16 %v2431
  %v2471 = vunpack.c.l.b16 %v2432
  %v2472 = vunpack.c.l.b16 %v2433
  %v2473 = vunpack.c.l.b16 %v2434
  %v2474 = vunpack.c.l.b16 %v2435
  %v2475 = vunpack.c.l.b16 %v2436
  %v2476 = vunpack.c.l.b16 %v2437
  %v2477 = vunpack.c.l.b16 %v2438
  %v2478 = vunpack.c.l.b16 %v2439
  %v2479 = vunpack.c.l.b16 %v2440
  %v2480 = vunpack.c.l.b16 %v2441
  %v2481 = vunpack.c.l.b16 %v2442
  %v2482 = vunpack.c.l.b16 %v2443
  %v2483 = vunpack.c.l.b16 %v2444
  %v2484 = vunpack.c.l.b16 %v2445
  %v2485 = vpack.c.b16 %v2470, %v2469
  %v2486 = vpack.c.b16 %v2472, %v2471
  %v2487 = vpack.c.b16 %v2474, %v2473
  %v2488 = vpack.c.b16 %v2476, %v2475
  %v2489 = vpack.c.b16 %v2478, %v2477
  %v2490 = vpack.c.b16 %v2480, %v2479
  %v2491 = vpack.c.b16 %v2482, %v2481
  %v2492 = vpack.c.b16 %v2484, %v2483
  %2501 = vmatprep.subr.bf16.mxu0 0
  %2502 = vmatpush1.bf16.msra.mxu0 %v2485
  %2503 = vmatprep.subr.bf16.mxu0 0
  %2504 = vmatpush1.bf16.msra.mxu0 %v2486
  %2505 = vmatprep.subr.bf16.mxu0 0
  %2506 = vmatpush1.bf16.msra.mxu0 %v2487
  %2507 = vmatprep.subr.bf16.mxu0 0
  %2508 = vmatpush1.bf16.msra.mxu0 %v2488
  %2509 = vmatprep.subr.bf16.mxu0 0
  %2510 = vmatpush1.bf16.msra.mxu0 %v2489
  %2511 = vmatprep.subr.bf16.mxu0 0
  %2512 = vmatpush1.bf16.msra.mxu0 %v2490
  %2513 = vmatprep.subr.bf16.mxu0 0
  %2514 = vmatpush1.bf16.msra.mxu0 %v2491
  %2515 = vmatprep.subr.bf16.mxu0 0
  %2516 = vmatpush1.bf16.msra.mxu0 %v2492
  %2517 = vmatprep.subr.bf16.mxu0 0
  %2518 = vmatpush1.bf16.msra.mxu0 0
  %2519 = vmatprep.subr.bf16.mxu0 0
  %2520 = vmatpush1.bf16.msra.mxu0 0
  %2521 = vmatprep.subr.bf16.mxu0 0
  %2522 = vmatpush1.bf16.msra.mxu0 0
  %2523 = vmatprep.subr.bf16.mxu0 0
  %2524 = vmatpush1.bf16.msra.mxu0 0
  %2525 = vmatprep.subr.bf16.mxu0 0
  %2526 = vmatpush1.bf16.msra.mxu0 0
  %2527 = vmatprep.subr.bf16.mxu0 0
  %2528 = vmatpush1.bf16.msra.mxu0 0
  %2529 = vmatprep.subr.bf16.mxu0 0
  %2530 = vmatpush1.bf16.msra.mxu0 0
  %2531 = vmatprep.subr.bf16.mxu0 0
  %2532 = vmatpush1.bf16.msra.mxu0 0
  %2533 = vmatprep.mubr.bf16.mxu0 0
  %2534 = vmatmul.mubr.bf16.gmra.mrb[0].mxu0 %v2429
  %v2535 = vpop.f32.mrb[0].mxu0
  %v2536 = vadd.f32 %v2451, %v2535
  %v2537 = vpop.f32.mrb[0].mxu0
  %v2538 = vpop.f32.mrb[0].mxu0
  %v2539 = vpop.f32.mrb[0].mxu0
  %2540 = vdwg.mxu0
  %v2541 = vlaneseq
  %v2542 = vand.u32 %v2541, 127
  %vm2543 = vcmp.lt.s32.totalorder %v2542, 26
  %v2544 = vsel %vm2543, %v2536, -1e+30
  %2545 = vmax.xlane.f32.xlu0 %v2544
  %v2546 = vpop.xlane.xlu0 %2545
  %v2547 = vsub.f32 %v2544, %v2546
  %v2548 = vmul.f32 %v2547, 1.442695
  %v2549 = vpow.pop %v2548
  %2550 = vadd.xlane.f32.xlu0 %v2549
  %v2551 = vpop.xlane.xlu0 %2550
  %v2552 = vlog2.pop %v2551
  %v2553 = vmul.f32 %v2552, 0.6931472
  %v2554 = vadd.f32 %v2546, %v2553
  %v2555 = vsub.f32 %v2544, %v2554
  %2556 = vst [vmem:[%s11] sm:$0xff] %v2555
  // Predicated region
  $region46: #{reid_net_forward.3} parent=0 // pred_check
    _
  $region47: #{reid_net_forward.3} parent=0 // pred_check_branch
    %2558 = sbr.rel (0) target = $region49
  $region48: #{reid_net_forward.3} parent=0 // pred_region
    _
  $region49: #{reid_net_forward.3} parent=0 // pred_fallthru
    _
  // Predicated region
  $region50: #{reid_net_forward.3} parent=0 // pred_check
    _
  $region51: #{reid_net_forward.3} parent=0 // pred_check_branch
    %2560 = sbr.rel (0) target = $region53
  $region52: #{reid_net_forward.3} parent=0 // pred_region
    _
  $region53: #{reid_net_forward.3} parent=0 // pred_fallthru
    _

</llo_original>
